<compile_context>
chip_gen: v7x
topology: tpu7x:2x2x1
jax: 0.10.0
libtpu: 0.0.40
codegen_flags: <defaults>
</compile_context>

<pallas_src>
import jax
import jax.numpy as jnp
from jax.experimental import pallas as pl
from jax.experimental.pallas import tpu as pltpu

EPS = 1e-3  # BatchRenorm1d eps in the reference module (eps=0.001)


# ----------------------------- fused forward kernel -----------------------------


def _fused_q_kernel(h0_ref, w1_ref, b1_ref, w2_ref, b2_ref, w3_ref, b3_ref,
                    q_ref, h1_ref, acc_ref):
    """grid = (fc2 K-steps,).  All BN already folded into W'/b'."""
    k = pl.program_id(0)

    # Prologue (runs once): fc1 (bf16 MXU, f32 acc) + zero the fc2 accumulator.
    @pl.when(k == 0)
    def _():
        h1 = jnp.dot(h0_ref[...], w1_ref[...],
                     preferred_element_type=jnp.float32)
        h1 = jnp.maximum(h1 + b1_ref[...], 0.0)
        h1_ref[...] = h1.astype(jnp.bfloat16)
        acc_ref[...] = jnp.zeros_like(acc_ref)

    # fc2 partial product for this K-step: bf16 operands, f32 accumulate.
    tk = w2_ref.shape[0]
    kk = pl.multiple_of(k * tk, tk)
    acc_ref[...] += jnp.dot(h1_ref[:, pl.ds(kk, tk)], w2_ref[...],
                            preferred_element_type=jnp.float32)

    # Epilogue (last K-step): fc2 bias + ReLU, then fc3 as a VPU mul + lane
    # reduction against the lane-dense (1, H) fc3 row, plus the fc3 bias.
    @pl.when(k == pl.num_programs(0) - 1)
    def _():
        h2 = jnp.maximum(acc_ref[...] + b2_ref[...], 0.0)
        q_ref[...] = (jnp.sum(h2 * w3_ref[...], axis=-1, keepdims=True)
                      + b3_ref[...])


def soft_q_forward(folded, x, a, *, tk=512):
    """Eval-mode forward.  x: (B, obs_dim), a: (B, act_dim)  ->  (B, 1)."""
    w1f, b1f = folded["l1"]          # (din, H) bf16, (1, H) f32
    w2f, b2f = folded["l2"]          # (H, H) bf16,   (1, H) f32
    w3f, b3f = folded["l3"]          # (1, H) f32,    (1, 1) f32
    din, H = w1f.shape
    assert w2f.shape == (H, H) and w3f.shape == (1, H) and H % tk == 0
    nk = H // tk

    B = x.shape[0]
    h0 = jnp.concatenate([x, a], axis=1).astype(jnp.bfloat16)   # cast once
    assert h0.shape == (B, din)

    return pl.pallas_call(
        _fused_q_kernel,
        out_shape=jax.ShapeDtypeStruct((B, 1), jnp.float32),
        grid_spec=pltpu.PrefetchScalarGridSpec(
            num_scalar_prefetch=0,
            grid=(nk,),
            in_specs=[
                pl.BlockSpec((B, din), lambda k: (0, 0)),   # h0 (bf16, resident)
                pl.BlockSpec((din, H), lambda k: (0, 0)),   # fc1 W' (bf16, resident)
                pl.BlockSpec((1, H),   lambda k: (0, 0)),   # fc1 b' (f32, resident)
                pl.BlockSpec((tk, H),  lambda k: (k, 0)),   # fc2 W' row slab (bf16, streamed)
                pl.BlockSpec((1, H),   lambda k: (0, 0)),   # fc2 b' (f32, resident)
                pl.BlockSpec((1, H),   lambda k: (0, 0)),   # fc3 W' row (f32, resident)
                pl.BlockSpec((1, 1),   lambda k: (0, 0)),   # fc3 b' (f32, resident)
            ],
            out_specs=pl.BlockSpec((B, 1), lambda k: (0, 0)),
            scratch_shapes=[
                pltpu.VMEM((B, H), jnp.bfloat16),   # h1 (layer-1 activations, bf16)
                pltpu.VMEM((B, H), jnp.float32),    # fc2 accumulator
            ],
        ),
        compiler_params=pltpu.CompilerParams(
            dimension_semantics=("arbitrary",),
        ),
    )(h0, w1f, b1f, w2f, b2f, w3f, b3f)


# ---------------- parameter construction & offline BN folding -------------------


def _init_linear(key, fan_in, fan_out):
    kw, kb = jax.random.split(key)
    bound = 1.0 / jnp.sqrt(float(fan_in))
    w = jax.random.uniform(kw, (fan_in, fan_out), jnp.float32, -bound, bound)
    b = jax.random.uniform(kb, (1, fan_out), jnp.float32, -bound, bound)
    return w, b


def _init_bn(key, num_features):
    # __init__ values are ra_mean=0, ra_var=1, scale=1, bias=0; perturb them
    # deterministically so the normalization path is actually exercised.
    km, kv, ks, kb = jax.random.split(key, 4)
    ra_mean = 0.1 * jax.random.normal(km, (1, num_features), jnp.float32)
    ra_var = 1.0 + 0.1 * jax.random.uniform(kv, (1, num_features), jnp.float32)
    scale = 1.0 + 0.1 * jax.random.normal(ks, (1, num_features), jnp.float32)
    bias = 0.1 * jax.random.normal(kb, (1, num_features), jnp.float32)
    return ra_mean, ra_var, scale, bias


def init_soft_q_params(key, in_dim, hidden=2048):
    k1, k2, k3, k4, k5, k6 = jax.random.split(key, 6)
    return {
        "bn1": _init_bn(k1, in_dim),
        "fc1": _init_linear(k2, in_dim, hidden),
        "bn2": _init_bn(k3, hidden),
        "fc2": _init_linear(k4, hidden, hidden),
        "bn3": _init_bn(k5, hidden),
        "fc3": _init_linear(k6, hidden, 1),
    }


def fold_bn_linear(bn, fc, weight_dtype=jnp.float32):
    """Fold eval-mode BatchRenorm into the following Linear (one-time, offline)."""
    ra_mean, ra_var, scale, bias = bn            # each (1, F)
    w, b = fc                                    # (F, N), (1, N)
    alpha = scale * jax.lax.rsqrt(ra_var + EPS)  # (1, F)
    beta = bias - ra_mean * alpha                # (1, F)
    b_f = (beta @ w + b).astype(jnp.float32)     # fold bias with f32 weights
    w_f = (alpha.reshape(-1, 1) * w).astype(weight_dtype)
    return w_f, b_f


def fold_soft_q_params(params):
    w1f, b1f = fold_bn_linear(params["bn1"], params["fc1"], jnp.bfloat16)
    w2f, b2f = fold_bn_linear(params["bn2"], params["fc2"], jnp.bfloat16)
    w3f, b3f = fold_bn_linear(params["bn3"], params["fc3"], jnp.float32)
    return {
        "l1": (w1f, b1f),          # (din, H) bf16, (1, H) f32
        "l2": (w2f, b2f),          # (H, H)  bf16, (1, H) f32
        "l3": (w3f.T, b3f),        # (1, H)  f32 (lane-dense row), (1, 1) f32
    }


# --------------------------------- references -----------------------------------


def _reference_module(params, x, a):
    """Exact eval-mode module semantics (unfolded BN, pure f32 weights)."""
    def bn(h, m, v, s, b):
        return s * (h - m) / jnp.sqrt(v + EPS) + b

    h = jnp.concatenate([x, a], axis=1)
    h = jnp.maximum(bn(h, *params["bn1"]) @ params["fc1"][0] + params["fc1"][1], 0.0)
    h = jnp.maximum(bn(h, *params["bn2"]) @ params["fc2"][0] + params["fc2"][1], 0.0)
    return bn(h, *params["bn3"]) @ params["fc3"][0] + params["fc3"][1]


def _reference_folded(folded, x, a):
    """Same math as the kernel: folded BN, bf16 fc1/fc2 operands, f32 accumulation."""
    w1f, b1f = folded["l1"]
    w2f, b2f = folded["l2"]
    w3f, b3f = folded["l3"]
    h0 = jnp.concatenate([x, a], axis=1).astype(jnp.bfloat16)
    h1 = jnp.maximum(
        jnp.dot(h0, w1f, preferred_element_type=jnp.float32) + b1f, 0.0
    ).astype(jnp.bfloat16)
    h2 = jnp.maximum(
        jnp.dot(h1, w2f, preferred_element_type=jnp.float32) + b2f, 0.0)
    return jnp.sum(h2 * w3f, axis=-1, keepdims=True) + b3f


if __name__ == "__main__":
    key = jax.random.PRNGKey(0)
    kp, kx, ka = jax.random.split(key, 3)

    batch, obs_dim, act_dim = 8, 24, 8            # small shapes; in_dim = 32
    params = init_soft_q_params(kp, obs_dim + act_dim)
    folded = fold_soft_q_params(params)           # one-time offline BN fold
    x = jax.random.normal(kx, (batch, obs_dim), jnp.float32)
    a = jax.random.normal(ka, (batch, act_dim), jnp.float32)

    fwd = jax.jit(soft_q_forward)
    q = jax.block_until_ready(fwd(folded, x, a))
    assert q.shape == (batch, 1)

    # Tight check against the identical folded/bf16 math in plain XLA
    # (verifies the kernel itself; only f32 accumulation-order differences remain).
    q_folded = _reference_folded(folded, x, a)
    assert jnp.allclose(q, q_folded, atol=5e-3, rtol=5e-3)

    # Looser check against the exact f32 module semantics — bounds the bf16
    # weight/activation quantization contract.
    q_module = _reference_module(params, x, a)
    assert jnp.allclose(q, q_module, atol=5e-2, rtol=5e-2)

    print("KERNEL_OK")
</pallas_src>

<mosaic_0001>
module attributes {stable_mosaic.version = 11 : i64} {
  func.func @_fused_q_kernel(%arg0: i32, %arg1: memref<8x32xbf16, #tpu.memory_space<vmem>>, %arg2: memref<32x2048xbf16, #tpu.memory_space<vmem>>, %arg3: memref<1x2048xf32, #tpu.memory_space<vmem>>, %arg4: memref<512x2048xbf16, #tpu.memory_space<vmem>>, %arg5: memref<1x2048xf32, #tpu.memory_space<vmem>>, %arg6: memref<1x2048xf32, #tpu.memory_space<vmem>>, %arg7: memref<1x1xf32, #tpu.memory_space<vmem>>, %arg8: memref<8x1xf32, #tpu.memory_space<vmem>>, %arg9: memref<8x2048xbf16, #tpu.memory_space<vmem>>, %arg10: memref<8x2048xf32, #tpu.memory_space<vmem>>) attributes {dimension_semantics = [#tpu.dimension_semantics<arbitrary>], iteration_bounds = array<i64: 4>, scalar_prefetch = 0 : i64, scratch_operands = 2 : i64, tpu.core_type = #tpu.core_type<tc>, window_params = [{pipeline_mode = #tpu.pipeline_mode<synchronous>, transform_indices = @transform_0, window_bounds = array<i64: 8, 32>}, {pipeline_mode = #tpu.pipeline_mode<synchronous>, transform_indices = @transform_1, window_bounds = array<i64: 32, 2048>}, {pipeline_mode = #tpu.pipeline_mode<synchronous>, transform_indices = @transform_2, window_bounds = array<i64: 1, 2048>}, {transform_indices = @transform_3, window_bounds = array<i64: 512, 2048>}, {pipeline_mode = #tpu.pipeline_mode<synchronous>, transform_indices = @transform_4, window_bounds = array<i64: 1, 2048>}, {pipeline_mode = #tpu.pipeline_mode<synchronous>, transform_indices = @transform_5, window_bounds = array<i64: 1, 2048>}, {pipeline_mode = #tpu.pipeline_mode<synchronous>, transform_indices = @transform_6, window_bounds = array<i64: 1, 1>}, {pipeline_mode = #tpu.pipeline_mode<synchronous>, transform_indices = @transform_7, window_bounds = array<i64: 8, 1>}]} {
    %c0_i32 = arith.constant 0 : i32
    %0 = arith.cmpi eq, %arg0, %c0_i32 : i32
    %1 = arith.extui %0 : i1 to i32
    %c0_i32_0 = arith.constant 0 : i32
    %2 = arith.cmpi ne, %1, %c0_i32_0 : i32
    scf.if %2 {
      %c0_8 = arith.constant 0 : index
      %c0_9 = arith.constant 0 : index
      %15 = vector.load %arg1[%c0_8, %c0_9] : memref<8x32xbf16, #tpu.memory_space<vmem>>, vector<8x32xbf16>
      %c0_10 = arith.constant 0 : index
      %c0_11 = arith.constant 0 : index
      %16 = vector.load %arg2[%c0_10, %c0_11] : memref<32x2048xbf16, #tpu.memory_space<vmem>>, vector<32x2048xbf16>
      %cst_12 = arith.constant dense<0.000000e+00> : vector<8x2048xf32>
      %17 = tpu.matmul %15, %16, %cst_12 {dimension_numbers = #tpu.dot_dimension_numbers<[1], [0], [0], [1], [0, 0, 1, 1], [], []>} : vector<8x32xbf16>, vector<32x2048xbf16>, vector<8x2048xf32> -> vector<8x2048xf32>
      %c0_13 = arith.constant 0 : index
      %c0_14 = arith.constant 0 : index
      %18 = vector.load %arg3[%c0_13, %c0_14] : memref<1x2048xf32, #tpu.memory_space<vmem>>, vector<1x2048xf32>
      %19 = vector.broadcast %18 : vector<1x2048xf32> to vector<8x2048xf32>
      %20 = arith.addf %17, %19 : vector<8x2048xf32>
      %cst_15 = arith.constant 0.000000e+00 : f32
      %21 = vector.broadcast %cst_15 : f32 to vector<8x2048xf32>
      %22 = arith.maximumf %20, %21 : vector<8x2048xf32>
      %23 = arith.truncf %22 : vector<8x2048xf32> to vector<8x2048xbf16>
      %c0_16 = arith.constant 0 : index
      %c0_17 = arith.constant 0 : index
      %24 = vector.load %arg9[%c0_16, %c0_17] : memref<8x2048xbf16, #tpu.memory_space<vmem>>, vector<8x2048xbf16>
      tpu.vector_store %arg9[%c0_16, %c0_17], %23 {strides = array<i32>} : memref<8x2048xbf16, #tpu.memory_space<vmem>>, vector<8x2048xbf16>,
      %cst_18 = arith.constant 0.000000e+00 : f32
      %25 = vector.broadcast %cst_18 : f32 to vector<8x2048xf32>
      %c0_19 = arith.constant 0 : index
      %c0_20 = arith.constant 0 : index
      %26 = vector.load %arg10[%c0_19, %c0_20] : memref<8x2048xf32, #tpu.memory_space<vmem>>, vector<8x2048xf32>
      tpu.vector_store %arg10[%c0_19, %c0_20], %25 {strides = array<i32>} : memref<8x2048xf32, #tpu.memory_space<vmem>>, vector<8x2048xf32>,
    } else {
    }
    %c512_i32 = arith.constant 512 : i32
    %3 = arith.muli %arg0, %c512_i32 : i32
    %4 = tpu.assume_multiple %3, 512 : i32
    %c0 = arith.constant 0 : index
    %c0_1 = arith.constant 0 : index
    %5 = vector.load %arg10[%c0, %c0_1] : memref<8x2048xf32, #tpu.memory_space<vmem>>, vector<8x2048xf32>
    %c0_2 = arith.constant 0 : index
    %6 = arith.index_cast %4 : i32 to index
    %7 = vector.load %arg9[%c0_2, %6] : memref<8x2048xbf16, #tpu.memory_space<vmem>>, vector<8x512xbf16>
    %c0_3 = arith.constant 0 : index
    %c0_4 = arith.constant 0 : index
    %8 = vector.load %arg4[%c0_3, %c0_4] : memref<512x2048xbf16, #tpu.memory_space<vmem>>, vector<512x2048xbf16>
    %cst = arith.constant dense<0.000000e+00> : vector<8x2048xf32>
    %9 = tpu.matmul %7, %8, %cst {dimension_numbers = #tpu.dot_dimension_numbers<[1], [0], [0], [1], [0, 0, 1, 1], [], []>} : vector<8x512xbf16>, vector<512x2048xbf16>, vector<8x2048xf32> -> vector<8x2048xf32>
    %10 = arith.addf %5, %9 : vector<8x2048xf32>
    %c0_5 = arith.constant 0 : index
    %c0_6 = arith.constant 0 : index
    %11 = vector.load %arg10[%c0_5, %c0_6] : memref<8x2048xf32, #tpu.memory_space<vmem>>, vector<8x2048xf32>
    tpu.vector_store %arg10[%c0_5, %c0_6], %10 {strides = array<i32>} : memref<8x2048xf32, #tpu.memory_space<vmem>>, vector<8x2048xf32>,
    %c3_i32 = arith.constant 3 : i32
    %12 = arith.cmpi eq, %arg0, %c3_i32 : i32
    %13 = arith.extui %12 : i1 to i32
    %c0_i32_7 = arith.constant 0 : i32
    %14 = arith.cmpi ne, %13, %c0_i32_7 : i32
    scf.if %14 {
      %c0_8 = arith.constant 0 : index
      %c0_9 = arith.constant 0 : index
      %15 = vector.load %arg10[%c0_8, %c0_9] : memref<8x2048xf32, #tpu.memory_space<vmem>>, vector<8x2048xf32>
      %c0_10 = arith.constant 0 : index
      %c0_11 = arith.constant 0 : index
      %16 = vector.load %arg5[%c0_10, %c0_11] : memref<1x2048xf32, #tpu.memory_space<vmem>>, vector<1x2048xf32>
      %17 = vector.broadcast %16 : vector<1x2048xf32> to vector<8x2048xf32>
      %18 = arith.addf %15, %17 : vector<8x2048xf32>
      %cst_12 = arith.constant 0.000000e+00 : f32
      %19 = vector.broadcast %cst_12 : f32 to vector<8x2048xf32>
      %20 = arith.maximumf %18, %19 : vector<8x2048xf32>
      %c0_13 = arith.constant 0 : index
      %c0_14 = arith.constant 0 : index
      %21 = vector.load %arg6[%c0_13, %c0_14] : memref<1x2048xf32, #tpu.memory_space<vmem>>, vector<1x2048xf32>
      %22 = vector.broadcast %21 : vector<1x2048xf32> to vector<8x2048xf32>
      %23 = arith.mulf %20, %22 : vector<8x2048xf32>
      %cst_15 = arith.constant dense<0.000000e+00> : vector<8xf32>
      %24 = vector.multi_reduction <add>, %23, %cst_15 [1] : vector<8x2048xf32> to vector<8xf32>
      %25 = vector.shape_cast %24 : vector<8xf32> to vector<8x1xf32>
      %c0_16 = arith.constant 0 : index
      %c0_17 = arith.constant 0 : index
      %26 = vector.load %arg7[%c0_16, %c0_17] : memref<1x1xf32, #tpu.memory_space<vmem>>, vector<1x1xf32>
      %27 = vector.broadcast %26 : vector<1x1xf32> to vector<8x1xf32>
      %28 = arith.addf %25, %27 : vector<8x1xf32>
      %c0_18 = arith.constant 0 : index
      %c0_19 = arith.constant 0 : index
      %29 = vector.load %arg8[%c0_18, %c0_19] : memref<8x1xf32, #tpu.memory_space<vmem>>, vector<8x1xf32>
      tpu.vector_store %arg8[%c0_18, %c0_19], %28 {strides = array<i32>} : memref<8x1xf32, #tpu.memory_space<vmem>>, vector<8x1xf32>,
    } else {
    }
    return
  }
  func.func @transform_0(%arg0: i32) -> (i32, i32) {
    %c0_i32 = arith.constant 0 : i32
    %c0_i32_0 = arith.constant 0 : i32
    %c0_i32_1 = arith.constant 0 : i32
    return %c0_i32, %c0_i32_0 : i32, i32
  }
  func.func @transform_1(%arg0: i32) -> (i32, i32) {
    %c0_i32 = arith.constant 0 : i32
    %c0_i32_0 = arith.constant 0 : i32
    %c0_i32_1 = arith.constant 0 : i32
    return %c0_i32, %c0_i32_0 : i32, i32
  }
  func.func @transform_2(%arg0: i32) -> (i32, i32) {
    %c0_i32 = arith.constant 0 : i32
    %c0_i32_0 = arith.constant 0 : i32
    %c0_i32_1 = arith.constant 0 : i32
    return %c0_i32, %c0_i32_0 : i32, i32
  }
  func.func @transform_3(%arg0: i32) -> (i32, i32) {
    %c0_i32 = arith.constant 0 : i32
    %c0_i32_0 = arith.constant 0 : i32
    return %arg0, %c0_i32 : i32, i32
  }
  func.func @transform_4(%arg0: i32) -> (i32, i32) {
    %c0_i32 = arith.constant 0 : i32
    %c0_i32_0 = arith.constant 0 : i32
    %c0_i32_1 = arith.constant 0 : i32
    return %c0_i32, %c0_i32_0 : i32, i32
  }
  func.func @transform_5(%arg0: i32) -> (i32, i32) {
    %c0_i32 = arith.constant 0 : i32
    %c0_i32_0 = arith.constant 0 : i32
    %c0_i32_1 = arith.constant 0 : i32
    return %c0_i32, %c0_i32_0 : i32, i32
  }
  func.func @transform_6(%arg0: i32) -> (i32, i32) {
    %c0_i32 = arith.constant 0 : i32
    %c0_i32_0 = arith.constant 0 : i32
    %c0_i32_1 = arith.constant 0 : i32
    return %c0_i32, %c0_i32_0 : i32, i32
  }
  func.func @transform_7(%arg0: i32) -> (i32, i32) {
    %c0_i32 = arith.constant 0 : i32
    %c0_i32_0 = arith.constant 0 : i32
    %c0_i32_1 = arith.constant 0 : i32
    return %c0_i32, %c0_i32_0 : i32, i32
  }
}

</mosaic_0001>

<llo_original>
// kernel: soft_q_forward.1
$region0: #{soft_q_forward.1}
  #allocation0 [shape = 'u32[]', space=smem, size = 0x4, offset = 0x4, fixed_abs, tag = 'smem constant byte address 0x4 - core index']
  #allocation1 [shape = 'u32[144,128]{1,0:T(1,128)}', space=vmem, size = 0x12000, scoped, tag = 'internal scratch']
  #allocation2 [shape = 'bf16[8,2048]{1,0:T(8,128)(2,1)}', space=vmem, size = 0x8000, scoped, tag = 'scratch operand']
  #allocation3 [shape = 'f32[8,2048]{1,0:T(8,128)}', space=vmem, size = 0x10000, scoped, tag = 'scratch operand']
  #allocation4 [shape = 'f32[1,1]{1,0:T(1,128)S(1)}', space=vmem, size = 0x200, scoped, tag = 'scoped memory for soft_q_forward.1']
  %s0 = inlined_call_operand.vmem [shape: bf16[8,32], index: 0, kind: input, shape index: {}]
  %s1 = inlined_call_operand.hbm [shape: bf16[32,2048], index: 1, kind: input, shape index: {}]
  %s2 = inlined_call_operand.hbm [shape: f32[1,2048], index: 2, kind: input, shape index: {}]
  %s3 = inlined_call_operand.hbm [shape: bf16[2048,2048], index: 3, kind: input, shape index: {}]
  %s4 = inlined_call_operand.hbm [shape: f32[1,2048], index: 4, kind: input, shape index: {}]
  %s5 = inlined_call_operand.hbm [shape: f32[1,2048], index: 5, kind: input, shape index: {}]
  %s6 = inlined_call_operand.<no memory space> [shape: f32[1,1], index: 6, kind: input, shape index: {}]
  %s7 = inlined_call_operand.vmem [shape: f32[8,1], index: 7, kind: output, shape index: {}]
  %s8 = sld [smem:[#allocation0]]
  $region89: #{soft_q_forward.1} parent=0
    _
  %s10 = ssub.s32 1, %s8
  %s11 = scalar_select 0, %s10, %s8
  %v12 = vstv %s6
  %13 = vst [vmem:[#allocation4] sm:$0x1] %v12
  $region1: #{soft_q_forward.1} parent=0
    #allocation5 [shape = 'u8[131072]{0}', space=vmem, size = 0x20000, scoped, tag = 'input window, operand 1, single buffered']
    #allocation6 [shape = 's32[2]{0}', space=sflag, size = 0x8, scoped, tag = 'scoped memory for soft_q_forward.1']
    #allocation7 [shape = 'u8[8192]{0}', space=vmem, size = 0x2000, scoped, tag = 'input window, operand 2, single buffered']
    #allocation8 [shape = 's32[1]{0}', space=sflag, size = 0x4, scoped, tag = 'scoped memory for soft_q_forward.1']
    #allocation9 [shape = 'u8[4194304]{0}', space=vmem, size = 0x400000, scoped, tag = 'input window, operand 3']
    #allocation10 [shape = 'u8[8192]{0}', space=vmem, size = 0x2000, scoped, tag = 'input window, operand 4, single buffered']
    #allocation11 [shape = 'u8[8192]{0}', space=vmem, size = 0x2000, scoped, tag = 'input window, operand 5, single buffered']
    #allocation12 [shape = 's32[1]{0}', space=sflag, size = 0x4, scoped, tag = 'scoped memory for soft_q_forward.1']
    %14 = vsyncpa [#allocation6], 0
    %15 = vsyncpa [#allocation8], 0
    %16 = vsyncpa [#allocation12], 0
    loop: start=0, step=1, limit=6
    $region2: #{soft_q_forward.1} parent=1 // loop_pre_header
      _
    $region3: #{soft_q_forward.1} parent=1 // loop_header
      %s18 = sphi 0, %s22
      %p19 = scmp.ge.s32.totalorder %s18, 6
      %s26 = sphi 0, %s26
      %s28 = sphi 0, %s26
      %s29 = sphi 0, %s28
      %s43 = sphi 0, %s29
      %s47 = sphi 0, %s47
      %s49 = sphi 0, %s47
      %s50 = sphi 0, %s49
      %s64 = sphi 0, %s50
      %s68 = sphi 0, %s68
      %s70 = sphi 0, %s68
      %s71 = sphi 0, %s70
      %s85 = sphi 0, %s71
      %s91 = sphi 0, %s93
      %s94 = sphi 0, %s91
      %s95 = sphi 0, %s94
      %s111 = sphi 0, %s95
      %s115 = sphi 0, %s115
      %s117 = sphi 0, %s115
      %s118 = sphi 0, %s117
      %s132 = sphi 0, %s118
      %s136 = sphi 0, %s136
      %s138 = sphi 0, %s136
      %s139 = sphi 0, %s138
      %s153 = sphi 0, %s139
      %s157 = sphi 0, %s157
      %s159 = sphi 0, %s157
      %s160 = sphi 0, %s159
      %s174 = sphi 0, %s160
      %s178 = sphi 0, %s178
      %s180 = sphi 0, %s178
      %s181 = sphi 0, %s180
      %s195 = sphi 0, %s181
    $region4: #{soft_q_forward.1} parent=1 // loop_header_branch
      %21 = sbr.rel (%p19) target = $region8
    $region5: #{soft_q_forward.1} parent=1 // loop_body
      %s23 = ssub.s32 %s18, 1
      %s24 = ssub.s32 %s18, 2
      %s25 = sadd.s32 %s18, 1
      %s27 = sadd.s32 %s26, 1
      %p30 = scmp.eq.s32.totalorder %s18, 3
      %p31 = scmp.ne.s32.totalorder %s26, %s28
      %p32 = scmp.eq.s32.totalorder %s18, 0
      %p33 = por %p31, %p32
      %p34 = scmp.ne.s32.totalorder %s26, %s28
      %p35 = scmp.eq.s32.totalorder %s23, 3
      %p36 = por %p34, %p35
      %p37 = scmp.ne.s32.totalorder %s28, %s29
      %p38 = scmp.eq.s32.totalorder %s23, 0
      %p39 = por %p37, %p38
      %p40 = scmp.ne.s32.totalorder %s28, %s29
      %p41 = scmp.eq.s32.totalorder %s24, 3
      %p42 = por %p40, %p41
      %p44 = scmp.ne.s32.totalorder %s29, %s43
      %p45 = scmp.eq.s32.totalorder %s24, 0
      %p46 = por %p44, %p45
      %s48 = sadd.s32 %s47, 1
      %p51 = scmp.eq.s32.totalorder %s18, 3
      %p52 = scmp.ne.s32.totalorder %s47, %s49
      %p53 = scmp.eq.s32.totalorder %s18, 0
      %p54 = por %p52, %p53
      %p55 = scmp.ne.s32.totalorder %s47, %s49
      %p56 = scmp.eq.s32.totalorder %s23, 3
      %p57 = por %p55, %p56
      %p58 = scmp.ne.s32.totalorder %s49, %s50
      %p59 = scmp.eq.s32.totalorder %s23, 0
      %p60 = por %p58, %p59
      %p61 = scmp.ne.s32.totalorder %s49, %s50
      %p62 = scmp.eq.s32.totalorder %s24, 3
      %p63 = por %p61, %p62
      %p65 = scmp.ne.s32.totalorder %s50, %s64
      %p66 = scmp.eq.s32.totalorder %s24, 0
      %p67 = por %p65, %p66
      %s69 = sadd.s32 %s68, 1
      %p72 = scmp.eq.s32.totalorder %s18, 3
      %p73 = scmp.ne.s32.totalorder %s68, %s70
      %p74 = scmp.eq.s32.totalorder %s18, 0
      %p75 = por %p73, %p74
      %p76 = scmp.ne.s32.totalorder %s68, %s70
      %p77 = scmp.eq.s32.totalorder %s23, 3
      %p78 = por %p76, %p77
      %p79 = scmp.ne.s32.totalorder %s70, %s71
      %p80 = scmp.eq.s32.totalorder %s23, 0
      %p81 = por %p79, %p80
      %p82 = scmp.ne.s32.totalorder %s70, %s71
      %p83 = scmp.eq.s32.totalorder %s24, 3
      %p84 = por %p82, %p83
      %p86 = scmp.ne.s32.totalorder %s71, %s85
      %p87 = scmp.eq.s32.totalorder %s24, 0
      %p88 = por %p86, %p87
      %s89 = ssub.s32 %s18, %s25
      %p90 = scmp.eq.s32.totalorder %s89, 0
      %s92 = sadd.s32 %s91, 1
      %s93 = scalar_select %p90, %s91, %s92
      %p96 = pneg %p90
      %p97 = scmp.eq.s32.totalorder %s18, 3
      %p98 = por %p96, %p97
      %p99 = scmp.ne.s32.totalorder %s91, %s94
      %p100 = scmp.eq.s32.totalorder %s18, 0
      %p101 = por %p99, %p100
      %p102 = scmp.ne.s32.totalorder %s91, %s94
      %p103 = scmp.eq.s32.totalorder %s23, 3
      %p104 = por %p102, %p103
      %p105 = scmp.ne.s32.totalorder %s94, %s95
      %p106 = scmp.eq.s32.totalorder %s23, 0
      %p107 = por %p105, %p106
      %p108 = scmp.ne.s32.totalorder %s94, %s95
      %p109 = scmp.eq.s32.totalorder %s24, 3
      %p110 = por %p108, %p109
      %p112 = scmp.ne.s32.totalorder %s95, %s111
      %p113 = scmp.eq.s32.totalorder %s24, 0
      %p114 = por %p112, %p113
      %s116 = sadd.s32 %s115, 1
      %p119 = scmp.eq.s32.totalorder %s18, 3
      %p120 = scmp.ne.s32.totalorder %s115, %s117
      %p121 = scmp.eq.s32.totalorder %s18, 0
      %p122 = por %p120, %p121
      %p123 = scmp.ne.s32.totalorder %s115, %s117
      %p124 = scmp.eq.s32.totalorder %s23, 3
      %p125 = por %p123, %p124
      %p126 = scmp.ne.s32.totalorder %s117, %s118
      %p127 = scmp.eq.s32.totalorder %s23, 0
      %p128 = por %p126, %p127
      %p129 = scmp.ne.s32.totalorder %s117, %s118
      %p130 = scmp.eq.s32.totalorder %s24, 3
      %p131 = por %p129, %p130
      %p133 = scmp.ne.s32.totalorder %s118, %s132
      %p134 = scmp.eq.s32.totalorder %s24, 0
      %p135 = por %p133, %p134
      %s137 = sadd.s32 %s136, 1
      %p140 = scmp.eq.s32.totalorder %s18, 3
      %p141 = scmp.ne.s32.totalorder %s136, %s138
      %p142 = scmp.eq.s32.totalorder %s18, 0
      %p143 = por %p141, %p142
      %p144 = scmp.ne.s32.totalorder %s136, %s138
      %p145 = scmp.eq.s32.totalorder %s23, 3
      %p146 = por %p144, %p145
      %p147 = scmp.ne.s32.totalorder %s138, %s139
      %p148 = scmp.eq.s32.totalorder %s23, 0
      %p149 = por %p147, %p148
      %p150 = scmp.ne.s32.totalorder %s138, %s139
      %p151 = scmp.eq.s32.totalorder %s24, 3
      %p152 = por %p150, %p151
      %p154 = scmp.ne.s32.totalorder %s139, %s153
      %p155 = scmp.eq.s32.totalorder %s24, 0
      %p156 = por %p154, %p155
      %s158 = sadd.s32 %s157, 1
      %p161 = scmp.eq.s32.totalorder %s18, 3
      %p162 = scmp.ne.s32.totalorder %s157, %s159
      %p163 = scmp.eq.s32.totalorder %s18, 0
      %p164 = por %p162, %p163
      %p165 = scmp.ne.s32.totalorder %s157, %s159
      %p166 = scmp.eq.s32.totalorder %s23, 3
      %p167 = por %p165, %p166
      %p168 = scmp.ne.s32.totalorder %s159, %s160
      %p169 = scmp.eq.s32.totalorder %s23, 0
      %p170 = por %p168, %p169
      %p171 = scmp.ne.s32.totalorder %s159, %s160
      %p172 = scmp.eq.s32.totalorder %s24, 3
      %p173 = por %p171, %p172
      %p175 = scmp.ne.s32.totalorder %s160, %s174
      %p176 = scmp.eq.s32.totalorder %s24, 0
      %p177 = por %p175, %p176
      %s179 = sadd.s32 %s178, 1
      %p182 = scmp.eq.s32.totalorder %s18, 3
      %p183 = scmp.ne.s32.totalorder %s178, %s180
      %p184 = scmp.eq.s32.totalorder %s18, 0
      %p185 = por %p183, %p184
      %p186 = scmp.ne.s32.totalorder %s178, %s180
      %p187 = scmp.eq.s32.totalorder %s23, 3
      %p188 = por %p186, %p187
      %p189 = scmp.ne.s32.totalorder %s180, %s181
      %p190 = scmp.eq.s32.totalorder %s23, 0
      %p191 = por %p189, %p190
      %p192 = scmp.ne.s32.totalorder %s180, %s181
      %p193 = scmp.eq.s32.totalorder %s24, 3
      %p194 = por %p192, %p193
      %p196 = scmp.ne.s32.totalorder %s181, %s195
      %p197 = scmp.eq.s32.totalorder %s24, 0
      %p198 = por %p196, %p197
      %p199 = scmp.le.s32.totalorder 1, %s18
      %p200 = scmp.lt.s32.totalorder %s18, 5
      %p201 = pnand %p199, %p200
      %p202 = pneg %p201
      // Predicated region
      $region9: #{soft_q_forward.1} parent=5 // pred_check
        _
      $region10: #{soft_q_forward.1} parent=5 // pred_check_branch
        %204 = sbr.rel (%p201) target = $region12
      $region11: #{soft_q_forward.1} parent=5 // pred_region
        %s205 = ssub.s32 %s18, 1
        // Predicated region
        $region13: #{soft_q_forward.1} parent=11 // pred_check
          %p206 = pneg %p39
        $region14: #{soft_q_forward.1} parent=11 // pred_check_branch
          %208 = sbr.rel (%p206) target = $region16
        $region15: #{soft_q_forward.1} parent=11 // pred_region
          _
        $region16: #{soft_q_forward.1} parent=11 // pred_fallthru
          _
        // Predicated region
        $region17: #{soft_q_forward.1} parent=11 // pred_check
          %p209 = pneg %p60
        $region18: #{soft_q_forward.1} parent=11 // pred_check_branch
          %211 = sbr.rel (%p209) target = $region20
        $region19: #{soft_q_forward.1} parent=11 // pred_region
          %s213 = ssub.s32 4096, 4096
          %214 = vsyncadd [#allocation6], %s213
          %s215 = sshll.u32 [#allocation5], 4
          %s216 = int_to_ptr.vmem [resolvable:$true] %s215
          %221 = dma.hbm_to_vmem [thread:$0]  %s1, 4096, %s216, [#allocation6], 1024, 1024, 64
        $region20: #{soft_q_forward.1} parent=11 // pred_fallthru
          _
        // Predicated region
        $region21: #{soft_q_forward.1} parent=11 // pred_check
          %p222 = pneg %p81
        $region22: #{soft_q_forward.1} parent=11 // pred_check_branch
          %224 = sbr.rel (%p222) target = $region24
        $region23: #{soft_q_forward.1} parent=11 // pred_region
          %s226 = ssub.s32 256, 256
          %227 = vsyncadd [#allocation8], %s226
          %s229 = sshll.u32 [#allocation7], 4
          %s230 = int_to_ptr.vmem [resolvable:$true] %s229
          %232 = dma.hbm_to_vmem [thread:$0]  %s2, 256, %s230, [#allocation8]
        $region24: #{soft_q_forward.1} parent=11 // pred_fallthru
          _
        // Predicated region
        $region25: #{soft_q_forward.1} parent=11 // pred_check
          %p233 = pneg %p128
        $region26: #{soft_q_forward.1} parent=11 // pred_check_branch
          %235 = sbr.rel (%p233) target = $region28
        $region27: #{soft_q_forward.1} parent=11 // pred_region
          %s237 = ssub.s32 256, 256
          %238 = vsyncadd [#allocation8], %s237
          %s240 = sshll.u32 [#allocation10], 4
          %s241 = int_to_ptr.vmem [resolvable:$true] %s240
          %243 = dma.hbm_to_vmem [thread:$0]  %s4, 256, %s241, [#allocation8]
        $region28: #{soft_q_forward.1} parent=11 // pred_fallthru
          _
        // Predicated region
        $region29: #{soft_q_forward.1} parent=11 // pred_check
          %p244 = pneg %p149
        $region30: #{soft_q_forward.1} parent=11 // pred_check_branch
          %246 = sbr.rel (%p244) target = $region32
        $region31: #{soft_q_forward.1} parent=11 // pred_region
          %s248 = ssub.s32 256, 256
          %249 = vsyncadd [#allocation12], %s248
          %s251 = sshll.u32 [#allocation11], 4
          %s252 = int_to_ptr.vmem [resolvable:$true] %s251
          %254 = dma.hbm_to_vmem [thread:$0]  %s5, 256, %s252, [#allocation12]
        $region32: #{soft_q_forward.1} parent=11 // pred_fallthru
          _
        // Predicated region
        $region33: #{soft_q_forward.1} parent=11 // pred_check
          %p255 = pneg %p170
        $region34: #{soft_q_forward.1} parent=11 // pred_check_branch
          %257 = sbr.rel (%p255) target = $region36
        $region35: #{soft_q_forward.1} parent=11 // pred_region
          _
        $region36: #{soft_q_forward.1} parent=11 // pred_fallthru
          _
      $region12: #{soft_q_forward.1} parent=5 // pred_fallthru
        _
      %p258 = scmp.lt.s32.totalorder %s18, 4
      // Predicated region
      $region37: #{soft_q_forward.1} parent=5 // pred_check
        %p259 = pneg %p258
      $region38: #{soft_q_forward.1} parent=5 // pred_check_branch
        %261 = sbr.rel (%p259) target = $region40
      $region39: #{soft_q_forward.1} parent=5 // pred_region
        // Predicated region
        $region41: #{soft_q_forward.1} parent=39 // pred_check
          %p262 = pneg %p101
        $region42: #{soft_q_forward.1} parent=39 // pred_check_branch
          %264 = sbr.rel (%p262) target = $region44
        $region43: #{soft_q_forward.1} parent=39 // pred_region
          %s265 = sand.u32 %s18, 1
          %s266 = scalar_lea.sflag [#allocation6], %s265
          %s267 = sand.u32 %s91, 1
          %s268 = smul.addr %s267, 4096
          %s269 = scalar_lea.vmem [#allocation9], %s268
          %s270 = smul.u32 64, %s18
          %s272 = ssub.s32 65536, 65536
          %273 = vsyncadd %s266, %s272
          %s274 = smul.addr %s270, 16
          %s275 = smul.addr %s274, 64
          %s276 = scalar_lea.hbm %s3, %s275
          %s277 = sshll.u32 %s269, 4
          %s278 = int_to_ptr.vmem [resolvable:$true] %s277
          %283 = dma.hbm_to_vmem [thread:$0]  %s276, 65536, %s278, %s266, 1024, 1024, 64
        $region44: #{soft_q_forward.1} parent=39 // pred_fallthru
          _
      $region40: #{soft_q_forward.1} parent=5 // pred_fallthru
        _
      %p284 = scmp.le.s32.totalorder 1, %s18
      %p285 = scmp.lt.s32.totalorder %s18, 5
      %p286 = pnand %p284, %p285
      %p287 = pneg %p286
      // Predicated region
      $region45: #{soft_q_forward.1} parent=5 // pred_check
        _
      $region46: #{soft_q_forward.1} parent=5 // pred_check_branch
        %289 = sbr.rel (%p286) target = $region48
      $region47: #{soft_q_forward.1} parent=5 // pred_region
        %s290 = ssub.s32 %s18, 1
        // Predicated region
        $region49: #{soft_q_forward.1} parent=47 // pred_check
          %p291 = pneg %p60
        $region50: #{soft_q_forward.1} parent=47 // pred_check_branch
          %293 = sbr.rel (%p291) target = $region52
        $region51: #{soft_q_forward.1} parent=47 // pred_region
          %294 = dma.done [#allocation6], 4096
        $region52: #{soft_q_forward.1} parent=47 // pred_fallthru
          _
        // Predicated region
        $region53: #{soft_q_forward.1} parent=47 // pred_check
          %p295 = pneg %p81
        $region54: #{soft_q_forward.1} parent=47 // pred_check_branch
          %297 = sbr.rel (%p295) target = $region56
        $region55: #{soft_q_forward.1} parent=47 // pred_region
          %298 = dma.done [#allocation8], 256
        $region56: #{soft_q_forward.1} parent=47 // pred_fallthru
          _
        %s299 = sand.u32 %s23, 1
        %s300 = scalar_lea.sflag [#allocation6], %s299
        %s301 = sand.u32 %s94, 1
        %s302 = smul.addr %s301, 4096
        %s303 = scalar_lea.vmem [#allocation9], %s302
        // Predicated region
        $region57: #{soft_q_forward.1} parent=47 // pred_check
          %p304 = pneg %p107
        $region58: #{soft_q_forward.1} parent=47 // pred_check_branch
          %306 = sbr.rel (%p304) target = $region60
        $region59: #{soft_q_forward.1} parent=47 // pred_region
          %307 = dma.done %s300, 65536
        $region60: #{soft_q_forward.1} parent=47 // pred_fallthru
          _
        // Predicated region
        $region61: #{soft_q_forward.1} parent=47 // pred_check
          %p308 = pneg %p128
        $region62: #{soft_q_forward.1} parent=47 // pred_check_branch
          %310 = sbr.rel (%p308) target = $region64
        $region63: #{soft_q_forward.1} parent=47 // pred_region
          %311 = dma.done [#allocation8], 256
        $region64: #{soft_q_forward.1} parent=47 // pred_fallthru
          _
        // Predicated region
        $region65: #{soft_q_forward.1} parent=47 // pred_check
          %p312 = pneg %p149
        $region66: #{soft_q_forward.1} parent=47 // pred_check_branch
          %314 = sbr.rel (%p312) target = $region68
        $region67: #{soft_q_forward.1} parent=47 // pred_region
          %315 = dma.done [#allocation12], 256
        $region68: #{soft_q_forward.1} parent=47 // pred_fallthru
          _
        %p316 = pneg %p39
        %p317 = pneg %p36
        %p318 = pneg %p60
        %p319 = pneg %p57
        %p320 = pneg %p81
        %p321 = pneg %p78
        %s322 = sand.u32 %s23, 1
        %s323 = scalar_lea.sflag [#allocation6], %s322
        %s324 = sand.u32 %s94, 1
        %s325 = smul.addr %s324, 4096
        %s326 = scalar_lea.vmem [#allocation9], %s325
        %p327 = pneg %p107
        %p328 = pneg %p104
        %p329 = pneg %p128
        %p330 = pneg %p125
        %p331 = pneg %p149
        %p332 = pneg %p146
        %p333 = pneg %p170
        %p334 = pneg %p167
        %p335 = pneg %p191
        %p336 = pneg %p188
        %s337 = smul.u32 64, %s23
        %p339 = scmp.eq.s32.totalorder %s23, 0
        // Predicated region
        $region69: #{soft_q_forward.1} parent=47 // pred_check
          %p340 = pneg %p339
        $region70: #{soft_q_forward.1} parent=47 // pred_check_branch
          %342 = sbr.rel (%p340) target = $region72
        $region71: #{soft_q_forward.1} parent=47 // pred_region
          %v343 = vld [vmem:[%s0] sm:$0xf]
          %v344 = vld [vmem:[#allocation5] sm:$0xff]
          %v345 = vld [vmem:[#allocation5 + $0x8] sm:$0xff]
          %v346 = vld [vmem:[#allocation5 + $0x10] sm:$0xff]
          %v347 = vld [vmem:[#allocation5 + $0x18] sm:$0xff]
          %v348 = vld [vmem:[#allocation5 + $0x20] sm:$0xff]
          %v349 = vld [vmem:[#allocation5 + $0x28] sm:$0xff]
          %v350 = vld [vmem:[#allocation5 + $0x30] sm:$0xff]
          %v351 = vld [vmem:[#allocation5 + $0x38] sm:$0xff]
          %v352 = vld [vmem:[#allocation5 + $0x40] sm:$0xff]
          %v353 = vld [vmem:[#allocation5 + $0x48] sm:$0xff]
          %v354 = vld [vmem:[#allocation5 + $0x50] sm:$0xff]
          %v355 = vld [vmem:[#allocation5 + $0x58] sm:$0xff]
          %v356 = vld [vmem:[#allocation5 + $0x60] sm:$0xff]
          %v357 = vld [vmem:[#allocation5 + $0x68] sm:$0xff]
          %v358 = vld [vmem:[#allocation5 + $0x70] sm:$0xff]
          %v359 = vld [vmem:[#allocation5 + $0x78] sm:$0xff]
          %v360 = vld [vmem:[#allocation5 + $0x80] sm:$0xff]
          %v361 = vld [vmem:[#allocation5 + $0x88] sm:$0xff]
          %v362 = vld [vmem:[#allocation5 + $0x90] sm:$0xff]
          %v363 = vld [vmem:[#allocation5 + $0x98] sm:$0xff]
          %v364 = vld [vmem:[#allocation5 + $0xa0] sm:$0xff]
          %v365 = vld [vmem:[#allocation5 + $0xa8] sm:$0xff]
          %v366 = vld [vmem:[#allocation5 + $0xb0] sm:$0xff]
          %v367 = vld [vmem:[#allocation5 + $0xb8] sm:$0xff]
          %v368 = vld [vmem:[#allocation5 + $0xc0] sm:$0xff]
          %v369 = vld [vmem:[#allocation5 + $0xc8] sm:$0xff]
          %v370 = vld [vmem:[#allocation5 + $0xd0] sm:$0xff]
          %v371 = vld [vmem:[#allocation5 + $0xd8] sm:$0xff]
          %v372 = vld [vmem:[#allocation5 + $0xe0] sm:$0xff]
          %v373 = vld [vmem:[#allocation5 + $0xe8] sm:$0xff]
          %v374 = vld [vmem:[#allocation5 + $0xf0] sm:$0xff]
          %v375 = vld [vmem:[#allocation5 + $0xf8] sm:$0xff]
          %v376 = vld [vmem:[#allocation7] sm:$0xff]
          %v377 = vld [vmem:[#allocation7 + $0x8] sm:$0xff]
          %v380 = vlaneseq
          %v381 = vshrl.u32 %v380, 7
          %v382 = vsub.s32 0, %v381
          %v383 = vrot.slane %v376, %v382
          %v384 = vlaneseq
          %v385 = vshrl.u32 %v384, 7
          %v386 = vsub.s32 1, %v385
          %v387 = vrot.slane %v376, %v386
          %v388 = vlaneseq
          %v389 = vshrl.u32 %v388, 7
          %v390 = vsub.s32 2, %v389
          %v391 = vrot.slane %v376, %v390
          %v392 = vlaneseq
          %v393 = vshrl.u32 %v392, 7
          %v394 = vsub.s32 3, %v393
          %v395 = vrot.slane %v376, %v394
          %v396 = vlaneseq
          %v397 = vshrl.u32 %v396, 7
          %v398 = vsub.s32 4, %v397
          %v399 = vrot.slane %v376, %v398
          %v400 = vlaneseq
          %v401 = vshrl.u32 %v400, 7
          %v402 = vsub.s32 5, %v401
          %v403 = vrot.slane %v376, %v402
          %v404 = vlaneseq
          %v405 = vshrl.u32 %v404, 7
          %v406 = vsub.s32 6, %v405
          %v407 = vrot.slane %v376, %v406
          %v408 = vlaneseq
          %v409 = vshrl.u32 %v408, 7
          %v410 = vsub.s32 7, %v409
          %v411 = vrot.slane %v376, %v410
          %v412 = vlaneseq
          %v413 = vshrl.u32 %v412, 7
          %v414 = vsub.s32 0, %v413
          %v415 = vrot.slane %v377, %v414
          %v416 = vlaneseq
          %v417 = vshrl.u32 %v416, 7
          %v418 = vsub.s32 1, %v417
          %v419 = vrot.slane %v377, %v418
          %v420 = vlaneseq
          %v421 = vshrl.u32 %v420, 7
          %v422 = vsub.s32 2, %v421
          %v423 = vrot.slane %v377, %v422
          %v424 = vlaneseq
          %v425 = vshrl.u32 %v424, 7
          %v426 = vsub.s32 3, %v425
          %v427 = vrot.slane %v377, %v426
          %v428 = vlaneseq
          %v429 = vshrl.u32 %v428, 7
          %v430 = vsub.s32 4, %v429
          %v431 = vrot.slane %v377, %v430
          %v432 = vlaneseq
          %v433 = vshrl.u32 %v432, 7
          %v434 = vsub.s32 5, %v433
          %v435 = vrot.slane %v377, %v434
          %v436 = vlaneseq
          %v437 = vshrl.u32 %v436, 7
          %v438 = vsub.s32 6, %v437
          %v439 = vrot.slane %v377, %v438
          %v440 = vlaneseq
          %v441 = vshrl.u32 %v440, 7
          %v442 = vsub.s32 7, %v441
          %v443 = vrot.slane %v377, %v442
          %v492 = vunpack.c.l.b16 %v344
          %v493 = vunpack.c.h.b16 %v344
          %v494 = vunpack.c.l.b16 %v345
          %v495 = vunpack.c.h.b16 %v345
          %v496 = vunpack.c.l.b16 %v346
          %v497 = vunpack.c.h.b16 %v346
          %v498 = vunpack.c.l.b16 %v347
          %v499 = vunpack.c.h.b16 %v347
          %v500 = vunpack.c.l.b16 %v348
          %v501 = vunpack.c.h.b16 %v348
          %v502 = vunpack.c.l.b16 %v349
          %v503 = vunpack.c.h.b16 %v349
          %v504 = vunpack.c.l.b16 %v350
          %v505 = vunpack.c.h.b16 %v350
          %v506 = vunpack.c.l.b16 %v351
          %v507 = vunpack.c.h.b16 %v351
          %v508 = vunpack.c.l.b16 %v352
          %v509 = vunpack.c.h.b16 %v352
          %v510 = vunpack.c.l.b16 %v353
          %v511 = vunpack.c.h.b16 %v353
          %v512 = vunpack.c.l.b16 %v354
          %v513 = vunpack.c.h.b16 %v354
          %v514 = vunpack.c.l.b16 %v355
          %v515 = vunpack.c.h.b16 %v355
          %v516 = vunpack.c.l.b16 %v356
          %v517 = vunpack.c.h.b16 %v356
          %v518 = vunpack.c.l.b16 %v357
          %v519 = vunpack.c.h.b16 %v357
          %v520 = vunpack.c.l.b16 %v358
          %v521 = vunpack.c.h.b16 %v358
          %v522 = vunpack.c.l.b16 %v359
          %v523 = vunpack.c.h.b16 %v359
          %v524 = vunpack.c.l.b16 %v360
          %v525 = vunpack.c.h.b16 %v360
          %v526 = vunpack.c.l.b16 %v361
          %v527 = vunpack.c.h.b16 %v361
          %v528 = vunpack.c.l.b16 %v362
          %v529 = vunpack.c.h.b16 %v362
          %v530 = vunpack.c.l.b16 %v363
          %v531 = vunpack.c.h.b16 %v363
          %v532 = vunpack.c.l.b16 %v364
          %v533 = vunpack.c.h.b16 %v364
          %v534 = vunpack.c.l.b16 %v365
          %v535 = vunpack.c.h.b16 %v365
          %v536 = vunpack.c.l.b16 %v366
          %v537 = vunpack.c.h.b16 %v366
          %v538 = vunpack.c.l.b16 %v367
          %v539 = vunpack.c.h.b16 %v367
          %v540 = vunpack.c.l.b16 %v368
          %v541 = vunpack.c.h.b16 %v368
          %v542 = vunpack.c.l.b16 %v369
          %v543 = vunpack.c.h.b16 %v369
          %v544 = vunpack.c.l.b16 %v370
          %v545 = vunpack.c.h.b16 %v370
          %v546 = vunpack.c.l.b16 %v371
          %v547 = vunpack.c.h.b16 %v371
          %v548 = vunpack.c.l.b16 %v372
          %v549 = vunpack.c.h.b16 %v372
          %v550 = vunpack.c.l.b16 %v373
          %v551 = vunpack.c.h.b16 %v373
          %v552 = vunpack.c.l.b16 %v374
          %v553 = vunpack.c.h.b16 %v374
          %v554 = vunpack.c.l.b16 %v375
          %v555 = vunpack.c.h.b16 %v375
          %v556 = vpack.c.b16 %v508, %v492
          %v557 = vpack.c.b16 %v509, %v493
          %v558 = vpack.c.b16 %v510, %v494
          %v559 = vpack.c.b16 %v511, %v495
          %v560 = vpack.c.b16 %v512, %v496
          %v561 = vpack.c.b16 %v513, %v497
          %v562 = vpack.c.b16 %v514, %v498
          %v563 = vpack.c.b16 %v515, %v499
          %v564 = vpack.c.b16 %v516, %v500
          %v565 = vpack.c.b16 %v517, %v501
          %v566 = vpack.c.b16 %v518, %v502
          %v567 = vpack.c.b16 %v519, %v503
          %v568 = vpack.c.b16 %v520, %v504
          %v569 = vpack.c.b16 %v521, %v505
          %v570 = vpack.c.b16 %v522, %v506
          %v571 = vpack.c.b16 %v523, %v507
          %v572 = vpack.c.b16 %v540, %v524
          %v573 = vpack.c.b16 %v541, %v525
          %v574 = vpack.c.b16 %v542, %v526
          %v575 = vpack.c.b16 %v543, %v527
          %v576 = vpack.c.b16 %v544, %v528
          %v577 = vpack.c.b16 %v545, %v529
          %v578 = vpack.c.b16 %v546, %v530
          %v579 = vpack.c.b16 %v547, %v531
          %v580 = vpack.c.b16 %v548, %v532
          %v581 = vpack.c.b16 %v549, %v533
          %v582 = vpack.c.b16 %v550, %v534
          %v583 = vpack.c.b16 %v551, %v535
          %v584 = vpack.c.b16 %v552, %v536
          %v585 = vpack.c.b16 %v553, %v537
          %v586 = vpack.c.b16 %v554, %v538
          %v587 = vpack.c.b16 %v555, %v539
          %vm620 = vcmask 261120
          %v622 = vsel %vm620, %v343, 0
          %624 = vmatprep.subr.bf16.mxu0 %v557
          %625 = vmatpush1.bf16.msra.mxu0 %v556
          %626 = vmatprep.subr.bf16.mxu0 %v573
          %627 = vmatpush1.bf16.msra.mxu0 %v572
          %628 = vmatprep.subr.bf16.mxu0 0
          %629 = vmatpush1.bf16.msra.mxu0 0
          %630 = vmatprep.subr.bf16.mxu0 0
          %631 = vmatpush1.bf16.msra.mxu0 0
          %632 = vmatprep.subr.bf16.mxu0 0
          %633 = vmatpush1.bf16.msra.mxu0 0
          %634 = vmatprep.subr.bf16.mxu0 0
          %635 = vmatpush1.bf16.msra.mxu0 0
          %636 = vmatprep.subr.bf16.mxu0 0
          %637 = vmatpush1.bf16.msra.mxu0 0
          %638 = vmatprep.subr.bf16.mxu0 0
          %639 = vmatpush1.bf16.msra.mxu0 0
          %640 = vmatprep.subr.bf16.mxu0 0
          %641 = vmatpush1.bf16.msra.mxu0 0
          %642 = vmatprep.subr.bf16.mxu0 0
          %643 = vmatpush1.bf16.msra.mxu0 0
          %644 = vmatprep.subr.bf16.mxu0 0
          %645 = vmatpush1.bf16.msra.mxu0 0
          %646 = vmatprep.subr.bf16.mxu0 0
          %647 = vmatpush1.bf16.msra.mxu0 0
          %648 = vmatprep.subr.bf16.mxu0 0
          %649 = vmatpush1.bf16.msra.mxu0 0
          %650 = vmatprep.subr.bf16.mxu0 0
          %651 = vmatpush1.bf16.msra.mxu0 0
          %652 = vmatprep.subr.bf16.mxu0 0
          %653 = vmatpush1.bf16.msra.mxu0 0
          %654 = vmatprep.subr.bf16.mxu0 0
          %655 = vmatpush1.bf16.msra.mxu0 0
          %656 = vmatprep.mubr.bf16.mxu0 0
          %657 = vmatmul.mubr.bf16.gmra.mrb[0].mxu0 %v622
          %v658 = vpop.f32.mrb[0].mxu0
          %v659 = vadd.f32 %v383, %v658
          %v660 = vpop.f32.mrb[0].mxu0
          %v661 = vadd.f32 %v387, %v660
          %v662 = vpop.f32.mrb[0].mxu0
          %v663 = vpop.f32.mrb[0].mxu0
          %664 = vdwg.mxu0
          %665 = vmatprep.subr.bf16.mxu0 %v559
          %666 = vmatpush1.bf16.msra.mxu0 %v558
          %667 = vmatprep.subr.bf16.mxu0 %v575
          %668 = vmatpush1.bf16.msra.mxu0 %v574
          %669 = vmatprep.subr.bf16.mxu0 0
          %670 = vmatpush1.bf16.msra.mxu0 0
          %671 = vmatprep.subr.bf16.mxu0 0
          %672 = vmatpush1.bf16.msra.mxu0 0
          %673 = vmatprep.subr.bf16.mxu0 0
          %674 = vmatpush1.bf16.msra.mxu0 0
          %675 = vmatprep.subr.bf16.mxu0 0
          %676 = vmatpush1.bf16.msra.mxu0 0
          %677 = vmatprep.subr.bf16.mxu0 0
          %678 = vmatpush1.bf16.msra.mxu0 0
          %679 = vmatprep.subr.bf16.mxu0 0
          %680 = vmatpush1.bf16.msra.mxu0 0
          %681 = vmatprep.subr.bf16.mxu0 0
          %682 = vmatpush1.bf16.msra.mxu0 0
          %683 = vmatprep.subr.bf16.mxu0 0
          %684 = vmatpush1.bf16.msra.mxu0 0
          %685 = vmatprep.subr.bf16.mxu0 0
          %686 = vmatpush1.bf16.msra.mxu0 0
          %687 = vmatprep.subr.bf16.mxu0 0
          %688 = vmatpush1.bf16.msra.mxu0 0
          %689 = vmatprep.subr.bf16.mxu0 0
          %690 = vmatpush1.bf16.msra.mxu0 0
          %691 = vmatprep.subr.bf16.mxu0 0
          %692 = vmatpush1.bf16.msra.mxu0 0
          %693 = vmatprep.subr.bf16.mxu0 0
          %694 = vmatpush1.bf16.msra.mxu0 0
          %695 = vmatprep.subr.bf16.mxu0 0
          %696 = vmatpush1.bf16.msra.mxu0 0
          %697 = vmatprep.mubr.bf16.mxu0 0
          %698 = vmatmul.mubr.bf16.gmra.mrb[0].mxu0 %v622
          %v699 = vpop.f32.mrb[0].mxu0
          %v700 = vadd.f32 %v391, %v699
          %v701 = vpop.f32.mrb[0].mxu0
          %v702 = vadd.f32 %v395, %v701
          %v703 = vpop.f32.mrb[0].mxu0
          %v704 = vpop.f32.mrb[0].mxu0
          %705 = vdwg.mxu0
          %706 = vmatprep.subr.bf16.mxu0 %v561
          %707 = vmatpush1.bf16.msra.mxu0 %v560
          %708 = vmatprep.subr.bf16.mxu0 %v577
          %709 = vmatpush1.bf16.msra.mxu0 %v576
          %710 = vmatprep.subr.bf16.mxu0 0
          %711 = vmatpush1.bf16.msra.mxu0 0
          %712 = vmatprep.subr.bf16.mxu0 0
          %713 = vmatpush1.bf16.msra.mxu0 0
          %714 = vmatprep.subr.bf16.mxu0 0
          %715 = vmatpush1.bf16.msra.mxu0 0
          %716 = vmatprep.subr.bf16.mxu0 0
          %717 = vmatpush1.bf16.msra.mxu0 0
          %718 = vmatprep.subr.bf16.mxu0 0
          %719 = vmatpush1.bf16.msra.mxu0 0
          %720 = vmatprep.subr.bf16.mxu0 0
          %721 = vmatpush1.bf16.msra.mxu0 0
          %722 = vmatprep.subr.bf16.mxu0 0
          %723 = vmatpush1.bf16.msra.mxu0 0
          %724 = vmatprep.subr.bf16.mxu0 0
          %725 = vmatpush1.bf16.msra.mxu0 0
          %726 = vmatprep.subr.bf16.mxu0 0
          %727 = vmatpush1.bf16.msra.mxu0 0
          %728 = vmatprep.subr.bf16.mxu0 0
          %729 = vmatpush1.bf16.msra.mxu0 0
          %730 = vmatprep.subr.bf16.mxu0 0
          %731 = vmatpush1.bf16.msra.mxu0 0
          %732 = vmatprep.subr.bf16.mxu0 0
          %733 = vmatpush1.bf16.msra.mxu0 0
          %734 = vmatprep.subr.bf16.mxu0 0
          %735 = vmatpush1.bf16.msra.mxu0 0
          %736 = vmatprep.subr.bf16.mxu0 0
          %737 = vmatpush1.bf16.msra.mxu0 0
          %738 = vmatprep.mubr.bf16.mxu0 0
          %739 = vmatmul.mubr.bf16.gmra.mrb[0].mxu0 %v622
          %v740 = vpop.f32.mrb[0].mxu0
          %v741 = vadd.f32 %v399, %v740
          %v742 = vpop.f32.mrb[0].mxu0
          %v743 = vadd.f32 %v403, %v742
          %v744 = vpop.f32.mrb[0].mxu0
          %v745 = vpop.f32.mrb[0].mxu0
          %746 = vdwg.mxu0
          %747 = vmatprep.subr.bf16.mxu0 %v563
          %748 = vmatpush1.bf16.msra.mxu0 %v562
          %749 = vmatprep.subr.bf16.mxu0 %v579
          %750 = vmatpush1.bf16.msra.mxu0 %v578
          %751 = vmatprep.subr.bf16.mxu0 0
          %752 = vmatpush1.bf16.msra.mxu0 0
          %753 = vmatprep.subr.bf16.mxu0 0
          %754 = vmatpush1.bf16.msra.mxu0 0
          %755 = vmatprep.subr.bf16.mxu0 0
          %756 = vmatpush1.bf16.msra.mxu0 0
          %757 = vmatprep.subr.bf16.mxu0 0
          %758 = vmatpush1.bf16.msra.mxu0 0
          %759 = vmatprep.subr.bf16.mxu0 0
          %760 = vmatpush1.bf16.msra.mxu0 0
          %761 = vmatprep.subr.bf16.mxu0 0
          %762 = vmatpush1.bf16.msra.mxu0 0
          %763 = vmatprep.subr.bf16.mxu0 0
          %764 = vmatpush1.bf16.msra.mxu0 0
          %765 = vmatprep.subr.bf16.mxu0 0
          %766 = vmatpush1.bf16.msra.mxu0 0
          %767 = vmatprep.subr.bf16.mxu0 0
          %768 = vmatpush1.bf16.msra.mxu0 0
          %769 = vmatprep.subr.bf16.mxu0 0
          %770 = vmatpush1.bf16.msra.mxu0 0
          %771 = vmatprep.subr.bf16.mxu0 0
          %772 = vmatpush1.bf16.msra.mxu0 0
          %773 = vmatprep.subr.bf16.mxu0 0
          %774 = vmatpush1.bf16.msra.mxu0 0
          %775 = vmatprep.subr.bf16.mxu0 0
          %776 = vmatpush1.bf16.msra.mxu0 0
          %777 = vmatprep.subr.bf16.mxu0 0
          %778 = vmatpush1.bf16.msra.mxu0 0
          %779 = vmatprep.mubr.bf16.mxu0 0
          %780 = vmatmul.mubr.bf16.gmra.mrb[0].mxu0 %v622
          %v781 = vpop.f32.mrb[0].mxu0
          %v782 = vadd.f32 %v407, %v781
          %v783 = vpop.f32.mrb[0].mxu0
          %v784 = vadd.f32 %v411, %v783
          %v785 = vpop.f32.mrb[0].mxu0
          %v786 = vpop.f32.mrb[0].mxu0
          %787 = vdwg.mxu0
          %788 = vmatprep.subr.bf16.mxu0 %v565
          %789 = vmatpush1.bf16.msra.mxu0 %v564
          %790 = vmatprep.subr.bf16.mxu0 %v581
          %791 = vmatpush1.bf16.msra.mxu0 %v580
          %792 = vmatprep.subr.bf16.mxu0 0
          %793 = vmatpush1.bf16.msra.mxu0 0
          %794 = vmatprep.subr.bf16.mxu0 0
          %795 = vmatpush1.bf16.msra.mxu0 0
          %796 = vmatprep.subr.bf16.mxu0 0
          %797 = vmatpush1.bf16.msra.mxu0 0
          %798 = vmatprep.subr.bf16.mxu0 0
          %799 = vmatpush1.bf16.msra.mxu0 0
          %800 = vmatprep.subr.bf16.mxu0 0
          %801 = vmatpush1.bf16.msra.mxu0 0
          %802 = vmatprep.subr.bf16.mxu0 0
          %803 = vmatpush1.bf16.msra.mxu0 0
          %804 = vmatprep.subr.bf16.mxu0 0
          %805 = vmatpush1.bf16.msra.mxu0 0
          %806 = vmatprep.subr.bf16.mxu0 0
          %807 = vmatpush1.bf16.msra.mxu0 0
          %808 = vmatprep.subr.bf16.mxu0 0
          %809 = vmatpush1.bf16.msra.mxu0 0
          %810 = vmatprep.subr.bf16.mxu0 0
          %811 = vmatpush1.bf16.msra.mxu0 0
          %812 = vmatprep.subr.bf16.mxu0 0
          %813 = vmatpush1.bf16.msra.mxu0 0
          %814 = vmatprep.subr.bf16.mxu0 0
          %815 = vmatpush1.bf16.msra.mxu0 0
          %816 = vmatprep.subr.bf16.mxu0 0
          %817 = vmatpush1.bf16.msra.mxu0 0
          %818 = vmatprep.subr.bf16.mxu0 0
          %819 = vmatpush1.bf16.msra.mxu0 0
          %820 = vmatprep.mubr.bf16.mxu0 0
          %821 = vmatmul.mubr.bf16.gmra.mrb[0].mxu0 %v622
          %v822 = vpop.f32.mrb[0].mxu0
          %v823 = vadd.f32 %v415, %v822
          %v824 = vpop.f32.mrb[0].mxu0
          %v825 = vadd.f32 %v419, %v824
          %v826 = vpop.f32.mrb[0].mxu0
          %v827 = vpop.f32.mrb[0].mxu0
          %828 = vdwg.mxu0
          %829 = vmatprep.subr.bf16.mxu0 %v567
          %830 = vmatpush1.bf16.msra.mxu0 %v566
          %831 = vmatprep.subr.bf16.mxu0 %v583
          %832 = vmatpush1.bf16.msra.mxu0 %v582
          %833 = vmatprep.subr.bf16.mxu0 0
          %834 = vmatpush1.bf16.msra.mxu0 0
          %835 = vmatprep.subr.bf16.mxu0 0
          %836 = vmatpush1.bf16.msra.mxu0 0
          %837 = vmatprep.subr.bf16.mxu0 0
          %838 = vmatpush1.bf16.msra.mxu0 0
          %839 = vmatprep.subr.bf16.mxu0 0
          %840 = vmatpush1.bf16.msra.mxu0 0
          %841 = vmatprep.subr.bf16.mxu0 0
          %842 = vmatpush1.bf16.msra.mxu0 0
          %843 = vmatprep.subr.bf16.mxu0 0
          %844 = vmatpush1.bf16.msra.mxu0 0
          %845 = vmatprep.subr.bf16.mxu0 0
          %846 = vmatpush1.bf16.msra.mxu0 0
          %847 = vmatprep.subr.bf16.mxu0 0
          %848 = vmatpush1.bf16.msra.mxu0 0
          %849 = vmatprep.subr.bf16.mxu0 0
          %850 = vmatpush1.bf16.msra.mxu0 0
          %851 = vmatprep.subr.bf16.mxu0 0
          %852 = vmatpush1.bf16.msra.mxu0 0
          %853 = vmatprep.subr.bf16.mxu0 0
          %854 = vmatpush1.bf16.msra.mxu0 0
          %855 = vmatprep.subr.bf16.mxu0 0
          %856 = vmatpush1.bf16.msra.mxu0 0
          %857 = vmatprep.subr.bf16.mxu0 0
          %858 = vmatpush1.bf16.msra.mxu0 0
          %859 = vmatprep.subr.bf16.mxu0 0
          %860 = vmatpush1.bf16.msra.mxu0 0
          %861 = vmatprep.mubr.bf16.mxu0 0
          %862 = vmatmul.mubr.bf16.gmra.mrb[0].mxu0 %v622
          %v863 = vpop.f32.mrb[0].mxu0
          %v864 = vadd.f32 %v423, %v863
          %v865 = vpop.f32.mrb[0].mxu0
          %v866 = vadd.f32 %v427, %v865
          %v867 = vpop.f32.mrb[0].mxu0
          %v868 = vpop.f32.mrb[0].mxu0
          %869 = vdwg.mxu0
          %870 = vmatprep.subr.bf16.mxu0 %v569
          %871 = vmatpush1.bf16.msra.mxu0 %v568
          %872 = vmatprep.subr.bf16.mxu0 %v585
          %873 = vmatpush1.bf16.msra.mxu0 %v584
          %874 = vmatprep.subr.bf16.mxu0 0
          %875 = vmatpush1.bf16.msra.mxu0 0
          %876 = vmatprep.subr.bf16.mxu0 0
          %877 = vmatpush1.bf16.msra.mxu0 0
          %878 = vmatprep.subr.bf16.mxu0 0
          %879 = vmatpush1.bf16.msra.mxu0 0
          %880 = vmatprep.subr.bf16.mxu0 0
          %881 = vmatpush1.bf16.msra.mxu0 0
          %882 = vmatprep.subr.bf16.mxu0 0
          %883 = vmatpush1.bf16.msra.mxu0 0
          %884 = vmatprep.subr.bf16.mxu0 0
          %885 = vmatpush1.bf16.msra.mxu0 0
          %886 = vmatprep.subr.bf16.mxu0 0
          %887 = vmatpush1.bf16.msra.mxu0 0
          %888 = vmatprep.subr.bf16.mxu0 0
          %889 = vmatpush1.bf16.msra.mxu0 0
          %890 = vmatprep.subr.bf16.mxu0 0
          %891 = vmatpush1.bf16.msra.mxu0 0
          %892 = vmatprep.subr.bf16.mxu0 0
          %893 = vmatpush1.bf16.msra.mxu0 0
          %894 = vmatprep.subr.bf16.mxu0 0
          %895 = vmatpush1.bf16.msra.mxu0 0
          %896 = vmatprep.subr.bf16.mxu0 0
          %897 = vmatpush1.bf16.msra.mxu0 0
          %898 = vmatprep.subr.bf16.mxu0 0
          %899 = vmatpush1.bf16.msra.mxu0 0
          %900 = vmatprep.subr.bf16.mxu0 0
          %901 = vmatpush1.bf16.msra.mxu0 0
          %902 = vmatprep.mubr.bf16.mxu0 0
          %903 = vmatmul.mubr.bf16.gmra.mrb[0].mxu0 %v622
          %v904 = vpop.f32.mrb[0].mxu0
          %v905 = vadd.f32 %v431, %v904
          %v906 = vpop.f32.mrb[0].mxu0
          %v907 = vadd.f32 %v435, %v906
          %v908 = vpop.f32.mrb[0].mxu0
          %v909 = vpop.f32.mrb[0].mxu0
          %910 = vdwg.mxu0
          %911 = vmatprep.subr.bf16.mxu0 %v571
          %912 = vmatpush1.bf16.msra.mxu0 %v570
          %913 = vmatprep.subr.bf16.mxu0 %v587
          %914 = vmatpush1.bf16.msra.mxu0 %v586
          %915 = vmatprep.subr.bf16.mxu0 0
          %916 = vmatpush1.bf16.msra.mxu0 0
          %917 = vmatprep.subr.bf16.mxu0 0
          %918 = vmatpush1.bf16.msra.mxu0 0
          %919 = vmatprep.subr.bf16.mxu0 0
          %920 = vmatpush1.bf16.msra.mxu0 0
          %921 = vmatprep.subr.bf16.mxu0 0
          %922 = vmatpush1.bf16.msra.mxu0 0
          %923 = vmatprep.subr.bf16.mxu0 0
          %924 = vmatpush1.bf16.msra.mxu0 0
          %925 = vmatprep.subr.bf16.mxu0 0
          %926 = vmatpush1.bf16.msra.mxu0 0
          %927 = vmatprep.subr.bf16.mxu0 0
          %928 = vmatpush1.bf16.msra.mxu0 0
          %929 = vmatprep.subr.bf16.mxu0 0
          %930 = vmatpush1.bf16.msra.mxu0 0
          %931 = vmatprep.subr.bf16.mxu0 0
          %932 = vmatpush1.bf16.msra.mxu0 0
          %933 = vmatprep.subr.bf16.mxu0 0
          %934 = vmatpush1.bf16.msra.mxu0 0
          %935 = vmatprep.subr.bf16.mxu0 0
          %936 = vmatpush1.bf16.msra.mxu0 0
          %937 = vmatprep.subr.bf16.mxu0 0
          %938 = vmatpush1.bf16.msra.mxu0 0
          %939 = vmatprep.subr.bf16.mxu0 0
          %940 = vmatpush1.bf16.msra.mxu0 0
          %941 = vmatprep.subr.bf16.mxu0 0
          %942 = vmatpush1.bf16.msra.mxu0 0
          %943 = vmatprep.mubr.bf16.mxu0 0
          %944 = vmatmul.mubr.bf16.gmra.mrb[0].mxu0 %v622
          %v945 = vpop.f32.mrb[0].mxu0
          %v946 = vadd.f32 %v439, %v945
          %v947 = vpop.f32.mrb[0].mxu0
          %v948 = vadd.f32 %v443, %v947
          %v949 = vpop.f32.mrb[0].mxu0
          %v950 = vpop.f32.mrb[0].mxu0
          %951 = vdwg.mxu0
          %v952 = vmax.f32 %v659, 0.0
          %v953 = vmax.f32 %v661, 0.0
          %v954 = vmax.f32 %v700, 0.0
          %v955 = vmax.f32 %v702, 0.0
          %v956 = vmax.f32 %v741, 0.0
          %v957 = vmax.f32 %v743, 0.0
          %v958 = vmax.f32 %v782, 0.0
          %v959 = vmax.f32 %v784, 0.0
          %v960 = vmax.f32 %v823, 0.0
          %v961 = vmax.f32 %v825, 0.0
          %v962 = vmax.f32 %v864, 0.0
          %v963 = vmax.f32 %v866, 0.0
          %v964 = vmax.f32 %v905, 0.0
          %v965 = vmax.f32 %v907, 0.0
          %v966 = vmax.f32 %v946, 0.0
          %v967 = vmax.f32 %v948, 0.0
          %v968 = vpack.c.bf16 %v952, %v952
          %v969 = vpack.c.bf16 %v953, %v953
          %v970 = vpack.c.bf16 %v954, %v954
          %v971 = vpack.c.bf16 %v955, %v955
          %v972 = vpack.c.bf16 %v956, %v956
          %v973 = vpack.c.bf16 %v957, %v957
          %v974 = vpack.c.bf16 %v958, %v958
          %v975 = vpack.c.bf16 %v959, %v959
          %v976 = vpack.c.bf16 %v960, %v960
          %v977 = vpack.c.bf16 %v961, %v961
          %v978 = vpack.c.bf16 %v962, %v962
          %v979 = vpack.c.bf16 %v963, %v963
          %v980 = vpack.c.bf16 %v964, %v964
          %v981 = vpack.c.bf16 %v965, %v965
          %v982 = vpack.c.bf16 %v966, %v966
          %v983 = vpack.c.bf16 %v967, %v967
          %v1000 = vunpack.c.l.b16 %v968
          %v1001 = vunpack.c.l.b16 %v969
          %v1002 = vunpack.c.l.b16 %v970
          %v1003 = vunpack.c.l.b16 %v971
          %v1004 = vunpack.c.l.b16 %v972
          %v1005 = vunpack.c.l.b16 %v973
          %v1006 = vunpack.c.l.b16 %v974
          %v1007 = vunpack.c.l.b16 %v975
          %v1008 = vunpack.c.l.b16 %v976
          %v1009 = vunpack.c.l.b16 %v977
          %v1010 = vunpack.c.l.b16 %v978
          %v1011 = vunpack.c.l.b16 %v979
          %v1012 = vunpack.c.l.b16 %v980
          %v1013 = vunpack.c.l.b16 %v981
          %v1014 = vunpack.c.l.b16 %v982
          %v1015 = vunpack.c.l.b16 %v983
          %v1016 = vpack.c.b16 %v1001, %v1000
          %v1017 = vpack.c.b16 %v1003, %v1002
          %v1018 = vpack.c.b16 %v1005, %v1004
          %v1019 = vpack.c.b16 %v1007, %v1006
          %v1020 = vpack.c.b16 %v1009, %v1008
          %v1021 = vpack.c.b16 %v1011, %v1010
          %v1022 = vpack.c.b16 %v1013, %v1012
          %v1023 = vpack.c.b16 %v1015, %v1014
          %1032 = vst [vmem:[#allocation2] sm:$0xff] %v1016
          %1033 = vst [vmem:[#allocation2 + $0x8] sm:$0xff] %v1017
          %1034 = vst [vmem:[#allocation2 + $0x10] sm:$0xff] %v1018
          %1035 = vst [vmem:[#allocation2 + $0x18] sm:$0xff] %v1019
          %1036 = vst [vmem:[#allocation2 + $0x20] sm:$0xff] %v1020
          %1037 = vst [vmem:[#allocation2 + $0x28] sm:$0xff] %v1021
          %1038 = vst [vmem:[#allocation2 + $0x30] sm:$0xff] %v1022
          %1039 = vst [vmem:[#allocation2 + $0x38] sm:$0xff] %v1023
          %1040 = vst [vmem:[#allocation3] sm:$0xff] 0.0
          %1041 = vst [vmem:[#allocation3 + $0x8] sm:$0xff] 0.0
          %1042 = vst [vmem:[#allocation3 + $0x10] sm:$0xff] 0.0
          %1043 = vst [vmem:[#allocation3 + $0x18] sm:$0xff] 0.0
          %1044 = vst [vmem:[#allocation3 + $0x20] sm:$0xff] 0.0
          %1045 = vst [vmem:[#allocation3 + $0x28] sm:$0xff] 0.0
          %1046 = vst [vmem:[#allocation3 + $0x30] sm:$0xff] 0.0
          %1047 = vst [vmem:[#allocation3 + $0x38] sm:$0xff] 0.0
          %1048 = vst [vmem:[#allocation3 + $0x40] sm:$0xff] 0.0
          %1049 = vst [vmem:[#allocation3 + $0x48] sm:$0xff] 0.0
          %1050 = vst [vmem:[#allocation3 + $0x50] sm:$0xff] 0.0
          %1051 = vst [vmem:[#allocation3 + $0x58] sm:$0xff] 0.0
          %1052 = vst [vmem:[#allocation3 + $0x60] sm:$0xff] 0.0
          %1053 = vst [vmem:[#allocation3 + $0x68] sm:$0xff] 0.0
          %1054 = vst [vmem:[#allocation3 + $0x70] sm:$0xff] 0.0
          %1055 = vst [vmem:[#allocation3 + $0x78] sm:$0xff] 0.0
        $region72: #{soft_q_forward.1} parent=47 // pred_fallthru
          _
        %s1056 = smul.u32 %s23, 512
        %v1057 = vld [vmem:[#allocation3] sm:$0xff]
        %v1058 = vld [vmem:[#allocation3 + $0x8] sm:$0xff]
        %v1059 = vld [vmem:[#allocation3 + $0x10] sm:$0xff]
        %v1060 = vld [vmem:[#allocation3 + $0x18] sm:$0xff]
        %v1061 = vld [vmem:[#allocation3 + $0x20] sm:$0xff]
        %v1062 = vld [vmem:[#allocation3 + $0x28] sm:$0xff]
        %v1063 = vld [vmem:[#allocation3 + $0x30] sm:$0xff]
        %v1064 = vld [vmem:[#allocation3 + $0x38] sm:$0xff]
        %v1065 = vld [vmem:[#allocation3 + $0x40] sm:$0xff]
        %v1066 = vld [vmem:[#allocation3 + $0x48] sm:$0xff]
        %v1067 = vld [vmem:[#allocation3 + $0x50] sm:$0xff]
        %v1068 = vld [vmem:[#allocation3 + $0x58] sm:$0xff]
        %v1069 = vld [vmem:[#allocation3 + $0x60] sm:$0xff]
        %v1070 = vld [vmem:[#allocation3 + $0x68] sm:$0xff]
        %v1071 = vld [vmem:[#allocation3 + $0x70] sm:$0xff]
        %v1072 = vld [vmem:[#allocation3 + $0x78] sm:$0xff]
        %s1073 = sshra.s32 %s1056, 7
        %s1074 = sand.u32 %s1056, 127
        %s1075 = smul.addr %s1073, 4
        %s1076 = scalar_lea.vmem [#allocation2], %s1075
        %v1077 = vld [vmem:[%s1076] sm:$0xff]
        %v1078 = vld [vmem:[%s1076 + $0x8] sm:$0xff]
        %v1079 = vld [vmem:[%s303] sm:$0xff]
        %v1080 = vld [vmem:[%s303 + $0x8] sm:$0xff]
        %v1081 = vld [vmem:[%s303 + $0x10] sm:$0xff]
        %v1082 = vld [vmem:[%s303 + $0x18] sm:$0xff]
        %v1083 = vld [vmem:[%s303 + $0x20] sm:$0xff]
        %v1084 = vld [vmem:[%s303 + $0x28] sm:$0xff]
        %v1085 = vld [vmem:[%s303 + $0x30] sm:$0xff]
        %v1086 = vld [vmem:[%s303 + $0x38] sm:$0xff]
        %v1087 = vld [vmem:[%s303 + $0x40] sm:$0xff]
        %v1088 = vld [vmem:[%s303 + $0x48] sm:$0xff]
        %v1089 = vld [vmem:[%s303 + $0x50] sm:$0xff]
        %v1090 = vld [vmem:[%s303 + $0x58] sm:$0xff]
        %v1091 = vld [vmem:[%s303 + $0x60] sm:$0xff]
        %v1092 = vld [vmem:[%s303 + $0x68] sm:$0xff]
        %v1093 = vld [vmem:[%s303 + $0x70] sm:$0xff]
        %v1094 = vld [vmem:[%s303 + $0x78] sm:$0xff]
        %v1095 = vld [vmem:[%s303 + $0x80] sm:$0xff]
        %v1096 = vld [vmem:[%s303 + $0x88] sm:$0xff]
        %v1097 = vld [vmem:[%s303 + $0x90] sm:$0xff]
        %v1098 = vld [vmem:[%s303 + $0x98] sm:$0xff]
        %v1099 = vld [vmem:[%s303 + $0xa0] sm:$0xff]
        %v1100 = vld [vmem:[%s303 + $0xa8] sm:$0xff]
        %v1101 = vld [vmem:[%s303 + $0xb0] sm:$0xff]
        %v1102 = vld [vmem:[%s303 + $0xb8] sm:$0xff]
        %v1103 = vld [vmem:[%s303 + $0xc0] sm:$0xff]
        %v1104 = vld [vmem:[%s303 + $0xc8] sm:$0xff]
        %v1105 = vld [vmem:[%s303 + $0xd0] sm:$0xff]
        %v1106 = vld [vmem:[%s303 + $0xd8] sm:$0xff]
        %v1107 = vld [vmem:[%s303 + $0xe0] sm:$0xff]
        %v1108 = vld [vmem:[%s303 + $0xe8] sm:$0xff]
        %v1109 = vld [vmem:[%s303 + $0xf0] sm:$0xff]
        %v1110 = vld [vmem:[%s303 + $0xf8] sm:$0xff]
        %v1111 = vld [vmem:[%s303 + $0x100] sm:$0xff]
        %v1112 = vld [vmem:[%s303 + $0x108] sm:$0xff]
        %v1113 = vld [vmem:[%s303 + $0x110] sm:$0xff]
        %v1114 = vld [vmem:[%s303 + $0x118] sm:$0xff]
        %v1115 = vld [vmem:[%s303 + $0x120] sm:$0xff]
        %v1116 = vld [vmem:[%s303 + $0x128] sm:$0xff]
        %v1117 = vld [vmem:[%s303 + $0x130] sm:$0xff]
        %v1118 = vld [vmem:[%s303 + $0x138] sm:$0xff]
        %v1119 = vld [vmem:[%s303 + $0x140] sm:$0xff]
        %v1120 = vld [vmem:[%s303 + $0x148] sm:$0xff]
        %v1121 = vld [vmem:[%s303 + $0x150] sm:$0xff]
        %v1122 = vld [vmem:[%s303 + $0x158] sm:$0xff]
        %v1123 = vld [vmem:[%s303 + $0x160] sm:$0xff]
        %v1124 = vld [vmem:[%s303 + $0x168] sm:$0xff]
        %v1125 = vld [vmem:[%s303 + $0x170] sm:$0xff]
        %v1126 = vld [vmem:[%s303 + $0x178] sm:$0xff]
        %v1127 = vld [vmem:[%s303 + $0x180] sm:$0xff]
        %v1128 = vld [vmem:[%s303 + $0x188] sm:$0xff]
        %v1129 = vld [vmem:[%s303 + $0x190] sm:$0xff]
        %v1130 = vld [vmem:[%s303 + $0x198] sm:$0xff]
        %v1131 = vld [vmem:[%s303 + $0x1a0] sm:$0xff]
        %v1132 = vld [vmem:[%s303 + $0x1a8] sm:$0xff]
        %v1133 = vld [vmem:[%s303 + $0x1b0] sm:$0xff]
        %v1134 = vld [vmem:[%s303 + $0x1b8] sm:$0xff]
        %v1135 = vld [vmem:[%s303 + $0x1c0] sm:$0xff]
        %v1136 = vld [vmem:[%s303 + $0x1c8] sm:$0xff]
        %v1137 = vld [vmem:[%s303 + $0x1d0] sm:$0xff]
        %v1138 = vld [vmem:[%s303 + $0x1d8] sm:$0xff]
        %v1139 = vld [vmem:[%s303 + $0x1e0] sm:$0xff]
        %v1140 = vld [vmem:[%s303 + $0x1e8] sm:$0xff]
        %v1141 = vld [vmem:[%s303 + $0x1f0] sm:$0xff]
        %v1142 = vld [vmem:[%s303 + $0x1f8] sm:$0xff]
        %v1143 = vld [vmem:[%s303 + $0x200] sm:$0xff]
        %v1144 = vld [vmem:[%s303 + $0x208] sm:$0xff]
        %v1145 = vld [vmem:[%s303 + $0x210] sm:$0xff]
        %v1146 = vld [vmem:[%s303 + $0x218] sm:$0xff]
        %v1147 = vld [vmem:[%s303 + $0x220] sm:$0xff]
        %v1148 = vld [vmem:[%s303 + $0x228] sm:$0xff]
        %v1149 = vld [vmem:[%s303 + $0x230] sm:$0xff]
        %v1150 = vld [vmem:[%s303 + $0x238] sm:$0xff]
        %v1151 = vld [vmem:[%s303 + $0x240] sm:$0xff]
        %v1152 = vld [vmem:[%s303 + $0x248] sm:$0xff]
        %v1153 = vld [vmem:[%s303 + $0x250] sm:$0xff]
        %v1154 = vld [vmem:[%s303 + $0x258] sm:$0xff]
        %v1155 = vld [vmem:[%s303 + $0x260] sm:$0xff]
        %v1156 = vld [vmem:[%s303 + $0x268] sm:$0xff]
        %v1157 = vld [vmem:[%s303 + $0x270] sm:$0xff]
        %v1158 = vld [vmem:[%s303 + $0x278] sm:$0xff]
        %v1159 = vld [vmem:[%s303 + $0x280] sm:$0xff]
        %v1160 = vld [vmem:[%s303 + $0x288] sm:$0xff]
        %v1161 = vld [vmem:[%s303 + $0x290] sm:$0xff]
        %v1162 = vld [vmem:[%s303 + $0x298] sm:$0xff]
        %v1163 = vld [vmem:[%s303 + $0x2a0] sm:$0xff]
        %v1164 = vld [vmem:[%s303 + $0x2a8] sm:$0xff]
        %v1165 = vld [vmem:[%s303 + $0x2b0] sm:$0xff]
        %v1166 = vld [vmem:[%s303 + $0x2b8] sm:$0xff]
        %v1167 = vld [vmem:[%s303 + $0x2c0] sm:$0xff]
        %v1168 = vld [vmem:[%s303 + $0x2c8] sm:$0xff]
        %v1169 = vld [vmem:[%s303 + $0x2d0] sm:$0xff]
        %v1170 = vld [vmem:[%s303 + $0x2d8] sm:$0xff]
        %v1171 = vld [vmem:[%s303 + $0x2e0] sm:$0xff]
        %v1172 = vld [vmem:[%s303 + $0x2e8] sm:$0xff]
        %v1173 = vld [vmem:[%s303 + $0x2f0] sm:$0xff]
        %v1174 = vld [vmem:[%s303 + $0x2f8] sm:$0xff]
        %v1175 = vld [vmem:[%s303 + $0x300] sm:$0xff]
        %v1176 = vld [vmem:[%s303 + $0x308] sm:$0xff]
        %v1177 = vld [vmem:[%s303 + $0x310] sm:$0xff]
        %v1178 = vld [vmem:[%s303 + $0x318] sm:$0xff]
        %v1179 = vld [vmem:[%s303 + $0x320] sm:$0xff]
        %v1180 = vld [vmem:[%s303 + $0x328] sm:$0xff]
        %v1181 = vld [vmem:[%s303 + $0x330] sm:$0xff]
        %v1182 = vld [vmem:[%s303 + $0x338] sm:$0xff]
        %v1183 = vld [vmem:[%s303 + $0x340] sm:$0xff]
        %v1184 = vld [vmem:[%s303 + $0x348] sm:$0xff]
        %v1185 = vld [vmem:[%s303 + $0x350] sm:$0xff]
        %v1186 = vld [vmem:[%s303 + $0x358] sm:$0xff]
        %v1187 = vld [vmem:[%s303 + $0x360] sm:$0xff]
        %v1188 = vld [vmem:[%s303 + $0x368] sm:$0xff]
        %v1189 = vld [vmem:[%s303 + $0x370] sm:$0xff]
        %v1190 = vld [vmem:[%s303 + $0x378] sm:$0xff]
        %v1191 = vld [vmem:[%s303 + $0x380] sm:$0xff]
        %v1192 = vld [vmem:[%s303 + $0x388] sm:$0xff]
        %v1193 = vld [vmem:[%s303 + $0x390] sm:$0xff]
        %v1194 = vld [vmem:[%s303 + $0x398] sm:$0xff]
        %v1195 = vld [vmem:[%s303 + $0x3a0] sm:$0xff]
        %v1196 = vld [vmem:[%s303 + $0x3a8] sm:$0xff]
        %v1197 = vld [vmem:[%s303 + $0x3b0] sm:$0xff]
        %v1198 = vld [vmem:[%s303 + $0x3b8] sm:$0xff]
        %v1199 = vld [vmem:[%s303 + $0x3c0] sm:$0xff]
        %v1200 = vld [vmem:[%s303 + $0x3c8] sm:$0xff]
        %v1201 = vld [vmem:[%s303 + $0x3d0] sm:$0xff]
        %v1202 = vld [vmem:[%s303 + $0x3d8] sm:$0xff]
        %v1203 = vld [vmem:[%s303 + $0x3e0] sm:$0xff]
        %v1204 = vld [vmem:[%s303 + $0x3e8] sm:$0xff]
        %v1205 = vld [vmem:[%s303 + $0x3f0] sm:$0xff]
        %v1206 = vld [vmem:[%s303 + $0x3f8] sm:$0xff]
        %v1207 = vld [vmem:[%s303 + $0x400] sm:$0xff]
        %v1208 = vld [vmem:[%s303 + $0x408] sm:$0xff]
        %v1209 = vld [vmem:[%s303 + $0x410] sm:$0xff]
        %v1210 = vld [vmem:[%s303 + $0x418] sm:$0xff]
        %v1211 = vld [vmem:[%s303 + $0x420] sm:$0xff]
        %v1212 = vld [vmem:[%s303 + $0x428] sm:$0xff]
        %v1213 = vld [vmem:[%s303 + $0x430] sm:$0xff]
        %v1214 = vld [vmem:[%s303 + $0x438] sm:$0xff]
        %v1215 = vld [vmem:[%s303 + $0x440] sm:$0xff]
        %v1216 = vld [vmem:[%s303 + $0x448] sm:$0xff]
        %v1217 = vld [vmem:[%s303 + $0x450] sm:$0xff]
        %v1218 = vld [vmem:[%s303 + $0x458] sm:$0xff]
        %v1219 = vld [vmem:[%s303 + $0x460] sm:$0xff]
        %v1220 = vld [vmem:[%s303 + $0x468] sm:$0xff]
        %v1221 = vld [vmem:[%s303 + $0x470] sm:$0xff]
        %v1222 = vld [vmem:[%s303 + $0x478] sm:$0xff]
        %v1223 = vld [vmem:[%s303 + $0x480] sm:$0xff]
        %v1224 = vld [vmem:[%s303 + $0x488] sm:$0xff]
        %v1225 = vld [vmem:[%s303 + $0x490] sm:$0xff]
        %v1226 = vld [vmem:[%s303 + $0x498] sm:$0xff]
        %v1227 = vld [vmem:[%s303 + $0x4a0] sm:$0xff]
        %v1228 = vld [vmem:[%s303 + $0x4a8] sm:$0xff]
        %v1229 = vld [vmem:[%s303 + $0x4b0] sm:$0xff]
        %v1230 = vld [vmem:[%s303 + $0x4b8] sm:$0xff]
        %v1231 = vld [vmem:[%s303 + $0x4c0] sm:$0xff]
        %v1232 = vld [vmem:[%s303 + $0x4c8] sm:$0xff]
        %v1233 = vld [vmem:[%s303 + $0x4d0] sm:$0xff]
        %v1234 = vld [vmem:[%s303 + $0x4d8] sm:$0xff]
        %v1235 = vld [vmem:[%s303 + $0x4e0] sm:$0xff]
        %v1236 = vld [vmem:[%s303 + $0x4e8] sm:$0xff]
        %v1237 = vld [vmem:[%s303 + $0x4f0] sm:$0xff]
        %v1238 = vld [vmem:[%s303 + $0x4f8] sm:$0xff]
        %v1239 = vld [vmem:[%s303 + $0x500] sm:$0xff]
        %v1240 = vld [vmem:[%s303 + $0x508] sm:$0xff]
        %v1241 = vld [vmem:[%s303 + $0x510] sm:$0xff]
        %v1242 = vld [vmem:[%s303 + $0x518] sm:$0xff]
        %v1243 = vld [vmem:[%s303 + $0x520] sm:$0xff]
        %v1244 = vld [vmem:[%s303 + $0x528] sm:$0xff]
        %v1245 = vld [vmem:[%s303 + $0x530] sm:$0xff]
        %v1246 = vld [vmem:[%s303 + $0x538] sm:$0xff]
        %v1247 = vld [vmem:[%s303 + $0x540] sm:$0xff]
        %v1248 = vld [vmem:[%s303 + $0x548] sm:$0xff]
        %v1249 = vld [vmem:[%s303 + $0x550] sm:$0xff]
        %v1250 = vld [vmem:[%s303 + $0x558] sm:$0xff]
        %v1251 = vld [vmem:[%s303 + $0x560] sm:$0xff]
        %v1252 = vld [vmem:[%s303 + $0x568] sm:$0xff]
        %v1253 = vld [vmem:[%s303 + $0x570] sm:$0xff]
        %v1254 = vld [vmem:[%s303 + $0x578] sm:$0xff]
        %v1255 = vld [vmem:[%s303 + $0x580] sm:$0xff]
        %v1256 = vld [vmem:[%s303 + $0x588] sm:$0xff]
        %v1257 = vld [vmem:[%s303 + $0x590] sm:$0xff]
        %v1258 = vld [vmem:[%s303 + $0x598] sm:$0xff]
        %v1259 = vld [vmem:[%s303 + $0x5a0] sm:$0xff]
        %v1260 = vld [vmem:[%s303 + $0x5a8] sm:$0xff]
        %v1261 = vld [vmem:[%s303 + $0x5b0] sm:$0xff]
        %v1262 = vld [vmem:[%s303 + $0x5b8] sm:$0xff]
        %v1263 = vld [vmem:[%s303 + $0x5c0] sm:$0xff]
        %v1264 = vld [vmem:[%s303 + $0x5c8] sm:$0xff]
        %v1265 = vld [vmem:[%s303 + $0x5d0] sm:$0xff]
        %v1266 = vld [vmem:[%s303 + $0x5d8] sm:$0xff]
        %v1267 = vld [vmem:[%s303 + $0x5e0] sm:$0xff]
        %v1268 = vld [vmem:[%s303 + $0x5e8] sm:$0xff]
        %v1269 = vld [vmem:[%s303 + $0x5f0] sm:$0xff]
        %v1270 = vld [vmem:[%s303 + $0x5f8] sm:$0xff]
        %v1271 = vld [vmem:[%s303 + $0x600] sm:$0xff]
        %v1272 = vld [vmem:[%s303 + $0x608] sm:$0xff]
        %v1273 = vld [vmem:[%s303 + $0x610] sm:$0xff]
        %v1274 = vld [vmem:[%s303 + $0x618] sm:$0xff]
        %v1275 = vld [vmem:[%s303 + $0x620] sm:$0xff]
        %v1276 = vld [vmem:[%s303 + $0x628] sm:$0xff]
        %v1277 = vld [vmem:[%s303 + $0x630] sm:$0xff]
        %v1278 = vld [vmem:[%s303 + $0x638] sm:$0xff]
        %v1279 = vld [vmem:[%s303 + $0x640] sm:$0xff]
        %v1280 = vld [vmem:[%s303 + $0x648] sm:$0xff]
        %v1281 = vld [vmem:[%s303 + $0x650] sm:$0xff]
        %v1282 = vld [vmem:[%s303 + $0x658] sm:$0xff]
        %v1283 = vld [vmem:[%s303 + $0x660] sm:$0xff]
        %v1284 = vld [vmem:[%s303 + $0x668] sm:$0xff]
        %v1285 = vld [vmem:[%s303 + $0x670] sm:$0xff]
        %v1286 = vld [vmem:[%s303 + $0x678] sm:$0xff]
        %v1287 = vld [vmem:[%s303 + $0x680] sm:$0xff]
        %v1288 = vld [vmem:[%s303 + $0x688] sm:$0xff]
        %v1289 = vld [vmem:[%s303 + $0x690] sm:$0xff]
        %v1290 = vld [vmem:[%s303 + $0x698] sm:$0xff]
        %v1291 = vld [vmem:[%s303 + $0x6a0] sm:$0xff]
        %v1292 = vld [vmem:[%s303 + $0x6a8] sm:$0xff]
        %v1293 = vld [vmem:[%s303 + $0x6b0] sm:$0xff]
        %v1294 = vld [vmem:[%s303 + $0x6b8] sm:$0xff]
        %v1295 = vld [vmem:[%s303 + $0x6c0] sm:$0xff]
        %v1296 = vld [vmem:[%s303 + $0x6c8] sm:$0xff]
        %v1297 = vld [vmem:[%s303 + $0x6d0] sm:$0xff]
        %v1298 = vld [vmem:[%s303 + $0x6d8] sm:$0xff]
        %v1299 = vld [vmem:[%s303 + $0x6e0] sm:$0xff]
        %v1300 = vld [vmem:[%s303 + $0x6e8] sm:$0xff]
        %v1301 = vld [vmem:[%s303 + $0x6f0] sm:$0xff]
        %v1302 = vld [vmem:[%s303 + $0x6f8] sm:$0xff]
        %v1303 = vld [vmem:[%s303 + $0x700] sm:$0xff]
        %v1304 = vld [vmem:[%s303 + $0x708] sm:$0xff]
        %v1305 = vld [vmem:[%s303 + $0x710] sm:$0xff]
        %v1306 = vld [vmem:[%s303 + $0x718] sm:$0xff]
        %v1307 = vld [vmem:[%s303 + $0x720] sm:$0xff]
        %v1308 = vld [vmem:[%s303 + $0x728] sm:$0xff]
        %v1309 = vld [vmem:[%s303 + $0x730] sm:$0xff]
        %v1310 = vld [vmem:[%s303 + $0x738] sm:$0xff]
        %v1311 = vld [vmem:[%s303 + $0x740] sm:$0xff]
        %v1312 = vld [vmem:[%s303 + $0x748] sm:$0xff]
        %v1313 = vld [vmem:[%s303 + $0x750] sm:$0xff]
        %v1314 = vld [vmem:[%s303 + $0x758] sm:$0xff]
        %v1315 = vld [vmem:[%s303 + $0x760] sm:$0xff]
        %v1316 = vld [vmem:[%s303 + $0x768] sm:$0xff]
        %v1317 = vld [vmem:[%s303 + $0x770] sm:$0xff]
        %v1318 = vld [vmem:[%s303 + $0x778] sm:$0xff]
        %v1319 = vld [vmem:[%s303 + $0x780] sm:$0xff]
        %v1320 = vld [vmem:[%s303 + $0x788] sm:$0xff]
        %v1321 = vld [vmem:[%s303 + $0x790] sm:$0xff]
        %v1322 = vld [vmem:[%s303 + $0x798] sm:$0xff]
        %v1323 = vld [vmem:[%s303 + $0x7a0] sm:$0xff]
        %v1324 = vld [vmem:[%s303 + $0x7a8] sm:$0xff]
        %v1325 = vld [vmem:[%s303 + $0x7b0] sm:$0xff]
        %v1326 = vld [vmem:[%s303 + $0x7b8] sm:$0xff]
        %v1327 = vld [vmem:[%s303 + $0x7c0] sm:$0xff]
        %v1328 = vld [vmem:[%s303 + $0x7c8] sm:$0xff]
        %v1329 = vld [vmem:[%s303 + $0x7d0] sm:$0xff]
        %v1330 = vld [vmem:[%s303 + $0x7d8] sm:$0xff]
        %v1331 = vld [vmem:[%s303 + $0x7e0] sm:$0xff]
        %v1332 = vld [vmem:[%s303 + $0x7e8] sm:$0xff]
        %v1333 = vld [vmem:[%s303 + $0x7f0] sm:$0xff]
        %v1334 = vld [vmem:[%s303 + $0x7f8] sm:$0xff]
        %v1335 = vld [vmem:[%s303 + $0x800] sm:$0xff]
        %v1336 = vld [vmem:[%s303 + $0x808] sm:$0xff]
        %v1337 = vld [vmem:[%s303 + $0x810] sm:$0xff]
        %v1338 = vld [vmem:[%s303 + $0x818] sm:$0xff]
        %v1339 = vld [vmem:[%s303 + $0x820] sm:$0xff]
        %v1340 = vld [vmem:[%s303 + $0x828] sm:$0xff]
        %v1341 = vld [vmem:[%s303 + $0x830] sm:$0xff]
        %v1342 = vld [vmem:[%s303 + $0x838] sm:$0xff]
        %v1343 = vld [vmem:[%s303 + $0x840] sm:$0xff]
        %v1344 = vld [vmem:[%s303 + $0x848] sm:$0xff]
        %v1345 = vld [vmem:[%s303 + $0x850] sm:$0xff]
        %v1346 = vld [vmem:[%s303 + $0x858] sm:$0xff]
        %v1347 = vld [vmem:[%s303 + $0x860] sm:$0xff]
        %v1348 = vld [vmem:[%s303 + $0x868] sm:$0xff]
        %v1349 = vld [vmem:[%s303 + $0x870] sm:$0xff]
        %v1350 = vld [vmem:[%s303 + $0x878] sm:$0xff]
        %v1351 = vld [vmem:[%s303 + $0x880] sm:$0xff]
        %v1352 = vld [vmem:[%s303 + $0x888] sm:$0xff]
        %v1353 = vld [vmem:[%s303 + $0x890] sm:$0xff]
        %v1354 = vld [vmem:[%s303 + $0x898] sm:$0xff]
        %v1355 = vld [vmem:[%s303 + $0x8a0] sm:$0xff]
        %v1356 = vld [vmem:[%s303 + $0x8a8] sm:$0xff]
        %v1357 = vld [vmem:[%s303 + $0x8b0] sm:$0xff]
        %v1358 = vld [vmem:[%s303 + $0x8b8] sm:$0xff]
        %v1359 = vld [vmem:[%s303 + $0x8c0] sm:$0xff]
        %v1360 = vld [vmem:[%s303 + $0x8c8] sm:$0xff]
        %v1361 = vld [vmem:[%s303 + $0x8d0] sm:$0xff]
        %v1362 = vld [vmem:[%s303 + $0x8d8] sm:$0xff]
        %v1363 = vld [vmem:[%s303 + $0x8e0] sm:$0xff]
        %v1364 = vld [vmem:[%s303 + $0x8e8] sm:$0xff]
        %v1365 = vld [vmem:[%s303 + $0x8f0] sm:$0xff]
        %v1366 = vld [vmem:[%s303 + $0x8f8] sm:$0xff]
        %v1367 = vld [vmem:[%s303 + $0x900] sm:$0xff]
        %v1368 = vld [vmem:[%s303 + $0x908] sm:$0xff]
        %v1369 = vld [vmem:[%s303 + $0x910] sm:$0xff]
        %v1370 = vld [vmem:[%s303 + $0x918] sm:$0xff]
        %v1371 = vld [vmem:[%s303 + $0x920] sm:$0xff]
        %v1372 = vld [vmem:[%s303 + $0x928] sm:$0xff]
        %v1373 = vld [vmem:[%s303 + $0x930] sm:$0xff]
        %v1374 = vld [vmem:[%s303 + $0x938] sm:$0xff]
        %v1375 = vld [vmem:[%s303 + $0x940] sm:$0xff]
        %v1376 = vld [vmem:[%s303 + $0x948] sm:$0xff]
        %v1377 = vld [vmem:[%s303 + $0x950] sm:$0xff]
        %v1378 = vld [vmem:[%s303 + $0x958] sm:$0xff]
        %v1379 = vld [vmem:[%s303 + $0x960] sm:$0xff]
        %v1380 = vld [vmem:[%s303 + $0x968] sm:$0xff]
        %v1381 = vld [vmem:[%s303 + $0x970] sm:$0xff]
        %v1382 = vld [vmem:[%s303 + $0x978] sm:$0xff]
        %v1383 = vld [vmem:[%s303 + $0x980] sm:$0xff]
        %v1384 = vld [vmem:[%s303 + $0x988] sm:$0xff]
        %v1385 = vld [vmem:[%s303 + $0x990] sm:$0xff]
        %v1386 = vld [vmem:[%s303 + $0x998] sm:$0xff]
        %v1387 = vld [vmem:[%s303 + $0x9a0] sm:$0xff]
        %v1388 = vld [vmem:[%s303 + $0x9a8] sm:$0xff]
        %v1389 = vld [vmem:[%s303 + $0x9b0] sm:$0xff]
        %v1390 = vld [vmem:[%s303 + $0x9b8] sm:$0xff]
        %v1391 = vld [vmem:[%s303 + $0x9c0] sm:$0xff]
        %v1392 = vld [vmem:[%s303 + $0x9c8] sm:$0xff]
        %v1393 = vld [vmem:[%s303 + $0x9d0] sm:$0xff]
        %v1394 = vld [vmem:[%s303 + $0x9d8] sm:$0xff]
        %v1395 = vld [vmem:[%s303 + $0x9e0] sm:$0xff]
        %v1396 = vld [vmem:[%s303 + $0x9e8] sm:$0xff]
        %v1397 = vld [vmem:[%s303 + $0x9f0] sm:$0xff]
        %v1398 = vld [vmem:[%s303 + $0x9f8] sm:$0xff]
        %v1399 = vld [vmem:[%s303 + $0xa00] sm:$0xff]
        %v1400 = vld [vmem:[%s303 + $0xa08] sm:$0xff]
        %v1401 = vld [vmem:[%s303 + $0xa10] sm:$0xff]
        %v1402 = vld [vmem:[%s303 + $0xa18] sm:$0xff]
        %v1403 = vld [vmem:[%s303 + $0xa20] sm:$0xff]
        %v1404 = vld [vmem:[%s303 + $0xa28] sm:$0xff]
        %v1405 = vld [vmem:[%s303 + $0xa30] sm:$0xff]
        %v1406 = vld [vmem:[%s303 + $0xa38] sm:$0xff]
        %v1407 = vld [vmem:[%s303 + $0xa40] sm:$0xff]
        %v1408 = vld [vmem:[%s303 + $0xa48] sm:$0xff]
        %v1409 = vld [vmem:[%s303 + $0xa50] sm:$0xff]
        %v1410 = vld [vmem:[%s303 + $0xa58] sm:$0xff]
        %v1411 = vld [vmem:[%s303 + $0xa60] sm:$0xff]
        %v1412 = vld [vmem:[%s303 + $0xa68] sm:$0xff]
        %v1413 = vld [vmem:[%s303 + $0xa70] sm:$0xff]
        %v1414 = vld [vmem:[%s303 + $0xa78] sm:$0xff]
        %v1415 = vld [vmem:[%s303 + $0xa80] sm:$0xff]
        %v1416 = vld [vmem:[%s303 + $0xa88] sm:$0xff]
        %v1417 = vld [vmem:[%s303 + $0xa90] sm:$0xff]
        %v1418 = vld [vmem:[%s303 + $0xa98] sm:$0xff]
        %v1419 = vld [vmem:[%s303 + $0xaa0] sm:$0xff]
        %v1420 = vld [vmem:[%s303 + $0xaa8] sm:$0xff]
        %v1421 = vld [vmem:[%s303 + $0xab0] sm:$0xff]
        %v1422 = vld [vmem:[%s303 + $0xab8] sm:$0xff]
        %v1423 = vld [vmem:[%s303 + $0xac0] sm:$0xff]
        %v1424 = vld [vmem:[%s303 + $0xac8] sm:$0xff]
        %v1425 = vld [vmem:[%s303 + $0xad0] sm:$0xff]
        %v1426 = vld [vmem:[%s303 + $0xad8] sm:$0xff]
        %v1427 = vld [vmem:[%s303 + $0xae0] sm:$0xff]
        %v1428 = vld [vmem:[%s303 + $0xae8] sm:$0xff]
        %v1429 = vld [vmem:[%s303 + $0xaf0] sm:$0xff]
        %v1430 = vld [vmem:[%s303 + $0xaf8] sm:$0xff]
        %v1431 = vld [vmem:[%s303 + $0xb00] sm:$0xff]
        %v1432 = vld [vmem:[%s303 + $0xb08] sm:$0xff]
        %v1433 = vld [vmem:[%s303 + $0xb10] sm:$0xff]
        %v1434 = vld [vmem:[%s303 + $0xb18] sm:$0xff]
        %v1435 = vld [vmem:[%s303 + $0xb20] sm:$0xff]
        %v1436 = vld [vmem:[%s303 + $0xb28] sm:$0xff]
        %v1437 = vld [vmem:[%s303 + $0xb30] sm:$0xff]
        %v1438 = vld [vmem:[%s303 + $0xb38] sm:$0xff]
        %v1439 = vld [vmem:[%s303 + $0xb40] sm:$0xff]
        %v1440 = vld [vmem:[%s303 + $0xb48] sm:$0xff]
        %v1441 = vld [vmem:[%s303 + $0xb50] sm:$0xff]
        %v1442 = vld [vmem:[%s303 + $0xb58] sm:$0xff]
        %v1443 = vld [vmem:[%s303 + $0xb60] sm:$0xff]
        %v1444 = vld [vmem:[%s303 + $0xb68] sm:$0xff]
        %v1445 = vld [vmem:[%s303 + $0xb70] sm:$0xff]
        %v1446 = vld [vmem:[%s303 + $0xb78] sm:$0xff]
        %v1447 = vld [vmem:[%s303 + $0xb80] sm:$0xff]
        %v1448 = vld [vmem:[%s303 + $0xb88] sm:$0xff]
        %v1449 = vld [vmem:[%s303 + $0xb90] sm:$0xff]
        %v1450 = vld [vmem:[%s303 + $0xb98] sm:$0xff]
        %v1451 = vld [vmem:[%s303 + $0xba0] sm:$0xff]
        %v1452 = vld [vmem:[%s303 + $0xba8] sm:$0xff]
        %v1453 = vld [vmem:[%s303 + $0xbb0] sm:$0xff]
        %v1454 = vld [vmem:[%s303 + $0xbb8] sm:$0xff]
        %v1455 = vld [vmem:[%s303 + $0xbc0] sm:$0xff]
        %v1456 = vld [vmem:[%s303 + $0xbc8] sm:$0xff]
        %v1457 = vld [vmem:[%s303 + $0xbd0] sm:$0xff]
        %v1458 = vld [vmem:[%s303 + $0xbd8] sm:$0xff]
        %v1459 = vld [vmem:[%s303 + $0xbe0] sm:$0xff]
        %v1460 = vld [vmem:[%s303 + $0xbe8] sm:$0xff]
        %v1461 = vld [vmem:[%s303 + $0xbf0] sm:$0xff]
        %v1462 = vld [vmem:[%s303 + $0xbf8] sm:$0xff]
        %v1463 = vld [vmem:[%s303 + $0xc00] sm:$0xff]
        %v1464 = vld [vmem:[%s303 + $0xc08] sm:$0xff]
        %v1465 = vld [vmem:[%s303 + $0xc10] sm:$0xff]
        %v1466 = vld [vmem:[%s303 + $0xc18] sm:$0xff]
        %v1467 = vld [vmem:[%s303 + $0xc20] sm:$0xff]
        %v1468 = vld [vmem:[%s303 + $0xc28] sm:$0xff]
        %v1469 = vld [vmem:[%s303 + $0xc30] sm:$0xff]
        %v1470 = vld [vmem:[%s303 + $0xc38] sm:$0xff]
        %v1471 = vld [vmem:[%s303 + $0xc40] sm:$0xff]
        %v1472 = vld [vmem:[%s303 + $0xc48] sm:$0xff]
        %v1473 = vld [vmem:[%s303 + $0xc50] sm:$0xff]
        %v1474 = vld [vmem:[%s303 + $0xc58] sm:$0xff]
        %v1475 = vld [vmem:[%s303 + $0xc60] sm:$0xff]
        %v1476 = vld [vmem:[%s303 + $0xc68] sm:$0xff]
        %v1477 = vld [vmem:[%s303 + $0xc70] sm:$0xff]
        %v1478 = vld [vmem:[%s303 + $0xc78] sm:$0xff]
        %v1479 = vld [vmem:[%s303 + $0xc80] sm:$0xff]
        %v1480 = vld [vmem:[%s303 + $0xc88] sm:$0xff]
        %v1481 = vld [vmem:[%s303 + $0xc90] sm:$0xff]
        %v1482 = vld [vmem:[%s303 + $0xc98] sm:$0xff]
        %v1483 = vld [vmem:[%s303 + $0xca0] sm:$0xff]
        %v1484 = vld [vmem:[%s303 + $0xca8] sm:$0xff]
        %v1485 = vld [vmem:[%s303 + $0xcb0] sm:$0xff]
        %v1486 = vld [vmem:[%s303 + $0xcb8] sm:$0xff]
        %v1487 = vld [vmem:[%s303 + $0xcc0] sm:$0xff]
        %v1488 = vld [vmem:[%s303 + $0xcc8] sm:$0xff]
        %v1489 = vld [vmem:[%s303 + $0xcd0] sm:$0xff]
        %v1490 = vld [vmem:[%s303 + $0xcd8] sm:$0xff]
        %v1491 = vld [vmem:[%s303 + $0xce0] sm:$0xff]
        %v1492 = vld [vmem:[%s303 + $0xce8] sm:$0xff]
        %v1493 = vld [vmem:[%s303 + $0xcf0] sm:$0xff]
        %v1494 = vld [vmem:[%s303 + $0xcf8] sm:$0xff]
        %v1495 = vld [vmem:[%s303 + $0xd00] sm:$0xff]
        %v1496 = vld [vmem:[%s303 + $0xd08] sm:$0xff]
        %v1497 = vld [vmem:[%s303 + $0xd10] sm:$0xff]
        %v1498 = vld [vmem:[%s303 + $0xd18] sm:$0xff]
        %v1499 = vld [vmem:[%s303 + $0xd20] sm:$0xff]
        %v1500 = vld [vmem:[%s303 + $0xd28] sm:$0xff]
        %v1501 = vld [vmem:[%s303 + $0xd30] sm:$0xff]
        %v1502 = vld [vmem:[%s303 + $0xd38] sm:$0xff]
        %v1503 = vld [vmem:[%s303 + $0xd40] sm:$0xff]
        %v1504 = vld [vmem:[%s303 + $0xd48] sm:$0xff]
        %v1505 = vld [vmem:[%s303 + $0xd50] sm:$0xff]
        %v1506 = vld [vmem:[%s303 + $0xd58] sm:$0xff]
        %v1507 = vld [vmem:[%s303 + $0xd60] sm:$0xff]
        %v1508 = vld [vmem:[%s303 + $0xd68] sm:$0xff]
        %v1509 = vld [vmem:[%s303 + $0xd70] sm:$0xff]
        %v1510 = vld [vmem:[%s303 + $0xd78] sm:$0xff]
        %v1511 = vld [vmem:[%s303 + $0xd80] sm:$0xff]
        %v1512 = vld [vmem:[%s303 + $0xd88] sm:$0xff]
        %v1513 = vld [vmem:[%s303 + $0xd90] sm:$0xff]
        %v1514 = vld [vmem:[%s303 + $0xd98] sm:$0xff]
        %v1515 = vld [vmem:[%s303 + $0xda0] sm:$0xff]
        %v1516 = vld [vmem:[%s303 + $0xda8] sm:$0xff]
        %v1517 = vld [vmem:[%s303 + $0xdb0] sm:$0xff]
        %v1518 = vld [vmem:[%s303 + $0xdb8] sm:$0xff]
        %v1519 = vld [vmem:[%s303 + $0xdc0] sm:$0xff]
        %v1520 = vld [vmem:[%s303 + $0xdc8] sm:$0xff]
        %v1521 = vld [vmem:[%s303 + $0xdd0] sm:$0xff]
        %v1522 = vld [vmem:[%s303 + $0xdd8] sm:$0xff]
        %v1523 = vld [vmem:[%s303 + $0xde0] sm:$0xff]
        %v1524 = vld [vmem:[%s303 + $0xde8] sm:$0xff]
        %v1525 = vld [vmem:[%s303 + $0xdf0] sm:$0xff]
        %v1526 = vld [vmem:[%s303 + $0xdf8] sm:$0xff]
        %v1527 = vld [vmem:[%s303 + $0xe00] sm:$0xff]
        %v1528 = vld [vmem:[%s303 + $0xe08] sm:$0xff]
        %v1529 = vld [vmem:[%s303 + $0xe10] sm:$0xff]
        %v1530 = vld [vmem:[%s303 + $0xe18] sm:$0xff]
        %v1531 = vld [vmem:[%s303 + $0xe20] sm:$0xff]
        %v1532 = vld [vmem:[%s303 + $0xe28] sm:$0xff]
        %v1533 = vld [vmem:[%s303 + $0xe30] sm:$0xff]
        %v1534 = vld [vmem:[%s303 + $0xe38] sm:$0xff]
        %v1535 = vld [vmem:[%s303 + $0xe40] sm:$0xff]
        %v1536 = vld [vmem:[%s303 + $0xe48] sm:$0xff]
        %v1537 = vld [vmem:[%s303 + $0xe50] sm:$0xff]
        %v1538 = vld [vmem:[%s303 + $0xe58] sm:$0xff]
        %v1539 = vld [vmem:[%s303 + $0xe60] sm:$0xff]
        %v1540 = vld [vmem:[%s303 + $0xe68] sm:$0xff]
        %v1541 = vld [vmem:[%s303 + $0xe70] sm:$0xff]
        %v1542 = vld [vmem:[%s303 + $0xe78] sm:$0xff]
        %v1543 = vld [vmem:[%s303 + $0xe80] sm:$0xff]
        %v1544 = vld [vmem:[%s303 + $0xe88] sm:$0xff]
        %v1545 = vld [vmem:[%s303 + $0xe90] sm:$0xff]
        %v1546 = vld [vmem:[%s303 + $0xe98] sm:$0xff]
        %v1547 = vld [vmem:[%s303 + $0xea0] sm:$0xff]
        %v1548 = vld [vmem:[%s303 + $0xea8] sm:$0xff]
        %v1549 = vld [vmem:[%s303 + $0xeb0] sm:$0xff]
        %v1550 = vld [vmem:[%s303 + $0xeb8] sm:$0xff]
        %v1551 = vld [vmem:[%s303 + $0xec0] sm:$0xff]
        %v1552 = vld [vmem:[%s303 + $0xec8] sm:$0xff]
        %v1553 = vld [vmem:[%s303 + $0xed0] sm:$0xff]
        %v1554 = vld [vmem:[%s303 + $0xed8] sm:$0xff]
        %v1555 = vld [vmem:[%s303 + $0xee0] sm:$0xff]
        %v1556 = vld [vmem:[%s303 + $0xee8] sm:$0xff]
        %v1557 = vld [vmem:[%s303 + $0xef0] sm:$0xff]
        %v1558 = vld [vmem:[%s303 + $0xef8] sm:$0xff]
        %v1559 = vld [vmem:[%s303 + $0xf00] sm:$0xff]
        %v1560 = vld [vmem:[%s303 + $0xf08] sm:$0xff]
        %v1561 = vld [vmem:[%s303 + $0xf10] sm:$0xff]
        %v1562 = vld [vmem:[%s303 + $0xf18] sm:$0xff]
        %v1563 = vld [vmem:[%s303 + $0xf20] sm:$0xff]
        %v1564 = vld [vmem:[%s303 + $0xf28] sm:$0xff]
        %v1565 = vld [vmem:[%s303 + $0xf30] sm:$0xff]
        %v1566 = vld [vmem:[%s303 + $0xf38] sm:$0xff]
        %v1567 = vld [vmem:[%s303 + $0xf40] sm:$0xff]
        %v1568 = vld [vmem:[%s303 + $0xf48] sm:$0xff]
        %v1569 = vld [vmem:[%s303 + $0xf50] sm:$0xff]
        %v1570 = vld [vmem:[%s303 + $0xf58] sm:$0xff]
        %v1571 = vld [vmem:[%s303 + $0xf60] sm:$0xff]
        %v1572 = vld [vmem:[%s303 + $0xf68] sm:$0xff]
        %v1573 = vld [vmem:[%s303 + $0xf70] sm:$0xff]
        %v1574 = vld [vmem:[%s303 + $0xf78] sm:$0xff]
        %v1575 = vld [vmem:[%s303 + $0xf80] sm:$0xff]
        %v1576 = vld [vmem:[%s303 + $0xf88] sm:$0xff]
        %v1577 = vld [vmem:[%s303 + $0xf90] sm:$0xff]
        %v1578 = vld [vmem:[%s303 + $0xf98] sm:$0xff]
        %v1579 = vld [vmem:[%s303 + $0xfa0] sm:$0xff]
        %v1580 = vld [vmem:[%s303 + $0xfa8] sm:$0xff]
        %v1581 = vld [vmem:[%s303 + $0xfb0] sm:$0xff]
        %v1582 = vld [vmem:[%s303 + $0xfb8] sm:$0xff]
        %v1583 = vld [vmem:[%s303 + $0xfc0] sm:$0xff]
        %v1584 = vld [vmem:[%s303 + $0xfc8] sm:$0xff]
        %v1585 = vld [vmem:[%s303 + $0xfd0] sm:$0xff]
        %v1586 = vld [vmem:[%s303 + $0xfd8] sm:$0xff]
        %v1587 = vld [vmem:[%s303 + $0xfe0] sm:$0xff]
        %v1588 = vld [vmem:[%s303 + $0xfe8] sm:$0xff]
        %v1589 = vld [vmem:[%s303 + $0xff0] sm:$0xff]
        %v1590 = vld [vmem:[%s303 + $0xff8] sm:$0xff]
        %v1593 = vunpack.c.l.b16 %v1077
        %v1594 = vunpack.c.h.b16 %v1077
        %v1595 = vunpack.c.l.b16 %v1078
        %v1596 = vunpack.c.h.b16 %v1078
        %v1597 = vpack.c.b16 %v1593, %v1593
        %v1598 = vpack.c.b16 %v1594, %v1594
        %v1599 = vpack.c.b16 %v1595, %v1595
        %v1600 = vpack.c.b16 %v1596, %v1596
        %v2117 = vunpack.c.l.b16 %v1079
        %v2118 = vunpack.c.h.b16 %v1079
        %v2119 = vunpack.c.l.b16 %v1080
        %v2120 = vunpack.c.h.b16 %v1080
        %v2121 = vunpack.c.l.b16 %v1081
        %v2122 = vunpack.c.h.b16 %v1081
        %v2123 = vunpack.c.l.b16 %v1082
        %v2124 = vunpack.c.h.b16 %v1082
        %v2125 = vunpack.c.l.b16 %v1083
        %v2126 = vunpack.c.h.b16 %v1083
        %v2127 = vunpack.c.l.b16 %v1084
        %v2128 = vunpack.c.h.b16 %v1084
        %v2129 = vunpack.c.l.b16 %v1085
        %v2130 = vunpack.c.h.b16 %v1085
        %v2131 = vunpack.c.l.b16 %v1086
        %v2132 = vunpack.c.h.b16 %v1086
        %v2133 = vunpack.c.l.b16 %v1087
        %v2134 = vunpack.c.h.b16 %v1087
        %v2135 = vunpack.c.l.b16 %v1088
        %v2136 = vunpack.c.h.b16 %v1088
        %v2137 = vunpack.c.l.b16 %v1089
        %v2138 = vunpack.c.h.b16 %v1089
        %v2139 = vunpack.c.l.b16 %v1090
        %v2140 = vunpack.c.h.b16 %v1090
        %v2141 = vunpack.c.l.b16 %v1091
        %v2142 = vunpack.c.h.b16 %v1091
        %v2143 = vunpack.c.l.b16 %v1092
        %v2144 = vunpack.c.h.b16 %v1092
        %v2145 = vunpack.c.l.b16 %v1093
        %v2146 = vunpack.c.h.b16 %v1093
        %v2147 = vunpack.c.l.b16 %v1094
        %v2148 = vunpack.c.h.b16 %v1094
        %v2149 = vunpack.c.l.b16 %v1095
        %v2150 = vunpack.c.h.b16 %v1095
        %v2151 = vunpack.c.l.b16 %v1096
        %v2152 = vunpack.c.h.b16 %v1096
        %v2153 = vunpack.c.l.b16 %v1097
        %v2154 = vunpack.c.h.b16 %v1097
        %v2155 = vunpack.c.l.b16 %v1098
        %v2156 = vunpack.c.h.b16 %v1098
        %v2157 = vunpack.c.l.b16 %v1099
        %v2158 = vunpack.c.h.b16 %v1099
        %v2159 = vunpack.c.l.b16 %v1100
        %v2160 = vunpack.c.h.b16 %v1100
        %v2161 = vunpack.c.l.b16 %v1101
        %v2162 = vunpack.c.h.b16 %v1101
        %v2163 = vunpack.c.l.b16 %v1102
        %v2164 = vunpack.c.h.b16 %v1102
        %v2165 = vunpack.c.l.b16 %v1103
        %v2166 = vunpack.c.h.b16 %v1103
        %v2167 = vunpack.c.l.b16 %v1104
        %v2168 = vunpack.c.h.b16 %v1104
        %v2169 = vunpack.c.l.b16 %v1105
        %v2170 = vunpack.c.h.b16 %v1105
        %v2171 = vunpack.c.l.b16 %v1106
        %v2172 = vunpack.c.h.b16 %v1106
        %v2173 = vunpack.c.l.b16 %v1107
        %v2174 = vunpack.c.h.b16 %v1107
        %v2175 = vunpack.c.l.b16 %v1108
        %v2176 = vunpack.c.h.b16 %v1108
        %v2177 = vunpack.c.l.b16 %v1109
        %v2178 = vunpack.c.h.b16 %v1109
        %v2179 = vunpack.c.l.b16 %v1110
        %v2180 = vunpack.c.h.b16 %v1110
        %v2181 = vunpack.c.l.b16 %v1111
        %v2182 = vunpack.c.h.b16 %v1111
        %v2183 = vunpack.c.l.b16 %v1112
        %v2184 = vunpack.c.h.b16 %v1112
        %v2185 = vunpack.c.l.b16 %v1113
        %v2186 = vunpack.c.h.b16 %v1113
        %v2187 = vunpack.c.l.b16 %v1114
        %v2188 = vunpack.c.h.b16 %v1114
        %v2189 = vunpack.c.l.b16 %v1115
        %v2190 = vunpack.c.h.b16 %v1115
        %v2191 = vunpack.c.l.b16 %v1116
        %v2192 = vunpack.c.h.b16 %v1116
        %v2193 = vunpack.c.l.b16 %v1117
        %v2194 = vunpack.c.h.b16 %v1117
        %v2195 = vunpack.c.l.b16 %v1118
        %v2196 = vunpack.c.h.b16 %v1118
        %v2197 = vunpack.c.l.b16 %v1119
        %v2198 = vunpack.c.h.b16 %v1119
        %v2199 = vunpack.c.l.b16 %v1120
        %v2200 = vunpack.c.h.b16 %v1120
        %v2201 = vunpack.c.l.b16 %v1121
        %v2202 = vunpack.c.h.b16 %v1121
        %v2203 = vunpack.c.l.b16 %v1122
        %v2204 = vunpack.c.h.b16 %v1122
        %v2205 = vunpack.c.l.b16 %v1123
        %v2206 = vunpack.c.h.b16 %v1123
        %v2207 = vunpack.c.l.b16 %v1124
        %v2208 = vunpack.c.h.b16 %v1124
        %v2209 = vunpack.c.l.b16 %v1125
        %v2210 = vunpack.c.h.b16 %v1125
        %v2211 = vunpack.c.l.b16 %v1126
        %v2212 = vunpack.c.h.b16 %v1126
        %v2213 = vunpack.c.l.b16 %v1127
        %v2214 = vunpack.c.h.b16 %v1127
        %v2215 = vunpack.c.l.b16 %v1128
        %v2216 = vunpack.c.h.b16 %v1128
        %v2217 = vunpack.c.l.b16 %v1129
        %v2218 = vunpack.c.h.b16 %v1129
        %v2219 = vunpack.c.l.b16 %v1130
        %v2220 = vunpack.c.h.b16 %v1130
        %v2221 = vunpack.c.l.b16 %v1131
        %v2222 = vunpack.c.h.b16 %v1131
        %v2223 = vunpack.c.l.b16 %v1132
        %v2224 = vunpack.c.h.b16 %v1132
        %v2225 = vunpack.c.l.b16 %v1133
        %v2226 = vunpack.c.h.b16 %v1133
        %v2227 = vunpack.c.l.b16 %v1134
        %v2228 = vunpack.c.h.b16 %v1134
        %v2229 = vunpack.c.l.b16 %v1135
        %v2230 = vunpack.c.h.b16 %v1135
        %v2231 = vunpack.c.l.b16 %v1136
        %v2232 = vunpack.c.h.b16 %v1136
        %v2233 = vunpack.c.l.b16 %v1137
        %v2234 = vunpack.c.h.b16 %v1137
        %v2235 = vunpack.c.l.b16 %v1138
        %v2236 = vunpack.c.h.b16 %v1138
        %v2237 = vunpack.c.l.b16 %v1139
        %v2238 = vunpack.c.h.b16 %v1139
        %v2239 = vunpack.c.l.b16 %v1140
        %v2240 = vunpack.c.h.b16 %v1140
        %v2241 = vunpack.c.l.b16 %v1141
        %v2242 = vunpack.c.h.b16 %v1141
        %v2243 = vunpack.c.l.b16 %v1142
        %v2244 = vunpack.c.h.b16 %v1142
        %v2245 = vunpack.c.l.b16 %v1143
        %v2246 = vunpack.c.h.b16 %v1143
        %v2247 = vunpack.c.l.b16 %v1144
        %v2248 = vunpack.c.h.b16 %v1144
        %v2249 = vunpack.c.l.b16 %v1145
        %v2250 = vunpack.c.h.b16 %v1145
        %v2251 = vunpack.c.l.b16 %v1146
        %v2252 = vunpack.c.h.b16 %v1146
        %v2253 = vunpack.c.l.b16 %v1147
        %v2254 = vunpack.c.h.b16 %v1147
        %v2255 = vunpack.c.l.b16 %v1148
        %v2256 = vunpack.c.h.b16 %v1148
        %v2257 = vunpack.c.l.b16 %v1149
        %v2258 = vunpack.c.h.b16 %v1149
        %v2259 = vunpack.c.l.b16 %v1150
        %v2260 = vunpack.c.h.b16 %v1150
        %v2261 = vunpack.c.l.b16 %v1151
        %v2262 = vunpack.c.h.b16 %v1151
        %v2263 = vunpack.c.l.b16 %v1152
        %v2264 = vunpack.c.h.b16 %v1152
        %v2265 = vunpack.c.l.b16 %v1153
        %v2266 = vunpack.c.h.b16 %v1153
        %v2267 = vunpack.c.l.b16 %v1154
        %v2268 = vunpack.c.h.b16 %v1154
        %v2269 = vunpack.c.l.b16 %v1155
        %v2270 = vunpack.c.h.b16 %v1155
        %v2271 = vunpack.c.l.b16 %v1156
        %v2272 = vunpack.c.h.b16 %v1156
        %v2273 = vunpack.c.l.b16 %v1157
        %v2274 = vunpack.c.h.b16 %v1157
        %v2275 = vunpack.c.l.b16 %v1158
        %v2276 = vunpack.c.h.b16 %v1158
        %v2277 = vunpack.c.l.b16 %v1159
        %v2278 = vunpack.c.h.b16 %v1159
        %v2279 = vunpack.c.l.b16 %v1160
        %v2280 = vunpack.c.h.b16 %v1160
        %v2281 = vunpack.c.l.b16 %v1161
        %v2282 = vunpack.c.h.b16 %v1161
        %v2283 = vunpack.c.l.b16 %v1162
        %v2284 = vunpack.c.h.b16 %v1162
        %v2285 = vunpack.c.l.b16 %v1163
        %v2286 = vunpack.c.h.b16 %v1163
        %v2287 = vunpack.c.l.b16 %v1164
        %v2288 = vunpack.c.h.b16 %v1164
        %v2289 = vunpack.c.l.b16 %v1165
        %v2290 = vunpack.c.h.b16 %v1165
        %v2291 = vunpack.c.l.b16 %v1166
        %v2292 = vunpack.c.h.b16 %v1166
        %v2293 = vunpack.c.l.b16 %v1167
        %v2294 = vunpack.c.h.b16 %v1167
        %v2295 = vunpack.c.l.b16 %v1168
        %v2296 = vunpack.c.h.b16 %v1168
        %v2297 = vunpack.c.l.b16 %v1169
        %v2298 = vunpack.c.h.b16 %v1169
        %v2299 = vunpack.c.l.b16 %v1170
        %v2300 = vunpack.c.h.b16 %v1170
        %v2301 = vunpack.c.l.b16 %v1171
        %v2302 = vunpack.c.h.b16 %v1171
        %v2303 = vunpack.c.l.b16 %v1172
        %v2304 = vunpack.c.h.b16 %v1172
        %v2305 = vunpack.c.l.b16 %v1173
        %v2306 = vunpack.c.h.b16 %v1173
        %v2307 = vunpack.c.l.b16 %v1174
        %v2308 = vunpack.c.h.b16 %v1174
        %v2309 = vunpack.c.l.b16 %v1175
        %v2310 = vunpack.c.h.b16 %v1175
        %v2311 = vunpack.c.l.b16 %v1176
        %v2312 = vunpack.c.h.b16 %v1176
        %v2313 = vunpack.c.l.b16 %v1177
        %v2314 = vunpack.c.h.b16 %v1177
        %v2315 = vunpack.c.l.b16 %v1178
        %v2316 = vunpack.c.h.b16 %v1178
        %v2317 = vunpack.c.l.b16 %v1179
        %v2318 = vunpack.c.h.b16 %v1179
        %v2319 = vunpack.c.l.b16 %v1180
        %v2320 = vunpack.c.h.b16 %v1180
        %v2321 = vunpack.c.l.b16 %v1181
        %v2322 = vunpack.c.h.b16 %v1181
        %v2323 = vunpack.c.l.b16 %v1182
        %v2324 = vunpack.c.h.b16 %v1182
        %v2325 = vunpack.c.l.b16 %v1183
        %v2326 = vunpack.c.h.b16 %v1183
        %v2327 = vunpack.c.l.b16 %v1184
        %v2328 = vunpack.c.h.b16 %v1184
        %v2329 = vunpack.c.l.b16 %v1185
        %v2330 = vunpack.c.h.b16 %v1185
        %v2331 = vunpack.c.l.b16 %v1186
        %v2332 = vunpack.c.h.b16 %v1186
        %v2333 = vunpack.c.l.b16 %v1187
        %v2334 = vunpack.c.h.b16 %v1187
        %v2335 = vunpack.c.l.b16 %v1188
        %v2336 = vunpack.c.h.b16 %v1188
        %v2337 = vunpack.c.l.b16 %v1189
        %v2338 = vunpack.c.h.b16 %v1189
        %v2339 = vunpack.c.l.b16 %v1190
        %v2340 = vunpack.c.h.b16 %v1190
        %v2341 = vunpack.c.l.b16 %v1191
        %v2342 = vunpack.c.h.b16 %v1191
        %v2343 = vunpack.c.l.b16 %v1192
        %v2344 = vunpack.c.h.b16 %v1192
        %v2345 = vunpack.c.l.b16 %v1193
        %v2346 = vunpack.c.h.b16 %v1193
        %v2347 = vunpack.c.l.b16 %v1194
        %v2348 = vunpack.c.h.b16 %v1194
        %v2349 = vunpack.c.l.b16 %v1195
        %v2350 = vunpack.c.h.b16 %v1195
        %v2351 = vunpack.c.l.b16 %v1196
        %v2352 = vunpack.c.h.b16 %v1196
        %v2353 = vunpack.c.l.b16 %v1197
        %v2354 = vunpack.c.h.b16 %v1197
        %v2355 = vunpack.c.l.b16 %v1198
        %v2356 = vunpack.c.h.b16 %v1198
        %v2357 = vunpack.c.l.b16 %v1199
        %v2358 = vunpack.c.h.b16 %v1199
        %v2359 = vunpack.c.l.b16 %v1200
        %v2360 = vunpack.c.h.b16 %v1200
        %v2361 = vunpack.c.l.b16 %v1201
        %v2362 = vunpack.c.h.b16 %v1201
        %v2363 = vunpack.c.l.b16 %v1202
        %v2364 = vunpack.c.h.b16 %v1202
        %v2365 = vunpack.c.l.b16 %v1203
        %v2366 = vunpack.c.h.b16 %v1203
        %v2367 = vunpack.c.l.b16 %v1204
        %v2368 = vunpack.c.h.b16 %v1204
        %v2369 = vunpack.c.l.b16 %v1205
        %v2370 = vunpack.c.h.b16 %v1205
        %v2371 = vunpack.c.l.b16 %v1206
        %v2372 = vunpack.c.h.b16 %v1206
        %v2373 = vunpack.c.l.b16 %v1207
        %v2374 = vunpack.c.h.b16 %v1207
        %v2375 = vunpack.c.l.b16 %v1208
        %v2376 = vunpack.c.h.b16 %v1208
        %v2377 = vunpack.c.l.b16 %v1209
        %v2378 = vunpack.c.h.b16 %v1209
        %v2379 = vunpack.c.l.b16 %v1210
        %v2380 = vunpack.c.h.b16 %v1210
        %v2381 = vunpack.c.l.b16 %v1211
        %v2382 = vunpack.c.h.b16 %v1211
        %v2383 = vunpack.c.l.b16 %v1212
        %v2384 = vunpack.c.h.b16 %v1212
        %v2385 = vunpack.c.l.b16 %v1213
        %v2386 = vunpack.c.h.b16 %v1213
        %v2387 = vunpack.c.l.b16 %v1214
        %v2388 = vunpack.c.h.b16 %v1214
        %v2389 = vunpack.c.l.b16 %v1215
        %v2390 = vunpack.c.h.b16 %v1215
        %v2391 = vunpack.c.l.b16 %v1216
        %v2392 = vunpack.c.h.b16 %v1216
        %v2393 = vunpack.c.l.b16 %v1217
        %v2394 = vunpack.c.h.b16 %v1217
        %v2395 = vunpack.c.l.b16 %v1218
        %v2396 = vunpack.c.h.b16 %v1218
        %v2397 = vunpack.c.l.b16 %v1219
        %v2398 = vunpack.c.h.b16 %v1219
        %v2399 = vunpack.c.l.b16 %v1220
        %v2400 = vunpack.c.h.b16 %v1220
        %v2401 = vunpack.c.l.b16 %v1221
        %v2402 = vunpack.c.h.b16 %v1221
        %v2403 = vunpack.c.l.b16 %v1222
        %v2404 = vunpack.c.h.b16 %v1222
        %v2405 = vunpack.c.l.b16 %v1223
        %v2406 = vunpack.c.h.b16 %v1223
        %v2407 = vunpack.c.l.b16 %v1224
        %v2408 = vunpack.c.h.b16 %v1224
        %v2409 = vunpack.c.l.b16 %v1225
        %v2410 = vunpack.c.h.b16 %v1225
        %v2411 = vunpack.c.l.b16 %v1226
        %v2412 = vunpack.c.h.b16 %v1226
        %v2413 = vunpack.c.l.b16 %v1227
        %v2414 = vunpack.c.h.b16 %v1227
        %v2415 = vunpack.c.l.b16 %v1228
        %v2416 = vunpack.c.h.b16 %v1228
        %v2417 = vunpack.c.l.b16 %v1229
        %v2418 = vunpack.c.h.b16 %v1229
        %v2419 = vunpack.c.l.b16 %v1230
        %v2420 = vunpack.c.h.b16 %v1230
        %v2421 = vunpack.c.l.b16 %v1231
        %v2422 = vunpack.c.h.b16 %v1231
        %v2423 = vunpack.c.l.b16 %v1232
        %v2424 = vunpack.c.h.b16 %v1232
        %v2425 = vunpack.c.l.b16 %v1233
        %v2426 = vunpack.c.h.b16 %v1233
        %v2427 = vunpack.c.l.b16 %v1234
        %v2428 = vunpack.c.h.b16 %v1234
        %v2429 = vunpack.c.l.b16 %v1235
        %v2430 = vunpack.c.h.b16 %v1235
        %v2431 = vunpack.c.l.b16 %v1236
        %v2432 = vunpack.c.h.b16 %v1236
        %v2433 = vunpack.c.l.b16 %v1237
        %v2434 = vunpack.c.h.b16 %v1237
        %v2435 = vunpack.c.l.b16 %v1238
        %v2436 = vunpack.c.h.b16 %v1238
        %v2437 = vunpack.c.l.b16 %v1239
        %v2438 = vunpack.c.h.b16 %v1239
        %v2439 = vunpack.c.l.b16 %v1240
        %v2440 = vunpack.c.h.b16 %v1240
        %v2441 = vunpack.c.l.b16 %v1241
        %v2442 = vunpack.c.h.b16 %v1241
        %v2443 = vunpack.c.l.b16 %v1242
        %v2444 = vunpack.c.h.b16 %v1242
        %v2445 = vunpack.c.l.b16 %v1243
        %v2446 = vunpack.c.h.b16 %v1243
        %v2447 = vunpack.c.l.b16 %v1244
        %v2448 = vunpack.c.h.b16 %v1244
        %v2449 = vunpack.c.l.b16 %v1245
        %v2450 = vunpack.c.h.b16 %v1245
        %v2451 = vunpack.c.l.b16 %v1246
        %v2452 = vunpack.c.h.b16 %v1246
        %v2453 = vunpack.c.l.b16 %v1247
        %v2454 = vunpack.c.h.b16 %v1247
        %v2455 = vunpack.c.l.b16 %v1248
        %v2456 = vunpack.c.h.b16 %v1248
        %v2457 = vunpack.c.l.b16 %v1249
        %v2458 = vunpack.c.h.b16 %v1249
        %v2459 = vunpack.c.l.b16 %v1250
        %v2460 = vunpack.c.h.b16 %v1250
        %v2461 = vunpack.c.l.b16 %v1251
        %v2462 = vunpack.c.h.b16 %v1251
        %v2463 = vunpack.c.l.b16 %v1252
        %v2464 = vunpack.c.h.b16 %v1252
        %v2465 = vunpack.c.l.b16 %v1253
        %v2466 = vunpack.c.h.b16 %v1253
        %v2467 = vunpack.c.l.b16 %v1254
        %v2468 = vunpack.c.h.b16 %v1254
        %v2469 = vunpack.c.l.b16 %v1255
        %v2470 = vunpack.c.h.b16 %v1255
        %v2471 = vunpack.c.l.b16 %v1256
        %v2472 = vunpack.c.h.b16 %v1256
        %v2473 = vunpack.c.l.b16 %v1257
        %v2474 = vunpack.c.h.b16 %v1257
        %v2475 = vunpack.c.l.b16 %v1258
        %v2476 = vunpack.c.h.b16 %v1258
        %v2477 = vunpack.c.l.b16 %v1259
        %v2478 = vunpack.c.h.b16 %v1259
        %v2479 = vunpack.c.l.b16 %v1260
        %v2480 = vunpack.c.h.b16 %v1260
        %v2481 = vunpack.c.l.b16 %v1261
        %v2482 = vunpack.c.h.b16 %v1261
        %v2483 = vunpack.c.l.b16 %v1262
        %v2484 = vunpack.c.h.b16 %v1262
        %v2485 = vunpack.c.l.b16 %v1263
        %v2486 = vunpack.c.h.b16 %v1263
        %v2487 = vunpack.c.l.b16 %v1264
        %v2488 = vunpack.c.h.b16 %v1264
        %v2489 = vunpack.c.l.b16 %v1265
        %v2490 = vunpack.c.h.b16 %v1265
        %v2491 = vunpack.c.l.b16 %v1266
        %v2492 = vunpack.c.h.b16 %v1266
        %v2493 = vunpack.c.l.b16 %v1267
        %v2494 = vunpack.c.h.b16 %v1267
        %v2495 = vunpack.c.l.b16 %v1268
        %v2496 = vunpack.c.h.b16 %v1268
        %v2497 = vunpack.c.l.b16 %v1269
        %v2498 = vunpack.c.h.b16 %v1269
        %v2499 = vunpack.c.l.b16 %v1270
        %v2500 = vunpack.c.h.b16 %v1270
        %v2501 = vunpack.c.l.b16 %v1271
        %v2502 = vunpack.c.h.b16 %v1271
        %v2503 = vunpack.c.l.b16 %v1272
        %v2504 = vunpack.c.h.b16 %v1272
        %v2505 = vunpack.c.l.b16 %v1273
        %v2506 = vunpack.c.h.b16 %v1273
        %v2507 = vunpack.c.l.b16 %v1274
        %v2508 = vunpack.c.h.b16 %v1274
        %v2509 = vunpack.c.l.b16 %v1275
        %v2510 = vunpack.c.h.b16 %v1275
        %v2511 = vunpack.c.l.b16 %v1276
        %v2512 = vunpack.c.h.b16 %v1276
        %v2513 = vunpack.c.l.b16 %v1277
        %v2514 = vunpack.c.h.b16 %v1277
        %v2515 = vunpack.c.l.b16 %v1278
        %v2516 = vunpack.c.h.b16 %v1278
        %v2517 = vunpack.c.l.b16 %v1279
        %v2518 = vunpack.c.h.b16 %v1279
        %v2519 = vunpack.c.l.b16 %v1280
        %v2520 = vunpack.c.h.b16 %v1280
        %v2521 = vunpack.c.l.b16 %v1281
        %v2522 = vunpack.c.h.b16 %v1281
        %v2523 = vunpack.c.l.b16 %v1282
        %v2524 = vunpack.c.h.b16 %v1282
        %v2525 = vunpack.c.l.b16 %v1283
        %v2526 = vunpack.c.h.b16 %v1283
        %v2527 = vunpack.c.l.b16 %v1284
        %v2528 = vunpack.c.h.b16 %v1284
        %v2529 = vunpack.c.l.b16 %v1285
        %v2530 = vunpack.c.h.b16 %v1285
        %v2531 = vunpack.c.l.b16 %v1286
        %v2532 = vunpack.c.h.b16 %v1286
        %v2533 = vunpack.c.l.b16 %v1287
        %v2534 = vunpack.c.h.b16 %v1287
        %v2535 = vunpack.c.l.b16 %v1288
        %v2536 = vunpack.c.h.b16 %v1288
        %v2537 = vunpack.c.l.b16 %v1289
        %v2538 = vunpack.c.h.b16 %v1289
        %v2539 = vunpack.c.l.b16 %v1290
        %v2540 = vunpack.c.h.b16 %v1290
        %v2541 = vunpack.c.l.b16 %v1291
        %v2542 = vunpack.c.h.b16 %v1291
        %v2543 = vunpack.c.l.b16 %v1292
        %v2544 = vunpack.c.h.b16 %v1292
        %v2545 = vunpack.c.l.b16 %v1293
        %v2546 = vunpack.c.h.b16 %v1293
        %v2547 = vunpack.c.l.b16 %v1294
        %v2548 = vunpack.c.h.b16 %v1294
        %v2549 = vunpack.c.l.b16 %v1295
        %v2550 = vunpack.c.h.b16 %v1295
        %v2551 = vunpack.c.l.b16 %v1296
        %v2552 = vunpack.c.h.b16 %v1296
        %v2553 = vunpack.c.l.b16 %v1297
        %v2554 = vunpack.c.h.b16 %v1297
        %v2555 = vunpack.c.l.b16 %v1298
        %v2556 = vunpack.c.h.b16 %v1298
        %v2557 = vunpack.c.l.b16 %v1299
        %v2558 = vunpack.c.h.b16 %v1299
        %v2559 = vunpack.c.l.b16 %v1300
        %v2560 = vunpack.c.h.b16 %v1300
        %v2561 = vunpack.c.l.b16 %v1301
        %v2562 = vunpack.c.h.b16 %v1301
        %v2563 = vunpack.c.l.b16 %v1302
        %v2564 = vunpack.c.h.b16 %v1302
        %v2565 = vunpack.c.l.b16 %v1303
        %v2566 = vunpack.c.h.b16 %v1303
        %v2567 = vunpack.c.l.b16 %v1304
        %v2568 = vunpack.c.h.b16 %v1304
        %v2569 = vunpack.c.l.b16 %v1305
        %v2570 = vunpack.c.h.b16 %v1305
        %v2571 = vunpack.c.l.b16 %v1306
        %v2572 = vunpack.c.h.b16 %v1306
        %v2573 = vunpack.c.l.b16 %v1307
        %v2574 = vunpack.c.h.b16 %v1307
        %v2575 = vunpack.c.l.b16 %v1308
        %v2576 = vunpack.c.h.b16 %v1308
        %v2577 = vunpack.c.l.b16 %v1309
        %v2578 = vunpack.c.h.b16 %v1309
        %v2579 = vunpack.c.l.b16 %v1310
        %v2580 = vunpack.c.h.b16 %v1310
        %v2581 = vunpack.c.l.b16 %v1311
        %v2582 = vunpack.c.h.b16 %v1311
        %v2583 = vunpack.c.l.b16 %v1312
        %v2584 = vunpack.c.h.b16 %v1312
        %v2585 = vunpack.c.l.b16 %v1313
        %v2586 = vunpack.c.h.b16 %v1313
        %v2587 = vunpack.c.l.b16 %v1314
        %v2588 = vunpack.c.h.b16 %v1314
        %v2589 = vunpack.c.l.b16 %v1315
        %v2590 = vunpack.c.h.b16 %v1315
        %v2591 = vunpack.c.l.b16 %v1316
        %v2592 = vunpack.c.h.b16 %v1316
        %v2593 = vunpack.c.l.b16 %v1317
        %v2594 = vunpack.c.h.b16 %v1317
        %v2595 = vunpack.c.l.b16 %v1318
        %v2596 = vunpack.c.h.b16 %v1318
        %v2597 = vunpack.c.l.b16 %v1319
        %v2598 = vunpack.c.h.b16 %v1319
        %v2599 = vunpack.c.l.b16 %v1320
        %v2600 = vunpack.c.h.b16 %v1320
        %v2601 = vunpack.c.l.b16 %v1321
        %v2602 = vunpack.c.h.b16 %v1321
        %v2603 = vunpack.c.l.b16 %v1322
        %v2604 = vunpack.c.h.b16 %v1322
        %v2605 = vunpack.c.l.b16 %v1323
        %v2606 = vunpack.c.h.b16 %v1323
        %v2607 = vunpack.c.l.b16 %v1324
        %v2608 = vunpack.c.h.b16 %v1324
        %v2609 = vunpack.c.l.b16 %v1325
        %v2610 = vunpack.c.h.b16 %v1325
        %v2611 = vunpack.c.l.b16 %v1326
        %v2612 = vunpack.c.h.b16 %v1326
        %v2613 = vunpack.c.l.b16 %v1327
        %v2614 = vunpack.c.h.b16 %v1327
        %v2615 = vunpack.c.l.b16 %v1328
        %v2616 = vunpack.c.h.b16 %v1328
        %v2617 = vunpack.c.l.b16 %v1329
        %v2618 = vunpack.c.h.b16 %v1329
        %v2619 = vunpack.c.l.b16 %v1330
        %v2620 = vunpack.c.h.b16 %v1330
        %v2621 = vunpack.c.l.b16 %v1331
        %v2622 = vunpack.c.h.b16 %v1331
        %v2623 = vunpack.c.l.b16 %v1332
        %v2624 = vunpack.c.h.b16 %v1332
        %v2625 = vunpack.c.l.b16 %v1333
        %v2626 = vunpack.c.h.b16 %v1333
        %v2627 = vunpack.c.l.b16 %v1334
        %v2628 = vunpack.c.h.b16 %v1334
        %v2629 = vunpack.c.l.b16 %v1335
        %v2630 = vunpack.c.h.b16 %v1335
        %v2631 = vunpack.c.l.b16 %v1336
        %v2632 = vunpack.c.h.b16 %v1336
        %v2633 = vunpack.c.l.b16 %v1337
        %v2634 = vunpack.c.h.b16 %v1337
        %v2635 = vunpack.c.l.b16 %v1338
        %v2636 = vunpack.c.h.b16 %v1338
        %v2637 = vunpack.c.l.b16 %v1339
        %v2638 = vunpack.c.h.b16 %v1339
        %v2639 = vunpack.c.l.b16 %v1340
        %v2640 = vunpack.c.h.b16 %v1340
        %v2641 = vunpack.c.l.b16 %v1341
        %v2642 = vunpack.c.h.b16 %v1341
        %v2643 = vunpack.c.l.b16 %v1342
        %v2644 = vunpack.c.h.b16 %v1342
        %v2645 = vunpack.c.l.b16 %v1343
        %v2646 = vunpack.c.h.b16 %v1343
        %v2647 = vunpack.c.l.b16 %v1344
        %v2648 = vunpack.c.h.b16 %v1344
        %v2649 = vunpack.c.l.b16 %v1345
        %v2650 = vunpack.c.h.b16 %v1345
        %v2651 = vunpack.c.l.b16 %v1346
        %v2652 = vunpack.c.h.b16 %v1346
        %v2653 = vunpack.c.l.b16 %v1347
        %v2654 = vunpack.c.h.b16 %v1347
        %v2655 = vunpack.c.l.b16 %v1348
        %v2656 = vunpack.c.h.b16 %v1348
        %v2657 = vunpack.c.l.b16 %v1349
        %v2658 = vunpack.c.h.b16 %v1349
        %v2659 = vunpack.c.l.b16 %v1350
        %v2660 = vunpack.c.h.b16 %v1350
        %v2661 = vunpack.c.l.b16 %v1351
        %v2662 = vunpack.c.h.b16 %v1351
        %v2663 = vunpack.c.l.b16 %v1352
        %v2664 = vunpack.c.h.b16 %v1352
        %v2665 = vunpack.c.l.b16 %v1353
        %v2666 = vunpack.c.h.b16 %v1353
        %v2667 = vunpack.c.l.b16 %v1354
        %v2668 = vunpack.c.h.b16 %v1354
        %v2669 = vunpack.c.l.b16 %v1355
        %v2670 = vunpack.c.h.b16 %v1355
        %v2671 = vunpack.c.l.b16 %v1356
        %v2672 = vunpack.c.h.b16 %v1356
        %v2673 = vunpack.c.l.b16 %v1357
        %v2674 = vunpack.c.h.b16 %v1357
        %v2675 = vunpack.c.l.b16 %v1358
        %v2676 = vunpack.c.h.b16 %v1358
        %v2677 = vunpack.c.l.b16 %v1359
        %v2678 = vunpack.c.h.b16 %v1359
        %v2679 = vunpack.c.l.b16 %v1360
        %v2680 = vunpack.c.h.b16 %v1360
        %v2681 = vunpack.c.l.b16 %v1361
        %v2682 = vunpack.c.h.b16 %v1361
        %v2683 = vunpack.c.l.b16 %v1362
        %v2684 = vunpack.c.h.b16 %v1362
        %v2685 = vunpack.c.l.b16 %v1363
        %v2686 = vunpack.c.h.b16 %v1363
        %v2687 = vunpack.c.l.b16 %v1364
        %v2688 = vunpack.c.h.b16 %v1364
        %v2689 = vunpack.c.l.b16 %v1365
        %v2690 = vunpack.c.h.b16 %v1365
        %v2691 = vunpack.c.l.b16 %v1366
        %v2692 = vunpack.c.h.b16 %v1366
        %v2693 = vunpack.c.l.b16 %v1367
        %v2694 = vunpack.c.h.b16 %v1367
        %v2695 = vunpack.c.l.b16 %v1368
        %v2696 = vunpack.c.h.b16 %v1368
        %v2697 = vunpack.c.l.b16 %v1369
        %v2698 = vunpack.c.h.b16 %v1369
        %v2699 = vunpack.c.l.b16 %v1370
        %v2700 = vunpack.c.h.b16 %v1370
        %v2701 = vunpack.c.l.b16 %v1371
        %v2702 = vunpack.c.h.b16 %v1371
        %v2703 = vunpack.c.l.b16 %v1372
        %v2704 = vunpack.c.h.b16 %v1372
        %v2705 = vunpack.c.l.b16 %v1373
        %v2706 = vunpack.c.h.b16 %v1373
        %v2707 = vunpack.c.l.b16 %v1374
        %v2708 = vunpack.c.h.b16 %v1374
        %v2709 = vunpack.c.l.b16 %v1375
        %v2710 = vunpack.c.h.b16 %v1375
        %v2711 = vunpack.c.l.b16 %v1376
        %v2712 = vunpack.c.h.b16 %v1376
        %v2713 = vunpack.c.l.b16 %v1377
        %v2714 = vunpack.c.h.b16 %v1377
        %v2715 = vunpack.c.l.b16 %v1378
        %v2716 = vunpack.c.h.b16 %v1378
        %v2717 = vunpack.c.l.b16 %v1379
        %v2718 = vunpack.c.h.b16 %v1379
        %v2719 = vunpack.c.l.b16 %v1380
        %v2720 = vunpack.c.h.b16 %v1380
        %v2721 = vunpack.c.l.b16 %v1381
        %v2722 = vunpack.c.h.b16 %v1381
        %v2723 = vunpack.c.l.b16 %v1382
        %v2724 = vunpack.c.h.b16 %v1382
        %v2725 = vunpack.c.l.b16 %v1383
        %v2726 = vunpack.c.h.b16 %v1383
        %v2727 = vunpack.c.l.b16 %v1384
        %v2728 = vunpack.c.h.b16 %v1384
        %v2729 = vunpack.c.l.b16 %v1385
        %v2730 = vunpack.c.h.b16 %v1385
        %v2731 = vunpack.c.l.b16 %v1386
        %v2732 = vunpack.c.h.b16 %v1386
        %v2733 = vunpack.c.l.b16 %v1387
        %v2734 = vunpack.c.h.b16 %v1387
        %v2735 = vunpack.c.l.b16 %v1388
        %v2736 = vunpack.c.h.b16 %v1388
        %v2737 = vunpack.c.l.b16 %v1389
        %v2738 = vunpack.c.h.b16 %v1389
        %v2739 = vunpack.c.l.b16 %v1390
        %v2740 = vunpack.c.h.b16 %v1390
        %v2741 = vunpack.c.l.b16 %v1391
        %v2742 = vunpack.c.h.b16 %v1391
        %v2743 = vunpack.c.l.b16 %v1392
        %v2744 = vunpack.c.h.b16 %v1392
        %v2745 = vunpack.c.l.b16 %v1393
        %v2746 = vunpack.c.h.b16 %v1393
        %v2747 = vunpack.c.l.b16 %v1394
        %v2748 = vunpack.c.h.b16 %v1394
        %v2749 = vunpack.c.l.b16 %v1395
        %v2750 = vunpack.c.h.b16 %v1395
        %v2751 = vunpack.c.l.b16 %v1396
        %v2752 = vunpack.c.h.b16 %v1396
        %v2753 = vunpack.c.l.b16 %v1397
        %v2754 = vunpack.c.h.b16 %v1397
        %v2755 = vunpack.c.l.b16 %v1398
        %v2756 = vunpack.c.h.b16 %v1398
        %v2757 = vunpack.c.l.b16 %v1399
        %v2758 = vunpack.c.h.b16 %v1399
        %v2759 = vunpack.c.l.b16 %v1400
        %v2760 = vunpack.c.h.b16 %v1400
        %v2761 = vunpack.c.l.b16 %v1401
        %v2762 = vunpack.c.h.b16 %v1401
        %v2763 = vunpack.c.l.b16 %v1402
        %v2764 = vunpack.c.h.b16 %v1402
        %v2765 = vunpack.c.l.b16 %v1403
        %v2766 = vunpack.c.h.b16 %v1403
        %v2767 = vunpack.c.l.b16 %v1404
        %v2768 = vunpack.c.h.b16 %v1404
        %v2769 = vunpack.c.l.b16 %v1405
        %v2770 = vunpack.c.h.b16 %v1405
        %v2771 = vunpack.c.l.b16 %v1406
        %v2772 = vunpack.c.h.b16 %v1406
        %v2773 = vunpack.c.l.b16 %v1407
        %v2774 = vunpack.c.h.b16 %v1407
        %v2775 = vunpack.c.l.b16 %v1408
        %v2776 = vunpack.c.h.b16 %v1408
        %v2777 = vunpack.c.l.b16 %v1409
        %v2778 = vunpack.c.h.b16 %v1409
        %v2779 = vunpack.c.l.b16 %v1410
        %v2780 = vunpack.c.h.b16 %v1410
        %v2781 = vunpack.c.l.b16 %v1411
        %v2782 = vunpack.c.h.b16 %v1411
        %v2783 = vunpack.c.l.b16 %v1412
        %v2784 = vunpack.c.h.b16 %v1412
        %v2785 = vunpack.c.l.b16 %v1413
        %v2786 = vunpack.c.h.b16 %v1413
        %v2787 = vunpack.c.l.b16 %v1414
        %v2788 = vunpack.c.h.b16 %v1414
        %v2789 = vunpack.c.l.b16 %v1415
        %v2790 = vunpack.c.h.b16 %v1415
        %v2791 = vunpack.c.l.b16 %v1416
        %v2792 = vunpack.c.h.b16 %v1416
        %v2793 = vunpack.c.l.b16 %v1417
        %v2794 = vunpack.c.h.b16 %v1417
        %v2795 = vunpack.c.l.b16 %v1418
        %v2796 = vunpack.c.h.b16 %v1418
        %v2797 = vunpack.c.l.b16 %v1419
        %v2798 = vunpack.c.h.b16 %v1419
        %v2799 = vunpack.c.l.b16 %v1420
        %v2800 = vunpack.c.h.b16 %v1420
        %v2801 = vunpack.c.l.b16 %v1421
        %v2802 = vunpack.c.h.b16 %v1421
        %v2803 = vunpack.c.l.b16 %v1422
        %v2804 = vunpack.c.h.b16 %v1422
        %v2805 = vunpack.c.l.b16 %v1423
        %v2806 = vunpack.c.h.b16 %v1423
        %v2807 = vunpack.c.l.b16 %v1424
        %v2808 = vunpack.c.h.b16 %v1424
        %v2809 = vunpack.c.l.b16 %v1425
        %v2810 = vunpack.c.h.b16 %v1425
        %v2811 = vunpack.c.l.b16 %v1426
        %v2812 = vunpack.c.h.b16 %v1426
        %v2813 = vunpack.c.l.b16 %v1427
        %v2814 = vunpack.c.h.b16 %v1427
        %v2815 = vunpack.c.l.b16 %v1428
        %v2816 = vunpack.c.h.b16 %v1428
        %v2817 = vunpack.c.l.b16 %v1429
        %v2818 = vunpack.c.h.b16 %v1429
        %v2819 = vunpack.c.l.b16 %v1430
        %v2820 = vunpack.c.h.b16 %v1430
        %v2821 = vunpack.c.l.b16 %v1431
        %v2822 = vunpack.c.h.b16 %v1431
        %v2823 = vunpack.c.l.b16 %v1432
        %v2824 = vunpack.c.h.b16 %v1432
        %v2825 = vunpack.c.l.b16 %v1433
        %v2826 = vunpack.c.h.b16 %v1433
        %v2827 = vunpack.c.l.b16 %v1434
        %v2828 = vunpack.c.h.b16 %v1434
        %v2829 = vunpack.c.l.b16 %v1435
        %v2830 = vunpack.c.h.b16 %v1435
        %v2831 = vunpack.c.l.b16 %v1436
        %v2832 = vunpack.c.h.b16 %v1436
        %v2833 = vunpack.c.l.b16 %v1437
        %v2834 = vunpack.c.h.b16 %v1437
        %v2835 = vunpack.c.l.b16 %v1438
        %v2836 = vunpack.c.h.b16 %v1438
        %v2837 = vunpack.c.l.b16 %v1439
        %v2838 = vunpack.c.h.b16 %v1439
        %v2839 = vunpack.c.l.b16 %v1440
        %v2840 = vunpack.c.h.b16 %v1440
        %v2841 = vunpack.c.l.b16 %v1441
        %v2842 = vunpack.c.h.b16 %v1441
        %v2843 = vunpack.c.l.b16 %v1442
        %v2844 = vunpack.c.h.b16 %v1442
        %v2845 = vunpack.c.l.b16 %v1443
        %v2846 = vunpack.c.h.b16 %v1443
        %v2847 = vunpack.c.l.b16 %v1444
        %v2848 = vunpack.c.h.b16 %v1444
        %v2849 = vunpack.c.l.b16 %v1445
        %v2850 = vunpack.c.h.b16 %v1445
        %v2851 = vunpack.c.l.b16 %v1446
        %v2852 = vunpack.c.h.b16 %v1446
        %v2853 = vunpack.c.l.b16 %v1447
        %v2854 = vunpack.c.h.b16 %v1447
        %v2855 = vunpack.c.l.b16 %v1448
        %v2856 = vunpack.c.h.b16 %v1448
        %v2857 = vunpack.c.l.b16 %v1449
        %v2858 = vunpack.c.h.b16 %v1449
        %v2859 = vunpack.c.l.b16 %v1450
        %v2860 = vunpack.c.h.b16 %v1450
        %v2861 = vunpack.c.l.b16 %v1451
        %v2862 = vunpack.c.h.b16 %v1451
        %v2863 = vunpack.c.l.b16 %v1452
        %v2864 = vunpack.c.h.b16 %v1452
        %v2865 = vunpack.c.l.b16 %v1453
        %v2866 = vunpack.c.h.b16 %v1453
        %v2867 = vunpack.c.l.b16 %v1454
        %v2868 = vunpack.c.h.b16 %v1454
        %v2869 = vunpack.c.l.b16 %v1455
        %v2870 = vunpack.c.h.b16 %v1455
        %v2871 = vunpack.c.l.b16 %v1456
        %v2872 = vunpack.c.h.b16 %v1456
        %v2873 = vunpack.c.l.b16 %v1457
        %v2874 = vunpack.c.h.b16 %v1457
        %v2875 = vunpack.c.l.b16 %v1458
        %v2876 = vunpack.c.h.b16 %v1458
        %v2877 = vunpack.c.l.b16 %v1459
        %v2878 = vunpack.c.h.b16 %v1459
        %v2879 = vunpack.c.l.b16 %v1460
        %v2880 = vunpack.c.h.b16 %v1460
        %v2881 = vunpack.c.l.b16 %v1461
        %v2882 = vunpack.c.h.b16 %v1461
        %v2883 = vunpack.c.l.b16 %v1462
        %v2884 = vunpack.c.h.b16 %v1462
        %v2885 = vunpack.c.l.b16 %v1463
        %v2886 = vunpack.c.h.b16 %v1463
        %v2887 = vunpack.c.l.b16 %v1464
        %v2888 = vunpack.c.h.b16 %v1464
        %v2889 = vunpack.c.l.b16 %v1465
        %v2890 = vunpack.c.h.b16 %v1465
        %v2891 = vunpack.c.l.b16 %v1466
        %v2892 = vunpack.c.h.b16 %v1466
        %v2893 = vunpack.c.l.b16 %v1467
        %v2894 = vunpack.c.h.b16 %v1467
        %v2895 = vunpack.c.l.b16 %v1468
        %v2896 = vunpack.c.h.b16 %v1468
        %v2897 = vunpack.c.l.b16 %v1469
        %v2898 = vunpack.c.h.b16 %v1469
        %v2899 = vunpack.c.l.b16 %v1470
        %v2900 = vunpack.c.h.b16 %v1470
        %v2901 = vunpack.c.l.b16 %v1471
        %v2902 = vunpack.c.h.b16 %v1471
        %v2903 = vunpack.c.l.b16 %v1472
        %v2904 = vunpack.c.h.b16 %v1472
        %v2905 = vunpack.c.l.b16 %v1473
        %v2906 = vunpack.c.h.b16 %v1473
        %v2907 = vunpack.c.l.b16 %v1474
        %v2908 = vunpack.c.h.b16 %v1474
        %v2909 = vunpack.c.l.b16 %v1475
        %v2910 = vunpack.c.h.b16 %v1475
        %v2911 = vunpack.c.l.b16 %v1476
        %v2912 = vunpack.c.h.b16 %v1476
        %v2913 = vunpack.c.l.b16 %v1477
        %v2914 = vunpack.c.h.b16 %v1477
        %v2915 = vunpack.c.l.b16 %v1478
        %v2916 = vunpack.c.h.b16 %v1478
        %v2917 = vunpack.c.l.b16 %v1479
        %v2918 = vunpack.c.h.b16 %v1479
        %v2919 = vunpack.c.l.b16 %v1480
        %v2920 = vunpack.c.h.b16 %v1480
        %v2921 = vunpack.c.l.b16 %v1481
        %v2922 = vunpack.c.h.b16 %v1481
        %v2923 = vunpack.c.l.b16 %v1482
        %v2924 = vunpack.c.h.b16 %v1482
        %v2925 = vunpack.c.l.b16 %v1483
        %v2926 = vunpack.c.h.b16 %v1483
        %v2927 = vunpack.c.l.b16 %v1484
        %v2928 = vunpack.c.h.b16 %v1484
        %v2929 = vunpack.c.l.b16 %v1485
        %v2930 = vunpack.c.h.b16 %v1485
        %v2931 = vunpack.c.l.b16 %v1486
        %v2932 = vunpack.c.h.b16 %v1486
        %v2933 = vunpack.c.l.b16 %v1487
        %v2934 = vunpack.c.h.b16 %v1487
        %v2935 = vunpack.c.l.b16 %v1488
        %v2936 = vunpack.c.h.b16 %v1488
        %v2937 = vunpack.c.l.b16 %v1489
        %v2938 = vunpack.c.h.b16 %v1489
        %v2939 = vunpack.c.l.b16 %v1490
        %v2940 = vunpack.c.h.b16 %v1490
        %v2941 = vunpack.c.l.b16 %v1491
        %v2942 = vunpack.c.h.b16 %v1491
        %v2943 = vunpack.c.l.b16 %v1492
        %v2944 = vunpack.c.h.b16 %v1492
        %v2945 = vunpack.c.l.b16 %v1493
        %v2946 = vunpack.c.h.b16 %v1493
        %v2947 = vunpack.c.l.b16 %v1494
        %v2948 = vunpack.c.h.b16 %v1494
        %v2949 = vunpack.c.l.b16 %v1495
        %v2950 = vunpack.c.h.b16 %v1495
        %v2951 = vunpack.c.l.b16 %v1496
        %v2952 = vunpack.c.h.b16 %v1496
        %v2953 = vunpack.c.l.b16 %v1497
        %v2954 = vunpack.c.h.b16 %v1497
        %v2955 = vunpack.c.l.b16 %v1498
        %v2956 = vunpack.c.h.b16 %v1498
        %v2957 = vunpack.c.l.b16 %v1499
        %v2958 = vunpack.c.h.b16 %v1499
        %v2959 = vunpack.c.l.b16 %v1500
        %v2960 = vunpack.c.h.b16 %v1500
        %v2961 = vunpack.c.l.b16 %v1501
        %v2962 = vunpack.c.h.b16 %v1501
        %v2963 = vunpack.c.l.b16 %v1502
        %v2964 = vunpack.c.h.b16 %v1502
        %v2965 = vunpack.c.l.b16 %v1503
        %v2966 = vunpack.c.h.b16 %v1503
        %v2967 = vunpack.c.l.b16 %v1504
        %v2968 = vunpack.c.h.b16 %v1504
        %v2969 = vunpack.c.l.b16 %v1505
        %v2970 = vunpack.c.h.b16 %v1505
        %v2971 = vunpack.c.l.b16 %v1506
        %v2972 = vunpack.c.h.b16 %v1506
        %v2973 = vunpack.c.l.b16 %v1507
        %v2974 = vunpack.c.h.b16 %v1507
        %v2975 = vunpack.c.l.b16 %v1508
        %v2976 = vunpack.c.h.b16 %v1508
        %v2977 = vunpack.c.l.b16 %v1509
        %v2978 = vunpack.c.h.b16 %v1509
        %v2979 = vunpack.c.l.b16 %v1510
        %v2980 = vunpack.c.h.b16 %v1510
        %v2981 = vunpack.c.l.b16 %v1511
        %v2982 = vunpack.c.h.b16 %v1511
        %v2983 = vunpack.c.l.b16 %v1512
        %v2984 = vunpack.c.h.b16 %v1512
        %v2985 = vunpack.c.l.b16 %v1513
        %v2986 = vunpack.c.h.b16 %v1513
        %v2987 = vunpack.c.l.b16 %v1514
        %v2988 = vunpack.c.h.b16 %v1514
        %v2989 = vunpack.c.l.b16 %v1515
        %v2990 = vunpack.c.h.b16 %v1515
        %v2991 = vunpack.c.l.b16 %v1516
        %v2992 = vunpack.c.h.b16 %v1516
        %v2993 = vunpack.c.l.b16 %v1517
        %v2994 = vunpack.c.h.b16 %v1517
        %v2995 = vunpack.c.l.b16 %v1518
        %v2996 = vunpack.c.h.b16 %v1518
        %v2997 = vunpack.c.l.b16 %v1519
        %v2998 = vunpack.c.h.b16 %v1519
        %v2999 = vunpack.c.l.b16 %v1520
        %v3000 = vunpack.c.h.b16 %v1520
        %v3001 = vunpack.c.l.b16 %v1521
        %v3002 = vunpack.c.h.b16 %v1521
        %v3003 = vunpack.c.l.b16 %v1522
        %v3004 = vunpack.c.h.b16 %v1522
        %v3005 = vunpack.c.l.b16 %v1523
        %v3006 = vunpack.c.h.b16 %v1523
        %v3007 = vunpack.c.l.b16 %v1524
        %v3008 = vunpack.c.h.b16 %v1524
        %v3009 = vunpack.c.l.b16 %v1525
        %v3010 = vunpack.c.h.b16 %v1525
        %v3011 = vunpack.c.l.b16 %v1526
        %v3012 = vunpack.c.h.b16 %v1526
        %v3013 = vunpack.c.l.b16 %v1527
        %v3014 = vunpack.c.h.b16 %v1527
        %v3015 = vunpack.c.l.b16 %v1528
        %v3016 = vunpack.c.h.b16 %v1528
        %v3017 = vunpack.c.l.b16 %v1529
        %v3018 = vunpack.c.h.b16 %v1529
        %v3019 = vunpack.c.l.b16 %v1530
        %v3020 = vunpack.c.h.b16 %v1530
        %v3021 = vunpack.c.l.b16 %v1531
        %v3022 = vunpack.c.h.b16 %v1531
        %v3023 = vunpack.c.l.b16 %v1532
        %v3024 = vunpack.c.h.b16 %v1532
        %v3025 = vunpack.c.l.b16 %v1533
        %v3026 = vunpack.c.h.b16 %v1533
        %v3027 = vunpack.c.l.b16 %v1534
        %v3028 = vunpack.c.h.b16 %v1534
        %v3029 = vunpack.c.l.b16 %v1535
        %v3030 = vunpack.c.h.b16 %v1535
        %v3031 = vunpack.c.l.b16 %v1536
        %v3032 = vunpack.c.h.b16 %v1536
        %v3033 = vunpack.c.l.b16 %v1537
        %v3034 = vunpack.c.h.b16 %v1537
        %v3035 = vunpack.c.l.b16 %v1538
        %v3036 = vunpack.c.h.b16 %v1538
        %v3037 = vunpack.c.l.b16 %v1539
        %v3038 = vunpack.c.h.b16 %v1539
        %v3039 = vunpack.c.l.b16 %v1540
        %v3040 = vunpack.c.h.b16 %v1540
        %v3041 = vunpack.c.l.b16 %v1541
        %v3042 = vunpack.c.h.b16 %v1541
        %v3043 = vunpack.c.l.b16 %v1542
        %v3044 = vunpack.c.h.b16 %v1542
        %v3045 = vunpack.c.l.b16 %v1543
        %v3046 = vunpack.c.h.b16 %v1543
        %v3047 = vunpack.c.l.b16 %v1544
        %v3048 = vunpack.c.h.b16 %v1544
        %v3049 = vunpack.c.l.b16 %v1545
        %v3050 = vunpack.c.h.b16 %v1545
        %v3051 = vunpack.c.l.b16 %v1546
        %v3052 = vunpack.c.h.b16 %v1546
        %v3053 = vunpack.c.l.b16 %v1547
        %v3054 = vunpack.c.h.b16 %v1547
        %v3055 = vunpack.c.l.b16 %v1548
        %v3056 = vunpack.c.h.b16 %v1548
        %v3057 = vunpack.c.l.b16 %v1549
        %v3058 = vunpack.c.h.b16 %v1549
        %v3059 = vunpack.c.l.b16 %v1550
        %v3060 = vunpack.c.h.b16 %v1550
        %v3061 = vunpack.c.l.b16 %v1551
        %v3062 = vunpack.c.h.b16 %v1551
        %v3063 = vunpack.c.l.b16 %v1552
        %v3064 = vunpack.c.h.b16 %v1552
        %v3065 = vunpack.c.l.b16 %v1553
        %v3066 = vunpack.c.h.b16 %v1553
        %v3067 = vunpack.c.l.b16 %v1554
        %v3068 = vunpack.c.h.b16 %v1554
        %v3069 = vunpack.c.l.b16 %v1555
        %v3070 = vunpack.c.h.b16 %v1555
        %v3071 = vunpack.c.l.b16 %v1556
        %v3072 = vunpack.c.h.b16 %v1556
        %v3073 = vunpack.c.l.b16 %v1557
        %v3074 = vunpack.c.h.b16 %v1557
        %v3075 = vunpack.c.l.b16 %v1558
        %v3076 = vunpack.c.h.b16 %v1558
        %v3077 = vunpack.c.l.b16 %v1559
        %v3078 = vunpack.c.h.b16 %v1559
        %v3079 = vunpack.c.l.b16 %v1560
        %v3080 = vunpack.c.h.b16 %v1560
        %v3081 = vunpack.c.l.b16 %v1561
        %v3082 = vunpack.c.h.b16 %v1561
        %v3083 = vunpack.c.l.b16 %v1562
        %v3084 = vunpack.c.h.b16 %v1562
        %v3085 = vunpack.c.l.b16 %v1563
        %v3086 = vunpack.c.h.b16 %v1563
        %v3087 = vunpack.c.l.b16 %v1564
        %v3088 = vunpack.c.h.b16 %v1564
        %v3089 = vunpack.c.l.b16 %v1565
        %v3090 = vunpack.c.h.b16 %v1565
        %v3091 = vunpack.c.l.b16 %v1566
        %v3092 = vunpack.c.h.b16 %v1566
        %v3093 = vunpack.c.l.b16 %v1567
        %v3094 = vunpack.c.h.b16 %v1567
        %v3095 = vunpack.c.l.b16 %v1568
        %v3096 = vunpack.c.h.b16 %v1568
        %v3097 = vunpack.c.l.b16 %v1569
        %v3098 = vunpack.c.h.b16 %v1569
        %v3099 = vunpack.c.l.b16 %v1570
        %v3100 = vunpack.c.h.b16 %v1570
        %v3101 = vunpack.c.l.b16 %v1571
        %v3102 = vunpack.c.h.b16 %v1571
        %v3103 = vunpack.c.l.b16 %v1572
        %v3104 = vunpack.c.h.b16 %v1572
        %v3105 = vunpack.c.l.b16 %v1573
        %v3106 = vunpack.c.h.b16 %v1573
        %v3107 = vunpack.c.l.b16 %v1574
        %v3108 = vunpack.c.h.b16 %v1574
        %v3109 = vunpack.c.l.b16 %v1575
        %v3110 = vunpack.c.h.b16 %v1575
        %v3111 = vunpack.c.l.b16 %v1576
        %v3112 = vunpack.c.h.b16 %v1576
        %v3113 = vunpack.c.l.b16 %v1577
        %v3114 = vunpack.c.h.b16 %v1577
        %v3115 = vunpack.c.l.b16 %v1578
        %v3116 = vunpack.c.h.b16 %v1578
        %v3117 = vunpack.c.l.b16 %v1579
        %v3118 = vunpack.c.h.b16 %v1579
        %v3119 = vunpack.c.l.b16 %v1580
        %v3120 = vunpack.c.h.b16 %v1580
        %v3121 = vunpack.c.l.b16 %v1581
        %v3122 = vunpack.c.h.b16 %v1581
        %v3123 = vunpack.c.l.b16 %v1582
        %v3124 = vunpack.c.h.b16 %v1582
        %v3125 = vunpack.c.l.b16 %v1583
        %v3126 = vunpack.c.h.b16 %v1583
        %v3127 = vunpack.c.l.b16 %v1584
        %v3128 = vunpack.c.h.b16 %v1584
        %v3129 = vunpack.c.l.b16 %v1585
        %v3130 = vunpack.c.h.b16 %v1585
        %v3131 = vunpack.c.l.b16 %v1586
        %v3132 = vunpack.c.h.b16 %v1586
        %v3133 = vunpack.c.l.b16 %v1587
        %v3134 = vunpack.c.h.b16 %v1587
        %v3135 = vunpack.c.l.b16 %v1588
        %v3136 = vunpack.c.h.b16 %v1588
        %v3137 = vunpack.c.l.b16 %v1589
        %v3138 = vunpack.c.h.b16 %v1589
        %v3139 = vunpack.c.l.b16 %v1590
        %v3140 = vunpack.c.h.b16 %v1590
        %v3141 = vpack.c.b16 %v2133, %v2117
        %v3142 = vpack.c.b16 %v2134, %v2118
        %v3143 = vpack.c.b16 %v2135, %v2119
        %v3144 = vpack.c.b16 %v2136, %v2120
        %v3145 = vpack.c.b16 %v2137, %v2121
        %v3146 = vpack.c.b16 %v2138, %v2122
        %v3147 = vpack.c.b16 %v2139, %v2123
        %v3148 = vpack.c.b16 %v2140, %v2124
        %v3149 = vpack.c.b16 %v2141, %v2125
        %v3150 = vpack.c.b16 %v2142, %v2126
        %v3151 = vpack.c.b16 %v2143, %v2127
        %v3152 = vpack.c.b16 %v2144, %v2128
        %v3153 = vpack.c.b16 %v2145, %v2129
        %v3154 = vpack.c.b16 %v2146, %v2130
        %v3155 = vpack.c.b16 %v2147, %v2131
        %v3156 = vpack.c.b16 %v2148, %v2132
        %v3157 = vpack.c.b16 %v2165, %v2149
        %v3158 = vpack.c.b16 %v2166, %v2150
        %v3159 = vpack.c.b16 %v2167, %v2151
        %v3160 = vpack.c.b16 %v2168, %v2152
        %v3161 = vpack.c.b16 %v2169, %v2153
        %v3162 = vpack.c.b16 %v2170, %v2154
        %v3163 = vpack.c.b16 %v2171, %v2155
        %v3164 = vpack.c.b16 %v2172, %v2156
        %v3165 = vpack.c.b16 %v2173, %v2157
        %v3166 = vpack.c.b16 %v2174, %v2158
        %v3167 = vpack.c.b16 %v2175, %v2159
        %v3168 = vpack.c.b16 %v2176, %v2160
        %v3169 = vpack.c.b16 %v2177, %v2161
        %v3170 = vpack.c.b16 %v2178, %v2162
        %v3171 = vpack.c.b16 %v2179, %v2163
        %v3172 = vpack.c.b16 %v2180, %v2164
        %v3173 = vpack.c.b16 %v2197, %v2181
        %v3174 = vpack.c.b16 %v2198, %v2182
        %v3175 = vpack.c.b16 %v2199, %v2183
        %v3176 = vpack.c.b16 %v2200, %v2184
        %v3177 = vpack.c.b16 %v2201, %v2185
        %v3178 = vpack.c.b16 %v2202, %v2186
        %v3179 = vpack.c.b16 %v2203, %v2187
        %v3180 = vpack.c.b16 %v2204, %v2188
        %v3181 = vpack.c.b16 %v2205, %v2189
        %v3182 = vpack.c.b16 %v2206, %v2190
        %v3183 = vpack.c.b16 %v2207, %v2191
        %v3184 = vpack.c.b16 %v2208, %v2192
        %v3185 = vpack.c.b16 %v2209, %v2193
        %v3186 = vpack.c.b16 %v2210, %v2194
        %v3187 = vpack.c.b16 %v2211, %v2195
        %v3188 = vpack.c.b16 %v2212, %v2196
        %v3189 = vpack.c.b16 %v2229, %v2213
        %v3190 = vpack.c.b16 %v2230, %v2214
        %v3191 = vpack.c.b16 %v2231, %v2215
        %v3192 = vpack.c.b16 %v2232, %v2216
        %v3193 = vpack.c.b16 %v2233, %v2217
        %v3194 = vpack.c.b16 %v2234, %v2218
        %v3195 = vpack.c.b16 %v2235, %v2219
        %v3196 = vpack.c.b16 %v2236, %v2220
        %v3197 = vpack.c.b16 %v2237, %v2221
        %v3198 = vpack.c.b16 %v2238, %v2222
        %v3199 = vpack.c.b16 %v2239, %v2223
        %v3200 = vpack.c.b16 %v2240, %v2224
        %v3201 = vpack.c.b16 %v2241, %v2225
        %v3202 = vpack.c.b16 %v2242, %v2226
        %v3203 = vpack.c.b16 %v2243, %v2227
        %v3204 = vpack.c.b16 %v2244, %v2228
        %v3205 = vpack.c.b16 %v2261, %v2245
        %v3206 = vpack.c.b16 %v2262, %v2246
        %v3207 = vpack.c.b16 %v2263, %v2247
        %v3208 = vpack.c.b16 %v2264, %v2248
        %v3209 = vpack.c.b16 %v2265, %v2249
        %v3210 = vpack.c.b16 %v2266, %v2250
        %v3211 = vpack.c.b16 %v2267, %v2251
        %v3212 = vpack.c.b16 %v2268, %v2252
        %v3213 = vpack.c.b16 %v2269, %v2253
        %v3214 = vpack.c.b16 %v2270, %v2254
        %v3215 = vpack.c.b16 %v2271, %v2255
        %v3216 = vpack.c.b16 %v2272, %v2256
        %v3217 = vpack.c.b16 %v2273, %v2257
        %v3218 = vpack.c.b16 %v2274, %v2258
        %v3219 = vpack.c.b16 %v2275, %v2259
        %v3220 = vpack.c.b16 %v2276, %v2260
        %v3221 = vpack.c.b16 %v2293, %v2277
        %v3222 = vpack.c.b16 %v2294, %v2278
        %v3223 = vpack.c.b16 %v2295, %v2279
        %v3224 = vpack.c.b16 %v2296, %v2280
        %v3225 = vpack.c.b16 %v2297, %v2281
        %v3226 = vpack.c.b16 %v2298, %v2282
        %v3227 = vpack.c.b16 %v2299, %v2283
        %v3228 = vpack.c.b16 %v2300, %v2284
        %v3229 = vpack.c.b16 %v2301, %v2285
        %v3230 = vpack.c.b16 %v2302, %v2286
        %v3231 = vpack.c.b16 %v2303, %v2287
        %v3232 = vpack.c.b16 %v2304, %v2288
        %v3233 = vpack.c.b16 %v2305, %v2289
        %v3234 = vpack.c.b16 %v2306, %v2290
        %v3235 = vpack.c.b16 %v2307, %v2291
        %v3236 = vpack.c.b16 %v2308, %v2292
        %v3237 = vpack.c.b16 %v2325, %v2309
        %v3238 = vpack.c.b16 %v2326, %v2310
        %v3239 = vpack.c.b16 %v2327, %v2311
        %v3240 = vpack.c.b16 %v2328, %v2312
        %v3241 = vpack.c.b16 %v2329, %v2313
        %v3242 = vpack.c.b16 %v2330, %v2314
        %v3243 = vpack.c.b16 %v2331, %v2315
        %v3244 = vpack.c.b16 %v2332, %v2316
        %v3245 = vpack.c.b16 %v2333, %v2317
        %v3246 = vpack.c.b16 %v2334, %v2318
        %v3247 = vpack.c.b16 %v2335, %v2319
        %v3248 = vpack.c.b16 %v2336, %v2320
        %v3249 = vpack.c.b16 %v2337, %v2321
        %v3250 = vpack.c.b16 %v2338, %v2322
        %v3251 = vpack.c.b16 %v2339, %v2323
        %v3252 = vpack.c.b16 %v2340, %v2324
        %v3253 = vpack.c.b16 %v2357, %v2341
        %v3254 = vpack.c.b16 %v2358, %v2342
        %v3255 = vpack.c.b16 %v2359, %v2343
        %v3256 = vpack.c.b16 %v2360, %v2344
        %v3257 = vpack.c.b16 %v2361, %v2345
        %v3258 = vpack.c.b16 %v2362, %v2346
        %v3259 = vpack.c.b16 %v2363, %v2347
        %v3260 = vpack.c.b16 %v2364, %v2348
        %v3261 = vpack.c.b16 %v2365, %v2349
        %v3262 = vpack.c.b16 %v2366, %v2350
        %v3263 = vpack.c.b16 %v2367, %v2351
        %v3264 = vpack.c.b16 %v2368, %v2352
        %v3265 = vpack.c.b16 %v2369, %v2353
        %v3266 = vpack.c.b16 %v2370, %v2354
        %v3267 = vpack.c.b16 %v2371, %v2355
        %v3268 = vpack.c.b16 %v2372, %v2356
        %v3269 = vpack.c.b16 %v2389, %v2373
        %v3270 = vpack.c.b16 %v2390, %v2374
        %v3271 = vpack.c.b16 %v2391, %v2375
        %v3272 = vpack.c.b16 %v2392, %v2376
        %v3273 = vpack.c.b16 %v2393, %v2377
        %v3274 = vpack.c.b16 %v2394, %v2378
        %v3275 = vpack.c.b16 %v2395, %v2379
        %v3276 = vpack.c.b16 %v2396, %v2380
        %v3277 = vpack.c.b16 %v2397, %v2381
        %v3278 = vpack.c.b16 %v2398, %v2382
        %v3279 = vpack.c.b16 %v2399, %v2383
        %v3280 = vpack.c.b16 %v2400, %v2384
        %v3281 = vpack.c.b16 %v2401, %v2385
        %v3282 = vpack.c.b16 %v2402, %v2386
        %v3283 = vpack.c.b16 %v2403, %v2387
        %v3284 = vpack.c.b16 %v2404, %v2388
        %v3285 = vpack.c.b16 %v2421, %v2405
        %v3286 = vpack.c.b16 %v2422, %v2406
        %v3287 = vpack.c.b16 %v2423, %v2407
        %v3288 = vpack.c.b16 %v2424, %v2408
        %v3289 = vpack.c.b16 %v2425, %v2409
        %v3290 = vpack.c.b16 %v2426, %v2410
        %v3291 = vpack.c.b16 %v2427, %v2411
        %v3292 = vpack.c.b16 %v2428, %v2412
        %v3293 = vpack.c.b16 %v2429, %v2413
        %v3294 = vpack.c.b16 %v2430, %v2414
        %v3295 = vpack.c.b16 %v2431, %v2415
        %v3296 = vpack.c.b16 %v2432, %v2416
        %v3297 = vpack.c.b16 %v2433, %v2417
        %v3298 = vpack.c.b16 %v2434, %v2418
        %v3299 = vpack.c.b16 %v2435, %v2419
        %v3300 = vpack.c.b16 %v2436, %v2420
        %v3301 = vpack.c.b16 %v2453, %v2437
        %v3302 = vpack.c.b16 %v2454, %v2438
        %v3303 = vpack.c.b16 %v2455, %v2439
        %v3304 = vpack.c.b16 %v2456, %v2440
        %v3305 = vpack.c.b16 %v2457, %v2441
        %v3306 = vpack.c.b16 %v2458, %v2442
        %v3307 = vpack.c.b16 %v2459, %v2443
        %v3308 = vpack.c.b16 %v2460, %v2444
        %v3309 = vpack.c.b16 %v2461, %v2445
        %v3310 = vpack.c.b16 %v2462, %v2446
        %v3311 = vpack.c.b16 %v2463, %v2447
        %v3312 = vpack.c.b16 %v2464, %v2448
        %v3313 = vpack.c.b16 %v2465, %v2449
        %v3314 = vpack.c.b16 %v2466, %v2450
        %v3315 = vpack.c.b16 %v2467, %v2451
        %v3316 = vpack.c.b16 %v2468, %v2452
        %v3317 = vpack.c.b16 %v2485, %v2469
        %v3318 = vpack.c.b16 %v2486, %v2470
        %v3319 = vpack.c.b16 %v2487, %v2471
        %v3320 = vpack.c.b16 %v2488, %v2472
        %v3321 = vpack.c.b16 %v2489, %v2473
        %v3322 = vpack.c.b16 %v2490, %v2474
        %v3323 = vpack.c.b16 %v2491, %v2475
        %v3324 = vpack.c.b16 %v2492, %v2476
        %v3325 = vpack.c.b16 %v2493, %v2477
        %v3326 = vpack.c.b16 %v2494, %v2478
        %v3327 = vpack.c.b16 %v2495, %v2479
        %v3328 = vpack.c.b16 %v2496, %v2480
        %v3329 = vpack.c.b16 %v2497, %v2481
        %v3330 = vpack.c.b16 %v2498, %v2482
        %v3331 = vpack.c.b16 %v2499, %v2483
        %v3332 = vpack.c.b16 %v2500, %v2484
        %v3333 = vpack.c.b16 %v2517, %v2501
        %v3334 = vpack.c.b16 %v2518, %v2502
        %v3335 = vpack.c.b16 %v2519, %v2503
        %v3336 = vpack.c.b16 %v2520, %v2504
        %v3337 = vpack.c.b16 %v2521, %v2505
        %v3338 = vpack.c.b16 %v2522, %v2506
        %v3339 = vpack.c.b16 %v2523, %v2507
        %v3340 = vpack.c.b16 %v2524, %v2508
        %v3341 = vpack.c.b16 %v2525, %v2509
        %v3342 = vpack.c.b16 %v2526, %v2510
        %v3343 = vpack.c.b16 %v2527, %v2511
        %v3344 = vpack.c.b16 %v2528, %v2512
        %v3345 = vpack.c.b16 %v2529, %v2513
        %v3346 = vpack.c.b16 %v2530, %v2514
        %v3347 = vpack.c.b16 %v2531, %v2515
        %v3348 = vpack.c.b16 %v2532, %v2516
        %v3349 = vpack.c.b16 %v2549, %v2533
        %v3350 = vpack.c.b16 %v2550, %v2534
        %v3351 = vpack.c.b16 %v2551, %v2535
        %v3352 = vpack.c.b16 %v2552, %v2536
        %v3353 = vpack.c.b16 %v2553, %v2537
        %v3354 = vpack.c.b16 %v2554, %v2538
        %v3355 = vpack.c.b16 %v2555, %v2539
        %v3356 = vpack.c.b16 %v2556, %v2540
        %v3357 = vpack.c.b16 %v2557, %v2541
        %v3358 = vpack.c.b16 %v2558, %v2542
        %v3359 = vpack.c.b16 %v2559, %v2543
        %v3360 = vpack.c.b16 %v2560, %v2544
        %v3361 = vpack.c.b16 %v2561, %v2545
        %v3362 = vpack.c.b16 %v2562, %v2546
        %v3363 = vpack.c.b16 %v2563, %v2547
        %v3364 = vpack.c.b16 %v2564, %v2548
        %v3365 = vpack.c.b16 %v2581, %v2565
        %v3366 = vpack.c.b16 %v2582, %v2566
        %v3367 = vpack.c.b16 %v2583, %v2567
        %v3368 = vpack.c.b16 %v2584, %v2568
        %v3369 = vpack.c.b16 %v2585, %v2569
        %v3370 = vpack.c.b16 %v2586, %v2570
        %v3371 = vpack.c.b16 %v2587, %v2571
        %v3372 = vpack.c.b16 %v2588, %v2572
        %v3373 = vpack.c.b16 %v2589, %v2573
        %v3374 = vpack.c.b16 %v2590, %v2574
        %v3375 = vpack.c.b16 %v2591, %v2575
        %v3376 = vpack.c.b16 %v2592, %v2576
        %v3377 = vpack.c.b16 %v2593, %v2577
        %v3378 = vpack.c.b16 %v2594, %v2578
        %v3379 = vpack.c.b16 %v2595, %v2579
        %v3380 = vpack.c.b16 %v2596, %v2580
        %v3381 = vpack.c.b16 %v2613, %v2597
        %v3382 = vpack.c.b16 %v2614, %v2598
        %v3383 = vpack.c.b16 %v2615, %v2599
        %v3384 = vpack.c.b16 %v2616, %v2600
        %v3385 = vpack.c.b16 %v2617, %v2601
        %v3386 = vpack.c.b16 %v2618, %v2602
        %v3387 = vpack.c.b16 %v2619, %v2603
        %v3388 = vpack.c.b16 %v2620, %v2604
        %v3389 = vpack.c.b16 %v2621, %v2605
        %v3390 = vpack.c.b16 %v2622, %v2606
        %v3391 = vpack.c.b16 %v2623, %v2607
        %v3392 = vpack.c.b16 %v2624, %v2608
        %v3393 = vpack.c.b16 %v2625, %v2609
        %v3394 = vpack.c.b16 %v2626, %v2610
        %v3395 = vpack.c.b16 %v2627, %v2611
        %v3396 = vpack.c.b16 %v2628, %v2612
        %v3397 = vpack.c.b16 %v2645, %v2629
        %v3398 = vpack.c.b16 %v2646, %v2630
        %v3399 = vpack.c.b16 %v2647, %v2631
        %v3400 = vpack.c.b16 %v2648, %v2632
        %v3401 = vpack.c.b16 %v2649, %v2633
        %v3402 = vpack.c.b16 %v2650, %v2634
        %v3403 = vpack.c.b16 %v2651, %v2635
        %v3404 = vpack.c.b16 %v2652, %v2636
        %v3405 = vpack.c.b16 %v2653, %v2637
        %v3406 = vpack.c.b16 %v2654, %v2638
        %v3407 = vpack.c.b16 %v2655, %v2639
        %v3408 = vpack.c.b16 %v2656, %v2640
        %v3409 = vpack.c.b16 %v2657, %v2641
        %v3410 = vpack.c.b16 %v2658, %v2642
        %v3411 = vpack.c.b16 %v2659, %v2643
        %v3412 = vpack.c.b16 %v2660, %v2644
        %v3413 = vpack.c.b16 %v2677, %v2661
        %v3414 = vpack.c.b16 %v2678, %v2662
        %v3415 = vpack.c.b16 %v2679, %v2663
        %v3416 = vpack.c.b16 %v2680, %v2664
        %v3417 = vpack.c.b16 %v2681, %v2665
        %v3418 = vpack.c.b16 %v2682, %v2666
        %v3419 = vpack.c.b16 %v2683, %v2667
        %v3420 = vpack.c.b16 %v2684, %v2668
        %v3421 = vpack.c.b16 %v2685, %v2669
        %v3422 = vpack.c.b16 %v2686, %v2670
        %v3423 = vpack.c.b16 %v2687, %v2671
        %v3424 = vpack.c.b16 %v2688, %v2672
        %v3425 = vpack.c.b16 %v2689, %v2673
        %v3426 = vpack.c.b16 %v2690, %v2674
        %v3427 = vpack.c.b16 %v2691, %v2675
        %v3428 = vpack.c.b16 %v2692, %v2676
        %v3429 = vpack.c.b16 %v2709, %v2693
        %v3430 = vpack.c.b16 %v2710, %v2694
        %v3431 = vpack.c.b16 %v2711, %v2695
        %v3432 = vpack.c.b16 %v2712, %v2696
        %v3433 = vpack.c.b16 %v2713, %v2697
        %v3434 = vpack.c.b16 %v2714, %v2698
        %v3435 = vpack.c.b16 %v2715, %v2699
        %v3436 = vpack.c.b16 %v2716, %v2700
        %v3437 = vpack.c.b16 %v2717, %v2701
        %v3438 = vpack.c.b16 %v2718, %v2702
        %v3439 = vpack.c.b16 %v2719, %v2703
        %v3440 = vpack.c.b16 %v2720, %v2704
        %v3441 = vpack.c.b16 %v2721, %v2705
        %v3442 = vpack.c.b16 %v2722, %v2706
        %v3443 = vpack.c.b16 %v2723, %v2707
        %v3444 = vpack.c.b16 %v2724, %v2708
        %v3445 = vpack.c.b16 %v2741, %v2725
        %v3446 = vpack.c.b16 %v2742, %v2726
        %v3447 = vpack.c.b16 %v2743, %v2727
        %v3448 = vpack.c.b16 %v2744, %v2728
        %v3449 = vpack.c.b16 %v2745, %v2729
        %v3450 = vpack.c.b16 %v2746, %v2730
        %v3451 = vpack.c.b16 %v2747, %v2731
        %v3452 = vpack.c.b16 %v2748, %v2732
        %v3453 = vpack.c.b16 %v2749, %v2733
        %v3454 = vpack.c.b16 %v2750, %v2734
        %v3455 = vpack.c.b16 %v2751, %v2735
        %v3456 = vpack.c.b16 %v2752, %v2736
        %v3457 = vpack.c.b16 %v2753, %v2737
        %v3458 = vpack.c.b16 %v2754, %v2738
        %v3459 = vpack.c.b16 %v2755, %v2739
        %v3460 = vpack.c.b16 %v2756, %v2740
        %v3461 = vpack.c.b16 %v2773, %v2757
        %v3462 = vpack.c.b16 %v2774, %v2758
        %v3463 = vpack.c.b16 %v2775, %v2759
        %v3464 = vpack.c.b16 %v2776, %v2760
        %v3465 = vpack.c.b16 %v2777, %v2761
        %v3466 = vpack.c.b16 %v2778, %v2762
        %v3467 = vpack.c.b16 %v2779, %v2763
        %v3468 = vpack.c.b16 %v2780, %v2764
        %v3469 = vpack.c.b16 %v2781, %v2765
        %v3470 = vpack.c.b16 %v2782, %v2766
        %v3471 = vpack.c.b16 %v2783, %v2767
        %v3472 = vpack.c.b16 %v2784, %v2768
        %v3473 = vpack.c.b16 %v2785, %v2769
        %v3474 = vpack.c.b16 %v2786, %v2770
        %v3475 = vpack.c.b16 %v2787, %v2771
        %v3476 = vpack.c.b16 %v2788, %v2772
        %v3477 = vpack.c.b16 %v2805, %v2789
        %v3478 = vpack.c.b16 %v2806, %v2790
        %v3479 = vpack.c.b16 %v2807, %v2791
        %v3480 = vpack.c.b16 %v2808, %v2792
        %v3481 = vpack.c.b16 %v2809, %v2793
        %v3482 = vpack.c.b16 %v2810, %v2794
        %v3483 = vpack.c.b16 %v2811, %v2795
        %v3484 = vpack.c.b16 %v2812, %v2796
        %v3485 = vpack.c.b16 %v2813, %v2797
        %v3486 = vpack.c.b16 %v2814, %v2798
        %v3487 = vpack.c.b16 %v2815, %v2799
        %v3488 = vpack.c.b16 %v2816, %v2800
        %v3489 = vpack.c.b16 %v2817, %v2801
        %v3490 = vpack.c.b16 %v2818, %v2802
        %v3491 = vpack.c.b16 %v2819, %v2803
        %v3492 = vpack.c.b16 %v2820, %v2804
        %v3493 = vpack.c.b16 %v2837, %v2821
        %v3494 = vpack.c.b16 %v2838, %v2822
        %v3495 = vpack.c.b16 %v2839, %v2823
        %v3496 = vpack.c.b16 %v2840, %v2824
        %v3497 = vpack.c.b16 %v2841, %v2825
        %v3498 = vpack.c.b16 %v2842, %v2826
        %v3499 = vpack.c.b16 %v2843, %v2827
        %v3500 = vpack.c.b16 %v2844, %v2828
        %v3501 = vpack.c.b16 %v2845, %v2829
        %v3502 = vpack.c.b16 %v2846, %v2830
        %v3503 = vpack.c.b16 %v2847, %v2831
        %v3504 = vpack.c.b16 %v2848, %v2832
        %v3505 = vpack.c.b16 %v2849, %v2833
        %v3506 = vpack.c.b16 %v2850, %v2834
        %v3507 = vpack.c.b16 %v2851, %v2835
        %v3508 = vpack.c.b16 %v2852, %v2836
        %v3509 = vpack.c.b16 %v2869, %v2853
        %v3510 = vpack.c.b16 %v2870, %v2854
        %v3511 = vpack.c.b16 %v2871, %v2855
        %v3512 = vpack.c.b16 %v2872, %v2856
        %v3513 = vpack.c.b16 %v2873, %v2857
        %v3514 = vpack.c.b16 %v2874, %v2858
        %v3515 = vpack.c.b16 %v2875, %v2859
        %v3516 = vpack.c.b16 %v2876, %v2860
        %v3517 = vpack.c.b16 %v2877, %v2861
        %v3518 = vpack.c.b16 %v2878, %v2862
        %v3519 = vpack.c.b16 %v2879, %v2863
        %v3520 = vpack.c.b16 %v2880, %v2864
        %v3521 = vpack.c.b16 %v2881, %v2865
        %v3522 = vpack.c.b16 %v2882, %v2866
        %v3523 = vpack.c.b16 %v2883, %v2867
        %v3524 = vpack.c.b16 %v2884, %v2868
        %v3525 = vpack.c.b16 %v2901, %v2885
        %v3526 = vpack.c.b16 %v2902, %v2886
        %v3527 = vpack.c.b16 %v2903, %v2887
        %v3528 = vpack.c.b16 %v2904, %v2888
        %v3529 = vpack.c.b16 %v2905, %v2889
        %v3530 = vpack.c.b16 %v2906, %v2890
        %v3531 = vpack.c.b16 %v2907, %v2891
        %v3532 = vpack.c.b16 %v2908, %v2892
        %v3533 = vpack.c.b16 %v2909, %v2893
        %v3534 = vpack.c.b16 %v2910, %v2894
        %v3535 = vpack.c.b16 %v2911, %v2895
        %v3536 = vpack.c.b16 %v2912, %v2896
        %v3537 = vpack.c.b16 %v2913, %v2897
        %v3538 = vpack.c.b16 %v2914, %v2898
        %v3539 = vpack.c.b16 %v2915, %v2899
        %v3540 = vpack.c.b16 %v2916, %v2900
        %v3541 = vpack.c.b16 %v2933, %v2917
        %v3542 = vpack.c.b16 %v2934, %v2918
        %v3543 = vpack.c.b16 %v2935, %v2919
        %v3544 = vpack.c.b16 %v2936, %v2920
        %v3545 = vpack.c.b16 %v2937, %v2921
        %v3546 = vpack.c.b16 %v2938, %v2922
        %v3547 = vpack.c.b16 %v2939, %v2923
        %v3548 = vpack.c.b16 %v2940, %v2924
        %v3549 = vpack.c.b16 %v2941, %v2925
        %v3550 = vpack.c.b16 %v2942, %v2926
        %v3551 = vpack.c.b16 %v2943, %v2927
        %v3552 = vpack.c.b16 %v2944, %v2928
        %v3553 = vpack.c.b16 %v2945, %v2929
        %v3554 = vpack.c.b16 %v2946, %v2930
        %v3555 = vpack.c.b16 %v2947, %v2931
        %v3556 = vpack.c.b16 %v2948, %v2932
        %v3557 = vpack.c.b16 %v2965, %v2949
        %v3558 = vpack.c.b16 %v2966, %v2950
        %v3559 = vpack.c.b16 %v2967, %v2951
        %v3560 = vpack.c.b16 %v2968, %v2952
        %v3561 = vpack.c.b16 %v2969, %v2953
        %v3562 = vpack.c.b16 %v2970, %v2954
        %v3563 = vpack.c.b16 %v2971, %v2955
        %v3564 = vpack.c.b16 %v2972, %v2956
        %v3565 = vpack.c.b16 %v2973, %v2957
        %v3566 = vpack.c.b16 %v2974, %v2958
        %v3567 = vpack.c.b16 %v2975, %v2959
        %v3568 = vpack.c.b16 %v2976, %v2960
        %v3569 = vpack.c.b16 %v2977, %v2961
        %v3570 = vpack.c.b16 %v2978, %v2962
        %v3571 = vpack.c.b16 %v2979, %v2963
        %v3572 = vpack.c.b16 %v2980, %v2964
        %v3573 = vpack.c.b16 %v2997, %v2981
        %v3574 = vpack.c.b16 %v2998, %v2982
        %v3575 = vpack.c.b16 %v2999, %v2983
        %v3576 = vpack.c.b16 %v3000, %v2984
        %v3577 = vpack.c.b16 %v3001, %v2985
        %v3578 = vpack.c.b16 %v3002, %v2986
        %v3579 = vpack.c.b16 %v3003, %v2987
        %v3580 = vpack.c.b16 %v3004, %v2988
        %v3581 = vpack.c.b16 %v3005, %v2989
        %v3582 = vpack.c.b16 %v3006, %v2990
        %v3583 = vpack.c.b16 %v3007, %v2991
        %v3584 = vpack.c.b16 %v3008, %v2992
        %v3585 = vpack.c.b16 %v3009, %v2993
        %v3586 = vpack.c.b16 %v3010, %v2994
        %v3587 = vpack.c.b16 %v3011, %v2995
        %v3588 = vpack.c.b16 %v3012, %v2996
        %v3589 = vpack.c.b16 %v3029, %v3013
        %v3590 = vpack.c.b16 %v3030, %v3014
        %v3591 = vpack.c.b16 %v3031, %v3015
        %v3592 = vpack.c.b16 %v3032, %v3016
        %v3593 = vpack.c.b16 %v3033, %v3017
        %v3594 = vpack.c.b16 %v3034, %v3018
        %v3595 = vpack.c.b16 %v3035, %v3019
        %v3596 = vpack.c.b16 %v3036, %v3020
        %v3597 = vpack.c.b16 %v3037, %v3021
        %v3598 = vpack.c.b16 %v3038, %v3022
        %v3599 = vpack.c.b16 %v3039, %v3023
        %v3600 = vpack.c.b16 %v3040, %v3024
        %v3601 = vpack.c.b16 %v3041, %v3025
        %v3602 = vpack.c.b16 %v3042, %v3026
        %v3603 = vpack.c.b16 %v3043, %v3027
        %v3604 = vpack.c.b16 %v3044, %v3028
        %v3605 = vpack.c.b16 %v3061, %v3045
        %v3606 = vpack.c.b16 %v3062, %v3046
        %v3607 = vpack.c.b16 %v3063, %v3047
        %v3608 = vpack.c.b16 %v3064, %v3048
        %v3609 = vpack.c.b16 %v3065, %v3049
        %v3610 = vpack.c.b16 %v3066, %v3050
        %v3611 = vpack.c.b16 %v3067, %v3051
        %v3612 = vpack.c.b16 %v3068, %v3052
        %v3613 = vpack.c.b16 %v3069, %v3053
        %v3614 = vpack.c.b16 %v3070, %v3054
        %v3615 = vpack.c.b16 %v3071, %v3055
        %v3616 = vpack.c.b16 %v3072, %v3056
        %v3617 = vpack.c.b16 %v3073, %v3057
        %v3618 = vpack.c.b16 %v3074, %v3058
        %v3619 = vpack.c.b16 %v3075, %v3059
        %v3620 = vpack.c.b16 %v3076, %v3060
        %v3621 = vpack.c.b16 %v3093, %v3077
        %v3622 = vpack.c.b16 %v3094, %v3078
        %v3623 = vpack.c.b16 %v3095, %v3079
        %v3624 = vpack.c.b16 %v3096, %v3080
        %v3625 = vpack.c.b16 %v3097, %v3081
        %v3626 = vpack.c.b16 %v3098, %v3082
        %v3627 = vpack.c.b16 %v3099, %v3083
        %v3628 = vpack.c.b16 %v3100, %v3084
        %v3629 = vpack.c.b16 %v3101, %v3085
        %v3630 = vpack.c.b16 %v3102, %v3086
        %v3631 = vpack.c.b16 %v3103, %v3087
        %v3632 = vpack.c.b16 %v3104, %v3088
        %v3633 = vpack.c.b16 %v3105, %v3089
        %v3634 = vpack.c.b16 %v3106, %v3090
        %v3635 = vpack.c.b16 %v3107, %v3091
        %v3636 = vpack.c.b16 %v3108, %v3092
        %v3637 = vpack.c.b16 %v3125, %v3109
        %v3638 = vpack.c.b16 %v3126, %v3110
        %v3639 = vpack.c.b16 %v3127, %v3111
        %v3640 = vpack.c.b16 %v3128, %v3112
        %v3641 = vpack.c.b16 %v3129, %v3113
        %v3642 = vpack.c.b16 %v3130, %v3114
        %v3643 = vpack.c.b16 %v3131, %v3115
        %v3644 = vpack.c.b16 %v3132, %v3116
        %v3645 = vpack.c.b16 %v3133, %v3117
        %v3646 = vpack.c.b16 %v3134, %v3118
        %v3647 = vpack.c.b16 %v3135, %v3119
        %v3648 = vpack.c.b16 %v3136, %v3120
        %v3649 = vpack.c.b16 %v3137, %v3121
        %v3650 = vpack.c.b16 %v3138, %v3122
        %v3651 = vpack.c.b16 %v3139, %v3123
        %v3652 = vpack.c.b16 %v3140, %v3124
        %4165 = vmatprep.subr.bf16.mxu0 %v3142
        %4166 = vmatpush1.bf16.msra.mxu0 %v3141
        %4167 = vmatprep.subr.bf16.mxu0 %v3158
        %4168 = vmatpush1.bf16.msra.mxu0 %v3157
        %4169 = vmatprep.subr.bf16.mxu0 %v3174
        %4170 = vmatpush1.bf16.msra.mxu0 %v3173
        %4171 = vmatprep.subr.bf16.mxu0 %v3190
        %4172 = vmatpush1.bf16.msra.mxu0 %v3189
        %4173 = vmatprep.subr.bf16.mxu0 %v3206
        %4174 = vmatpush1.bf16.msra.mxu0 %v3205
        %4175 = vmatprep.subr.bf16.mxu0 %v3222
        %4176 = vmatpush1.bf16.msra.mxu0 %v3221
        %4177 = vmatprep.subr.bf16.mxu0 %v3238
        %4178 = vmatpush1.bf16.msra.mxu0 %v3237
        %4179 = vmatprep.subr.bf16.mxu0 %v3254
        %4180 = vmatpush1.bf16.msra.mxu0 %v3253
        %4181 = vmatprep.subr.bf16.mxu0 %v3270
        %4182 = vmatpush1.bf16.msra.mxu0 %v3269
        %4183 = vmatprep.subr.bf16.mxu0 %v3286
        %4184 = vmatpush1.bf16.msra.mxu0 %v3285
        %4185 = vmatprep.subr.bf16.mxu0 %v3302
        %4186 = vmatpush1.bf16.msra.mxu0 %v3301
        %4187 = vmatprep.subr.bf16.mxu0 %v3318
        %4188 = vmatpush1.bf16.msra.mxu0 %v3317
        %4189 = vmatprep.subr.bf16.mxu0 %v3334
        %4190 = vmatpush1.bf16.msra.mxu0 %v3333
        %4191 = vmatprep.subr.bf16.mxu0 %v3350
        %4192 = vmatpush1.bf16.msra.mxu0 %v3349
        %4193 = vmatprep.subr.bf16.mxu0 %v3366
        %4194 = vmatpush1.bf16.msra.mxu0 %v3365
        %4195 = vmatprep.subr.bf16.mxu0 %v3382
        %4196 = vmatpush1.bf16.msra.mxu0 %v3381
        %4197 = vmatprep.mubr.bf16.mxu0 %v1598
        %4198 = vmatmul.mubr.bf16.gmra.mrb[0].mxu0 %v1597
        %v4199 = vpop.f32.mrb[0].mxu0
        %v4200 = vadd.f32 0.0, %v4199
        %v4201 = vpop.f32.mrb[0].mxu0
        %v4202 = vadd.f32 0.0, %v4201
        %v4203 = vpop.f32.mrb[0].mxu0
        %v4204 = vpop.f32.mrb[0].mxu0
        %4205 = vdwg.mxu0
        %4206 = vmatprep.subr.bf16.mxu0 %v3398
        %4207 = vmatpush1.bf16.msra.mxu0 %v3397
        %4208 = vmatprep.subr.bf16.mxu0 %v3414
        %4209 = vmatpush1.bf16.msra.mxu0 %v3413
        %4210 = vmatprep.subr.bf16.mxu0 %v3430
        %4211 = vmatpush1.bf16.msra.mxu0 %v3429
        %4212 = vmatprep.subr.bf16.mxu0 %v3446
        %4213 = vmatpush1.bf16.msra.mxu0 %v3445
        %4214 = vmatprep.subr.bf16.mxu0 %v3462
        %4215 = vmatpush1.bf16.msra.mxu0 %v3461
        %4216 = vmatprep.subr.bf16.mxu0 %v3478
        %4217 = vmatpush1.bf16.msra.mxu0 %v3477
        %4218 = vmatprep.subr.bf16.mxu0 %v3494
        %4219 = vmatpush1.bf16.msra.mxu0 %v3493
        %4220 = vmatprep.subr.bf16.mxu0 %v3510
        %4221 = vmatpush1.bf16.msra.mxu0 %v3509
        %4222 = vmatprep.subr.bf16.mxu0 %v3526
        %4223 = vmatpush1.bf16.msra.mxu0 %v3525
        %4224 = vmatprep.subr.bf16.mxu0 %v3542
        %4225 = vmatpush1.bf16.msra.mxu0 %v3541
        %4226 = vmatprep.subr.bf16.mxu0 %v3558
        %4227 = vmatpush1.bf16.msra.mxu0 %v3557
        %4228 = vmatprep.subr.bf16.mxu0 %v3574
        %4229 = vmatpush1.bf16.msra.mxu0 %v3573
        %4230 = vmatprep.subr.bf16.mxu0 %v3590
        %4231 = vmatpush1.bf16.msra.mxu0 %v3589
        %4232 = vmatprep.subr.bf16.mxu0 %v3606
        %4233 = vmatpush1.bf16.msra.mxu0 %v3605
        %4234 = vmatprep.subr.bf16.mxu0 %v3622
        %4235 = vmatpush1.bf16.msra.mxu0 %v3621
        %4236 = vmatprep.subr.bf16.mxu0 %v3638
        %4237 = vmatpush1.bf16.msra.mxu0 %v3637
        %4238 = vmatprep.mubr.bf16.mxu0 %v1600
        %4239 = vmatmul.mubr.bf16.gmra.mrb[0].mxu0 %v1599
        %v4240 = vpop.f32.mrb[0].mxu0
        %v4241 = vadd.f32 %v4200, %v4240
        %v4242 = vpop.f32.mrb[0].mxu0
        %v4243 = vadd.f32 %v4202, %v4242
        %v4244 = vpop.f32.mrb[0].mxu0
        %v4245 = vpop.f32.mrb[0].mxu0
        %4246 = vdwg.mxu0
        %4247 = vmatprep.subr.bf16.mxu0 %v3144
        %4248 = vmatpush1.bf16.msra.mxu0 %v3143
        %4249 = vmatprep.subr.bf16.mxu0 %v3160
        %4250 = vmatpush1.bf16.msra.mxu0 %v3159
        %4251 = vmatprep.subr.bf16.mxu0 %v3176
        %4252 = vmatpush1.bf16.msra.mxu0 %v3175
        %4253 = vmatprep.subr.bf16.mxu0 %v3192
        %4254 = vmatpush1.bf16.msra.mxu0 %v3191
        %4255 = vmatprep.subr.bf16.mxu0 %v3208
        %4256 = vmatpush1.bf16.msra.mxu0 %v3207
        %4257 = vmatprep.subr.bf16.mxu0 %v3224
        %4258 = vmatpush1.bf16.msra.mxu0 %v3223
        %4259 = vmatprep.subr.bf16.mxu0 %v3240
        %4260 = vmatpush1.bf16.msra.mxu0 %v3239
        %4261 = vmatprep.subr.bf16.mxu0 %v3256
        %4262 = vmatpush1.bf16.msra.mxu0 %v3255
        %4263 = vmatprep.subr.bf16.mxu0 %v3272
        %4264 = vmatpush1.bf16.msra.mxu0 %v3271
        %4265 = vmatprep.subr.bf16.mxu0 %v3288
        %4266 = vmatpush1.bf16.msra.mxu0 %v3287
        %4267 = vmatprep.subr.bf16.mxu0 %v3304
        %4268 = vmatpush1.bf16.msra.mxu0 %v3303
        %4269 = vmatprep.subr.bf16.mxu0 %v3320
        %4270 = vmatpush1.bf16.msra.mxu0 %v3319
        %4271 = vmatprep.subr.bf16.mxu0 %v3336
        %4272 = vmatpush1.bf16.msra.mxu0 %v3335
        %4273 = vmatprep.subr.bf16.mxu0 %v3352
        %4274 = vmatpush1.bf16.msra.mxu0 %v3351
        %4275 = vmatprep.subr.bf16.mxu0 %v3368
        %4276 = vmatpush1.bf16.msra.mxu0 %v3367
        %4277 = vmatprep.subr.bf16.mxu0 %v3384
        %4278 = vmatpush1.bf16.msra.mxu0 %v3383
        %4279 = vmatprep.mubr.bf16.mxu0 %v1598
        %4280 = vmatmul.mubr.bf16.gmra.mrb[0].mxu0 %v1597
        %v4281 = vpop.f32.mrb[0].mxu0
        %v4282 = vadd.f32 0.0, %v4281
        %v4283 = vpop.f32.mrb[0].mxu0
        %v4284 = vadd.f32 0.0, %v4283
        %v4285 = vpop.f32.mrb[0].mxu0
        %v4286 = vpop.f32.mrb[0].mxu0
        %4287 = vdwg.mxu0
        %4288 = vmatprep.subr.bf16.mxu0 %v3400
        %4289 = vmatpush1.bf16.msra.mxu0 %v3399
        %4290 = vmatprep.subr.bf16.mxu0 %v3416
        %4291 = vmatpush1.bf16.msra.mxu0 %v3415
        %4292 = vmatprep.subr.bf16.mxu0 %v3432
        %4293 = vmatpush1.bf16.msra.mxu0 %v3431
        %4294 = vmatprep.subr.bf16.mxu0 %v3448
        %4295 = vmatpush1.bf16.msra.mxu0 %v3447
        %4296 = vmatprep.subr.bf16.mxu0 %v3464
        %4297 = vmatpush1.bf16.msra.mxu0 %v3463
        %4298 = vmatprep.subr.bf16.mxu0 %v3480
        %4299 = vmatpush1.bf16.msra.mxu0 %v3479
        %4300 = vmatprep.subr.bf16.mxu0 %v3496
        %4301 = vmatpush1.bf16.msra.mxu0 %v3495
        %4302 = vmatprep.subr.bf16.mxu0 %v3512
        %4303 = vmatpush1.bf16.msra.mxu0 %v3511
        %4304 = vmatprep.subr.bf16.mxu0 %v3528
        %4305 = vmatpush1.bf16.msra.mxu0 %v3527
        %4306 = vmatprep.subr.bf16.mxu0 %v3544
        %4307 = vmatpush1.bf16.msra.mxu0 %v3543
        %4308 = vmatprep.subr.bf16.mxu0 %v3560
        %4309 = vmatpush1.bf16.msra.mxu0 %v3559
        %4310 = vmatprep.subr.bf16.mxu0 %v3576
        %4311 = vmatpush1.bf16.msra.mxu0 %v3575
        %4312 = vmatprep.subr.bf16.mxu0 %v3592
        %4313 = vmatpush1.bf16.msra.mxu0 %v3591
        %4314 = vmatprep.subr.bf16.mxu0 %v3608
        %4315 = vmatpush1.bf16.msra.mxu0 %v3607
        %4316 = vmatprep.subr.bf16.mxu0 %v3624
        %4317 = vmatpush1.bf16.msra.mxu0 %v3623
        %4318 = vmatprep.subr.bf16.mxu0 %v3640
        %4319 = vmatpush1.bf16.msra.mxu0 %v3639
        %4320 = vmatprep.mubr.bf16.mxu0 %v1600
        %4321 = vmatmul.mubr.bf16.gmra.mrb[0].mxu0 %v1599
        %v4322 = vpop.f32.mrb[0].mxu0
        %v4323 = vadd.f32 %v4282, %v4322
        %v4324 = vpop.f32.mrb[0].mxu0
        %v4325 = vadd.f32 %v4284, %v4324
        %v4326 = vpop.f32.mrb[0].mxu0
        %v4327 = vpop.f32.mrb[0].mxu0
        %4328 = vdwg.mxu0
        %4329 = vmatprep.subr.bf16.mxu0 %v3146
        %4330 = vmatpush1.bf16.msra.mxu0 %v3145
        %4331 = vmatprep.subr.bf16.mxu0 %v3162
        %4332 = vmatpush1.bf16.msra.mxu0 %v3161
        %4333 = vmatprep.subr.bf16.mxu0 %v3178
        %4334 = vmatpush1.bf16.msra.mxu0 %v3177
        %4335 = vmatprep.subr.bf16.mxu0 %v3194
        %4336 = vmatpush1.bf16.msra.mxu0 %v3193
        %4337 = vmatprep.subr.bf16.mxu0 %v3210
        %4338 = vmatpush1.bf16.msra.mxu0 %v3209
        %4339 = vmatprep.subr.bf16.mxu0 %v3226
        %4340 = vmatpush1.bf16.msra.mxu0 %v3225
        %4341 = vmatprep.subr.bf16.mxu0 %v3242
        %4342 = vmatpush1.bf16.msra.mxu0 %v3241
        %4343 = vmatprep.subr.bf16.mxu0 %v3258
        %4344 = vmatpush1.bf16.msra.mxu0 %v3257
        %4345 = vmatprep.subr.bf16.mxu0 %v3274
        %4346 = vmatpush1.bf16.msra.mxu0 %v3273
        %4347 = vmatprep.subr.bf16.mxu0 %v3290
        %4348 = vmatpush1.bf16.msra.mxu0 %v3289
        %4349 = vmatprep.subr.bf16.mxu0 %v3306
        %4350 = vmatpush1.bf16.msra.mxu0 %v3305
        %4351 = vmatprep.subr.bf16.mxu0 %v3322
        %4352 = vmatpush1.bf16.msra.mxu0 %v3321
        %4353 = vmatprep.subr.bf16.mxu0 %v3338
        %4354 = vmatpush1.bf16.msra.mxu0 %v3337
        %4355 = vmatprep.subr.bf16.mxu0 %v3354
        %4356 = vmatpush1.bf16.msra.mxu0 %v3353
        %4357 = vmatprep.subr.bf16.mxu0 %v3370
        %4358 = vmatpush1.bf16.msra.mxu0 %v3369
        %4359 = vmatprep.subr.bf16.mxu0 %v3386
        %4360 = vmatpush1.bf16.msra.mxu0 %v3385
        %4361 = vmatprep.mubr.bf16.mxu0 %v1598
        %4362 = vmatmul.mubr.bf16.gmra.mrb[0].mxu0 %v1597
        %v4363 = vpop.f32.mrb[0].mxu0
        %v4364 = vadd.f32 0.0, %v4363
        %v4365 = vpop.f32.mrb[0].mxu0
        %v4366 = vadd.f32 0.0, %v4365
        %v4367 = vpop.f32.mrb[0].mxu0
        %v4368 = vpop.f32.mrb[0].mxu0
        %4369 = vdwg.mxu0
        %4370 = vmatprep.subr.bf16.mxu0 %v3402
        %4371 = vmatpush1.bf16.msra.mxu0 %v3401
        %4372 = vmatprep.subr.bf16.mxu0 %v3418
        %4373 = vmatpush1.bf16.msra.mxu0 %v3417
        %4374 = vmatprep.subr.bf16.mxu0 %v3434
        %4375 = vmatpush1.bf16.msra.mxu0 %v3433
        %4376 = vmatprep.subr.bf16.mxu0 %v3450
        %4377 = vmatpush1.bf16.msra.mxu0 %v3449
        %4378 = vmatprep.subr.bf16.mxu0 %v3466
        %4379 = vmatpush1.bf16.msra.mxu0 %v3465
        %4380 = vmatprep.subr.bf16.mxu0 %v3482
        %4381 = vmatpush1.bf16.msra.mxu0 %v3481
        %4382 = vmatprep.subr.bf16.mxu0 %v3498
        %4383 = vmatpush1.bf16.msra.mxu0 %v3497
        %4384 = vmatprep.subr.bf16.mxu0 %v3514
        %4385 = vmatpush1.bf16.msra.mxu0 %v3513
        %4386 = vmatprep.subr.bf16.mxu0 %v3530
        %4387 = vmatpush1.bf16.msra.mxu0 %v3529
        %4388 = vmatprep.subr.bf16.mxu0 %v3546
        %4389 = vmatpush1.bf16.msra.mxu0 %v3545
        %4390 = vmatprep.subr.bf16.mxu0 %v3562
        %4391 = vmatpush1.bf16.msra.mxu0 %v3561
        %4392 = vmatprep.subr.bf16.mxu0 %v3578
        %4393 = vmatpush1.bf16.msra.mxu0 %v3577
        %4394 = vmatprep.subr.bf16.mxu0 %v3594
        %4395 = vmatpush1.bf16.msra.mxu0 %v3593
        %4396 = vmatprep.subr.bf16.mxu0 %v3610
        %4397 = vmatpush1.bf16.msra.mxu0 %v3609
        %4398 = vmatprep.subr.bf16.mxu0 %v3626
        %4399 = vmatpush1.bf16.msra.mxu0 %v3625
        %4400 = vmatprep.subr.bf16.mxu0 %v3642
        %4401 = vmatpush1.bf16.msra.mxu0 %v3641
        %4402 = vmatprep.mubr.bf16.mxu0 %v1600
        %4403 = vmatmul.mubr.bf16.gmra.mrb[0].mxu0 %v1599
        %v4404 = vpop.f32.mrb[0].mxu0
        %v4405 = vadd.f32 %v4364, %v4404
        %v4406 = vpop.f32.mrb[0].mxu0
        %v4407 = vadd.f32 %v4366, %v4406
        %v4408 = vpop.f32.mrb[0].mxu0
        %v4409 = vpop.f32.mrb[0].mxu0
        %4410 = vdwg.mxu0
        %4411 = vmatprep.subr.bf16.mxu0 %v3148
        %4412 = vmatpush1.bf16.msra.mxu0 %v3147
        %4413 = vmatprep.subr.bf16.mxu0 %v3164
        %4414 = vmatpush1.bf16.msra.mxu0 %v3163
        %4415 = vmatprep.subr.bf16.mxu0 %v3180
        %4416 = vmatpush1.bf16.msra.mxu0 %v3179
        %4417 = vmatprep.subr.bf16.mxu0 %v3196
        %4418 = vmatpush1.bf16.msra.mxu0 %v3195
        %4419 = vmatprep.subr.bf16.mxu0 %v3212
        %4420 = vmatpush1.bf16.msra.mxu0 %v3211
        %4421 = vmatprep.subr.bf16.mxu0 %v3228
        %4422 = vmatpush1.bf16.msra.mxu0 %v3227
        %4423 = vmatprep.subr.bf16.mxu0 %v3244
        %4424 = vmatpush1.bf16.msra.mxu0 %v3243
        %4425 = vmatprep.subr.bf16.mxu0 %v3260
        %4426 = vmatpush1.bf16.msra.mxu0 %v3259
        %4427 = vmatprep.subr.bf16.mxu0 %v3276
        %4428 = vmatpush1.bf16.msra.mxu0 %v3275
        %4429 = vmatprep.subr.bf16.mxu0 %v3292
        %4430 = vmatpush1.bf16.msra.mxu0 %v3291
        %4431 = vmatprep.subr.bf16.mxu0 %v3308
        %4432 = vmatpush1.bf16.msra.mxu0 %v3307
        %4433 = vmatprep.subr.bf16.mxu0 %v3324
        %4434 = vmatpush1.bf16.msra.mxu0 %v3323
        %4435 = vmatprep.subr.bf16.mxu0 %v3340
        %4436 = vmatpush1.bf16.msra.mxu0 %v3339
        %4437 = vmatprep.subr.bf16.mxu0 %v3356
        %4438 = vmatpush1.bf16.msra.mxu0 %v3355
        %4439 = vmatprep.subr.bf16.mxu0 %v3372
        %4440 = vmatpush1.bf16.msra.mxu0 %v3371
        %4441 = vmatprep.subr.bf16.mxu0 %v3388
        %4442 = vmatpush1.bf16.msra.mxu0 %v3387
        %4443 = vmatprep.mubr.bf16.mxu0 %v1598
        %4444 = vmatmul.mubr.bf16.gmra.mrb[0].mxu0 %v1597
        %v4445 = vpop.f32.mrb[0].mxu0
        %v4446 = vadd.f32 0.0, %v4445
        %v4447 = vpop.f32.mrb[0].mxu0
        %v4448 = vadd.f32 0.0, %v4447
        %v4449 = vpop.f32.mrb[0].mxu0
        %v4450 = vpop.f32.mrb[0].mxu0
        %4451 = vdwg.mxu0
        %4452 = vmatprep.subr.bf16.mxu0 %v3404
        %4453 = vmatpush1.bf16.msra.mxu0 %v3403
        %4454 = vmatprep.subr.bf16.mxu0 %v3420
        %4455 = vmatpush1.bf16.msra.mxu0 %v3419
        %4456 = vmatprep.subr.bf16.mxu0 %v3436
        %4457 = vmatpush1.bf16.msra.mxu0 %v3435
        %4458 = vmatprep.subr.bf16.mxu0 %v3452
        %4459 = vmatpush1.bf16.msra.mxu0 %v3451
        %4460 = vmatprep.subr.bf16.mxu0 %v3468
        %4461 = vmatpush1.bf16.msra.mxu0 %v3467
        %4462 = vmatprep.subr.bf16.mxu0 %v3484
        %4463 = vmatpush1.bf16.msra.mxu0 %v3483
        %4464 = vmatprep.subr.bf16.mxu0 %v3500
        %4465 = vmatpush1.bf16.msra.mxu0 %v3499
        %4466 = vmatprep.subr.bf16.mxu0 %v3516
        %4467 = vmatpush1.bf16.msra.mxu0 %v3515
        %4468 = vmatprep.subr.bf16.mxu0 %v3532
        %4469 = vmatpush1.bf16.msra.mxu0 %v3531
        %4470 = vmatprep.subr.bf16.mxu0 %v3548
        %4471 = vmatpush1.bf16.msra.mxu0 %v3547
        %4472 = vmatprep.subr.bf16.mxu0 %v3564
        %4473 = vmatpush1.bf16.msra.mxu0 %v3563
        %4474 = vmatprep.subr.bf16.mxu0 %v3580
        %4475 = vmatpush1.bf16.msra.mxu0 %v3579
        %4476 = vmatprep.subr.bf16.mxu0 %v3596
        %4477 = vmatpush1.bf16.msra.mxu0 %v3595
        %4478 = vmatprep.subr.bf16.mxu0 %v3612
        %4479 = vmatpush1.bf16.msra.mxu0 %v3611
        %4480 = vmatprep.subr.bf16.mxu0 %v3628
        %4481 = vmatpush1.bf16.msra.mxu0 %v3627
        %4482 = vmatprep.subr.bf16.mxu0 %v3644
        %4483 = vmatpush1.bf16.msra.mxu0 %v3643
        %4484 = vmatprep.mubr.bf16.mxu0 %v1600
        %4485 = vmatmul.mubr.bf16.gmra.mrb[0].mxu0 %v1599
        %v4486 = vpop.f32.mrb[0].mxu0
        %v4487 = vadd.f32 %v4446, %v4486
        %v4488 = vpop.f32.mrb[0].mxu0
        %v4489 = vadd.f32 %v4448, %v4488
        %v4490 = vpop.f32.mrb[0].mxu0
        %v4491 = vpop.f32.mrb[0].mxu0
        %4492 = vdwg.mxu0
        %4493 = vmatprep.subr.bf16.mxu0 %v3150
        %4494 = vmatpush1.bf16.msra.mxu0 %v3149
        %4495 = vmatprep.subr.bf16.mxu0 %v3166
        %4496 = vmatpush1.bf16.msra.mxu0 %v3165
        %4497 = vmatprep.subr.bf16.mxu0 %v3182
        %4498 = vmatpush1.bf16.msra.mxu0 %v3181
        %4499 = vmatprep.subr.bf16.mxu0 %v3198
        %4500 = vmatpush1.bf16.msra.mxu0 %v3197
        %4501 = vmatprep.subr.bf16.mxu0 %v3214
        %4502 = vmatpush1.bf16.msra.mxu0 %v3213
        %4503 = vmatprep.subr.bf16.mxu0 %v3230
        %4504 = vmatpush1.bf16.msra.mxu0 %v3229
        %4505 = vmatprep.subr.bf16.mxu0 %v3246
        %4506 = vmatpush1.bf16.msra.mxu0 %v3245
        %4507 = vmatprep.subr.bf16.mxu0 %v3262
        %4508 = vmatpush1.bf16.msra.mxu0 %v3261
        %4509 = vmatprep.subr.bf16.mxu0 %v3278
        %4510 = vmatpush1.bf16.msra.mxu0 %v3277
        %4511 = vmatprep.subr.bf16.mxu0 %v3294
        %4512 = vmatpush1.bf16.msra.mxu0 %v3293
        %4513 = vmatprep.subr.bf16.mxu0 %v3310
        %4514 = vmatpush1.bf16.msra.mxu0 %v3309
        %4515 = vmatprep.subr.bf16.mxu0 %v3326
        %4516 = vmatpush1.bf16.msra.mxu0 %v3325
        %4517 = vmatprep.subr.bf16.mxu0 %v3342
        %4518 = vmatpush1.bf16.msra.mxu0 %v3341
        %4519 = vmatprep.subr.bf16.mxu0 %v3358
        %4520 = vmatpush1.bf16.msra.mxu0 %v3357
        %4521 = vmatprep.subr.bf16.mxu0 %v3374
        %4522 = vmatpush1.bf16.msra.mxu0 %v3373
        %4523 = vmatprep.subr.bf16.mxu0 %v3390
        %4524 = vmatpush1.bf16.msra.mxu0 %v3389
        %4525 = vmatprep.mubr.bf16.mxu0 %v1598
        %4526 = vmatmul.mubr.bf16.gmra.mrb[0].mxu0 %v1597
        %v4527 = vpop.f32.mrb[0].mxu0
        %v4528 = vadd.f32 0.0, %v4527
        %v4529 = vpop.f32.mrb[0].mxu0
        %v4530 = vadd.f32 0.0, %v4529
        %v4531 = vpop.f32.mrb[0].mxu0
        %v4532 = vpop.f32.mrb[0].mxu0
        %4533 = vdwg.mxu0
        %4534 = vmatprep.subr.bf16.mxu0 %v3406
        %4535 = vmatpush1.bf16.msra.mxu0 %v3405
        %4536 = vmatprep.subr.bf16.mxu0 %v3422
        %4537 = vmatpush1.bf16.msra.mxu0 %v3421
        %4538 = vmatprep.subr.bf16.mxu0 %v3438
        %4539 = vmatpush1.bf16.msra.mxu0 %v3437
        %4540 = vmatprep.subr.bf16.mxu0 %v3454
        %4541 = vmatpush1.bf16.msra.mxu0 %v3453
        %4542 = vmatprep.subr.bf16.mxu0 %v3470
        %4543 = vmatpush1.bf16.msra.mxu0 %v3469
        %4544 = vmatprep.subr.bf16.mxu0 %v3486
        %4545 = vmatpush1.bf16.msra.mxu0 %v3485
        %4546 = vmatprep.subr.bf16.mxu0 %v3502
        %4547 = vmatpush1.bf16.msra.mxu0 %v3501
        %4548 = vmatprep.subr.bf16.mxu0 %v3518
        %4549 = vmatpush1.bf16.msra.mxu0 %v3517
        %4550 = vmatprep.subr.bf16.mxu0 %v3534
        %4551 = vmatpush1.bf16.msra.mxu0 %v3533
        %4552 = vmatprep.subr.bf16.mxu0 %v3550
        %4553 = vmatpush1.bf16.msra.mxu0 %v3549
        %4554 = vmatprep.subr.bf16.mxu0 %v3566
        %4555 = vmatpush1.bf16.msra.mxu0 %v3565
        %4556 = vmatprep.subr.bf16.mxu0 %v3582
        %4557 = vmatpush1.bf16.msra.mxu0 %v3581
        %4558 = vmatprep.subr.bf16.mxu0 %v3598
        %4559 = vmatpush1.bf16.msra.mxu0 %v3597
        %4560 = vmatprep.subr.bf16.mxu0 %v3614
        %4561 = vmatpush1.bf16.msra.mxu0 %v3613
        %4562 = vmatprep.subr.bf16.mxu0 %v3630
        %4563 = vmatpush1.bf16.msra.mxu0 %v3629
        %4564 = vmatprep.subr.bf16.mxu0 %v3646
        %4565 = vmatpush1.bf16.msra.mxu0 %v3645
        %4566 = vmatprep.mubr.bf16.mxu0 %v1600
        %4567 = vmatmul.mubr.bf16.gmra.mrb[0].mxu0 %v1599
        %v4568 = vpop.f32.mrb[0].mxu0
        %v4569 = vadd.f32 %v4528, %v4568
        %v4570 = vpop.f32.mrb[0].mxu0
        %v4571 = vadd.f32 %v4530, %v4570
        %v4572 = vpop.f32.mrb[0].mxu0
        %v4573 = vpop.f32.mrb[0].mxu0
        %4574 = vdwg.mxu0
        %4575 = vmatprep.subr.bf16.mxu0 %v3152
        %4576 = vmatpush1.bf16.msra.mxu0 %v3151
        %4577 = vmatprep.subr.bf16.mxu0 %v3168
        %4578 = vmatpush1.bf16.msra.mxu0 %v3167
        %4579 = vmatprep.subr.bf16.mxu0 %v3184
        %4580 = vmatpush1.bf16.msra.mxu0 %v3183
        %4581 = vmatprep.subr.bf16.mxu0 %v3200
        %4582 = vmatpush1.bf16.msra.mxu0 %v3199
        %4583 = vmatprep.subr.bf16.mxu0 %v3216
        %4584 = vmatpush1.bf16.msra.mxu0 %v3215
        %4585 = vmatprep.subr.bf16.mxu0 %v3232
        %4586 = vmatpush1.bf16.msra.mxu0 %v3231
        %4587 = vmatprep.subr.bf16.mxu0 %v3248
        %4588 = vmatpush1.bf16.msra.mxu0 %v3247
        %4589 = vmatprep.subr.bf16.mxu0 %v3264
        %4590 = vmatpush1.bf16.msra.mxu0 %v3263
        %4591 = vmatprep.subr.bf16.mxu0 %v3280
        %4592 = vmatpush1.bf16.msra.mxu0 %v3279
        %4593 = vmatprep.subr.bf16.mxu0 %v3296
        %4594 = vmatpush1.bf16.msra.mxu0 %v3295
        %4595 = vmatprep.subr.bf16.mxu0 %v3312
        %4596 = vmatpush1.bf16.msra.mxu0 %v3311
        %4597 = vmatprep.subr.bf16.mxu0 %v3328
        %4598 = vmatpush1.bf16.msra.mxu0 %v3327
        %4599 = vmatprep.subr.bf16.mxu0 %v3344
        %4600 = vmatpush1.bf16.msra.mxu0 %v3343
        %4601 = vmatprep.subr.bf16.mxu0 %v3360
        %4602 = vmatpush1.bf16.msra.mxu0 %v3359
        %4603 = vmatprep.subr.bf16.mxu0 %v3376
        %4604 = vmatpush1.bf16.msra.mxu0 %v3375
        %4605 = vmatprep.subr.bf16.mxu0 %v3392
        %4606 = vmatpush1.bf16.msra.mxu0 %v3391
        %4607 = vmatprep.mubr.bf16.mxu0 %v1598
        %4608 = vmatmul.mubr.bf16.gmra.mrb[0].mxu0 %v1597
        %v4609 = vpop.f32.mrb[0].mxu0
        %v4610 = vadd.f32 0.0, %v4609
        %v4611 = vpop.f32.mrb[0].mxu0
        %v4612 = vadd.f32 0.0, %v4611
        %v4613 = vpop.f32.mrb[0].mxu0
        %v4614 = vpop.f32.mrb[0].mxu0
        %4615 = vdwg.mxu0
        %4616 = vmatprep.subr.bf16.mxu0 %v3408
        %4617 = vmatpush1.bf16.msra.mxu0 %v3407
        %4618 = vmatprep.subr.bf16.mxu0 %v3424
        %4619 = vmatpush1.bf16.msra.mxu0 %v3423
        %4620 = vmatprep.subr.bf16.mxu0 %v3440
        %4621 = vmatpush1.bf16.msra.mxu0 %v3439
        %4622 = vmatprep.subr.bf16.mxu0 %v3456
        %4623 = vmatpush1.bf16.msra.mxu0 %v3455
        %4624 = vmatprep.subr.bf16.mxu0 %v3472
        %4625 = vmatpush1.bf16.msra.mxu0 %v3471
        %4626 = vmatprep.subr.bf16.mxu0 %v3488
        %4627 = vmatpush1.bf16.msra.mxu0 %v3487
        %4628 = vmatprep.subr.bf16.mxu0 %v3504
        %4629 = vmatpush1.bf16.msra.mxu0 %v3503
        %4630 = vmatprep.subr.bf16.mxu0 %v3520
        %4631 = vmatpush1.bf16.msra.mxu0 %v3519
        %4632 = vmatprep.subr.bf16.mxu0 %v3536
        %4633 = vmatpush1.bf16.msra.mxu0 %v3535
        %4634 = vmatprep.subr.bf16.mxu0 %v3552
        %4635 = vmatpush1.bf16.msra.mxu0 %v3551
        %4636 = vmatprep.subr.bf16.mxu0 %v3568
        %4637 = vmatpush1.bf16.msra.mxu0 %v3567
        %4638 = vmatprep.subr.bf16.mxu0 %v3584
        %4639 = vmatpush1.bf16.msra.mxu0 %v3583
        %4640 = vmatprep.subr.bf16.mxu0 %v3600
        %4641 = vmatpush1.bf16.msra.mxu0 %v3599
        %4642 = vmatprep.subr.bf16.mxu0 %v3616
        %4643 = vmatpush1.bf16.msra.mxu0 %v3615
        %4644 = vmatprep.subr.bf16.mxu0 %v3632
        %4645 = vmatpush1.bf16.msra.mxu0 %v3631
        %4646 = vmatprep.subr.bf16.mxu0 %v3648
        %4647 = vmatpush1.bf16.msra.mxu0 %v3647
        %4648 = vmatprep.mubr.bf16.mxu0 %v1600
        %4649 = vmatmul.mubr.bf16.gmra.mrb[0].mxu0 %v1599
        %v4650 = vpop.f32.mrb[0].mxu0
        %v4651 = vadd.f32 %v4610, %v4650
        %v4652 = vpop.f32.mrb[0].mxu0
        %v4653 = vadd.f32 %v4612, %v4652
        %v4654 = vpop.f32.mrb[0].mxu0
        %v4655 = vpop.f32.mrb[0].mxu0
        %4656 = vdwg.mxu0
        %4657 = vmatprep.subr.bf16.mxu0 %v3154
        %4658 = vmatpush1.bf16.msra.mxu0 %v3153
        %4659 = vmatprep.subr.bf16.mxu0 %v3170
        %4660 = vmatpush1.bf16.msra.mxu0 %v3169
        %4661 = vmatprep.subr.bf16.mxu0 %v3186
        %4662 = vmatpush1.bf16.msra.mxu0 %v3185
        %4663 = vmatprep.subr.bf16.mxu0 %v3202
        %4664 = vmatpush1.bf16.msra.mxu0 %v3201
        %4665 = vmatprep.subr.bf16.mxu0 %v3218
        %4666 = vmatpush1.bf16.msra.mxu0 %v3217
        %4667 = vmatprep.subr.bf16.mxu0 %v3234
        %4668 = vmatpush1.bf16.msra.mxu0 %v3233
        %4669 = vmatprep.subr.bf16.mxu0 %v3250
        %4670 = vmatpush1.bf16.msra.mxu0 %v3249
        %4671 = vmatprep.subr.bf16.mxu0 %v3266
        %4672 = vmatpush1.bf16.msra.mxu0 %v3265
        %4673 = vmatprep.subr.bf16.mxu0 %v3282
        %4674 = vmatpush1.bf16.msra.mxu0 %v3281
        %4675 = vmatprep.subr.bf16.mxu0 %v3298
        %4676 = vmatpush1.bf16.msra.mxu0 %v3297
        %4677 = vmatprep.subr.bf16.mxu0 %v3314
        %4678 = vmatpush1.bf16.msra.mxu0 %v3313
        %4679 = vmatprep.subr.bf16.mxu0 %v3330
        %4680 = vmatpush1.bf16.msra.mxu0 %v3329
        %4681 = vmatprep.subr.bf16.mxu0 %v3346
        %4682 = vmatpush1.bf16.msra.mxu0 %v3345
        %4683 = vmatprep.subr.bf16.mxu0 %v3362
        %4684 = vmatpush1.bf16.msra.mxu0 %v3361
        %4685 = vmatprep.subr.bf16.mxu0 %v3378
        %4686 = vmatpush1.bf16.msra.mxu0 %v3377
        %4687 = vmatprep.subr.bf16.mxu0 %v3394
        %4688 = vmatpush1.bf16.msra.mxu0 %v3393
        %4689 = vmatprep.mubr.bf16.mxu0 %v1598
        %4690 = vmatmul.mubr.bf16.gmra.mrb[0].mxu0 %v1597
        %v4691 = vpop.f32.mrb[0].mxu0
        %v4692 = vadd.f32 0.0, %v4691
        %v4693 = vpop.f32.mrb[0].mxu0
        %v4694 = vadd.f32 0.0, %v4693
        %v4695 = vpop.f32.mrb[0].mxu0
        %v4696 = vpop.f32.mrb[0].mxu0
        %4697 = vdwg.mxu0
        %4698 = vmatprep.subr.bf16.mxu0 %v3410
        %4699 = vmatpush1.bf16.msra.mxu0 %v3409
        %4700 = vmatprep.subr.bf16.mxu0 %v3426
        %4701 = vmatpush1.bf16.msra.mxu0 %v3425
        %4702 = vmatprep.subr.bf16.mxu0 %v3442
        %4703 = vmatpush1.bf16.msra.mxu0 %v3441
        %4704 = vmatprep.subr.bf16.mxu0 %v3458
        %4705 = vmatpush1.bf16.msra.mxu0 %v3457
        %4706 = vmatprep.subr.bf16.mxu0 %v3474
        %4707 = vmatpush1.bf16.msra.mxu0 %v3473
        %4708 = vmatprep.subr.bf16.mxu0 %v3490
        %4709 = vmatpush1.bf16.msra.mxu0 %v3489
        %4710 = vmatprep.subr.bf16.mxu0 %v3506
        %4711 = vmatpush1.bf16.msra.mxu0 %v3505
        %4712 = vmatprep.subr.bf16.mxu0 %v3522
        %4713 = vmatpush1.bf16.msra.mxu0 %v3521
        %4714 = vmatprep.subr.bf16.mxu0 %v3538
        %4715 = vmatpush1.bf16.msra.mxu0 %v3537
        %4716 = vmatprep.subr.bf16.mxu0 %v3554
        %4717 = vmatpush1.bf16.msra.mxu0 %v3553
        %4718 = vmatprep.subr.bf16.mxu0 %v3570
        %4719 = vmatpush1.bf16.msra.mxu0 %v3569
        %4720 = vmatprep.subr.bf16.mxu0 %v3586
        %4721 = vmatpush1.bf16.msra.mxu0 %v3585
        %4722 = vmatprep.subr.bf16.mxu0 %v3602
        %4723 = vmatpush1.bf16.msra.mxu0 %v3601
        %4724 = vmatprep.subr.bf16.mxu0 %v3618
        %4725 = vmatpush1.bf16.msra.mxu0 %v3617
        %4726 = vmatprep.subr.bf16.mxu0 %v3634
        %4727 = vmatpush1.bf16.msra.mxu0 %v3633
        %4728 = vmatprep.subr.bf16.mxu0 %v3650
        %4729 = vmatpush1.bf16.msra.mxu0 %v3649
        %4730 = vmatprep.mubr.bf16.mxu0 %v1600
        %4731 = vmatmul.mubr.bf16.gmra.mrb[0].mxu0 %v1599
        %v4732 = vpop.f32.mrb[0].mxu0
        %v4733 = vadd.f32 %v4692, %v4732
        %v4734 = vpop.f32.mrb[0].mxu0
        %v4735 = vadd.f32 %v4694, %v4734
        %v4736 = vpop.f32.mrb[0].mxu0
        %v4737 = vpop.f32.mrb[0].mxu0
        %4738 = vdwg.mxu0
        %4739 = vmatprep.subr.bf16.mxu0 %v3156
        %4740 = vmatpush1.bf16.msra.mxu0 %v3155
        %4741 = vmatprep.subr.bf16.mxu0 %v3172
        %4742 = vmatpush1.bf16.msra.mxu0 %v3171
        %4743 = vmatprep.subr.bf16.mxu0 %v3188
        %4744 = vmatpush1.bf16.msra.mxu0 %v3187
        %4745 = vmatprep.subr.bf16.mxu0 %v3204
        %4746 = vmatpush1.bf16.msra.mxu0 %v3203
        %4747 = vmatprep.subr.bf16.mxu0 %v3220
        %4748 = vmatpush1.bf16.msra.mxu0 %v3219
        %4749 = vmatprep.subr.bf16.mxu0 %v3236
        %4750 = vmatpush1.bf16.msra.mxu0 %v3235
        %4751 = vmatprep.subr.bf16.mxu0 %v3252
        %4752 = vmatpush1.bf16.msra.mxu0 %v3251
        %4753 = vmatprep.subr.bf16.mxu0 %v3268
        %4754 = vmatpush1.bf16.msra.mxu0 %v3267
        %4755 = vmatprep.subr.bf16.mxu0 %v3284
        %4756 = vmatpush1.bf16.msra.mxu0 %v3283
        %4757 = vmatprep.subr.bf16.mxu0 %v3300
        %4758 = vmatpush1.bf16.msra.mxu0 %v3299
        %4759 = vmatprep.subr.bf16.mxu0 %v3316
        %4760 = vmatpush1.bf16.msra.mxu0 %v3315
        %4761 = vmatprep.subr.bf16.mxu0 %v3332
        %4762 = vmatpush1.bf16.msra.mxu0 %v3331
        %4763 = vmatprep.subr.bf16.mxu0 %v3348
        %4764 = vmatpush1.bf16.msra.mxu0 %v3347
        %4765 = vmatprep.subr.bf16.mxu0 %v3364
        %4766 = vmatpush1.bf16.msra.mxu0 %v3363
        %4767 = vmatprep.subr.bf16.mxu0 %v3380
        %4768 = vmatpush1.bf16.msra.mxu0 %v3379
        %4769 = vmatprep.subr.bf16.mxu0 %v3396
        %4770 = vmatpush1.bf16.msra.mxu0 %v3395
        %4771 = vmatprep.mubr.bf16.mxu0 %v1598
        %4772 = vmatmul.mubr.bf16.gmra.mrb[0].mxu0 %v1597
        %v4773 = vpop.f32.mrb[0].mxu0
        %v4774 = vadd.f32 0.0, %v4773
        %v4775 = vpop.f32.mrb[0].mxu0
        %v4776 = vadd.f32 0.0, %v4775
        %v4777 = vpop.f32.mrb[0].mxu0
        %v4778 = vpop.f32.mrb[0].mxu0
        %4779 = vdwg.mxu0
        %4780 = vmatprep.subr.bf16.mxu0 %v3412
        %4781 = vmatpush1.bf16.msra.mxu0 %v3411
        %4782 = vmatprep.subr.bf16.mxu0 %v3428
        %4783 = vmatpush1.bf16.msra.mxu0 %v3427
        %4784 = vmatprep.subr.bf16.mxu0 %v3444
        %4785 = vmatpush1.bf16.msra.mxu0 %v3443
        %4786 = vmatprep.subr.bf16.mxu0 %v3460
        %4787 = vmatpush1.bf16.msra.mxu0 %v3459
        %4788 = vmatprep.subr.bf16.mxu0 %v3476
        %4789 = vmatpush1.bf16.msra.mxu0 %v3475
        %4790 = vmatprep.subr.bf16.mxu0 %v3492
        %4791 = vmatpush1.bf16.msra.mxu0 %v3491
        %4792 = vmatprep.subr.bf16.mxu0 %v3508
        %4793 = vmatpush1.bf16.msra.mxu0 %v3507
        %4794 = vmatprep.subr.bf16.mxu0 %v3524
        %4795 = vmatpush1.bf16.msra.mxu0 %v3523
        %4796 = vmatprep.subr.bf16.mxu0 %v3540
        %4797 = vmatpush1.bf16.msra.mxu0 %v3539
        %4798 = vmatprep.subr.bf16.mxu0 %v3556
        %4799 = vmatpush1.bf16.msra.mxu0 %v3555
        %4800 = vmatprep.subr.bf16.mxu0 %v3572
        %4801 = vmatpush1.bf16.msra.mxu0 %v3571
        %4802 = vmatprep.subr.bf16.mxu0 %v3588
        %4803 = vmatpush1.bf16.msra.mxu0 %v3587
        %4804 = vmatprep.subr.bf16.mxu0 %v3604
        %4805 = vmatpush1.bf16.msra.mxu0 %v3603
        %4806 = vmatprep.subr.bf16.mxu0 %v3620
        %4807 = vmatpush1.bf16.msra.mxu0 %v3619
        %4808 = vmatprep.subr.bf16.mxu0 %v3636
        %4809 = vmatpush1.bf16.msra.mxu0 %v3635
        %4810 = vmatprep.subr.bf16.mxu0 %v3652
        %4811 = vmatpush1.bf16.msra.mxu0 %v3651
        %4812 = vmatprep.mubr.bf16.mxu0 %v1600
        %4813 = vmatmul.mubr.bf16.gmra.mrb[0].mxu0 %v1599
        %v4814 = vpop.f32.mrb[0].mxu0
        %v4815 = vadd.f32 %v4774, %v4814
        %v4816 = vpop.f32.mrb[0].mxu0
        %v4817 = vadd.f32 %v4776, %v4816
        %v4818 = vpop.f32.mrb[0].mxu0
        %v4819 = vpop.f32.mrb[0].mxu0
        %4820 = vdwg.mxu0
        %v4821 = vadd.f32 %v1057, %v4241
        %v4822 = vadd.f32 %v1058, %v4243
        %v4823 = vadd.f32 %v1059, %v4323
        %v4824 = vadd.f32 %v1060, %v4325
        %v4825 = vadd.f32 %v1061, %v4405
        %v4826 = vadd.f32 %v1062, %v4407
        %v4827 = vadd.f32 %v1063, %v4487
        %v4828 = vadd.f32 %v1064, %v4489
        %v4829 = vadd.f32 %v1065, %v4569
        %v4830 = vadd.f32 %v1066, %v4571
        %v4831 = vadd.f32 %v1067, %v4651
        %v4832 = vadd.f32 %v1068, %v4653
        %v4833 = vadd.f32 %v1069, %v4733
        %v4834 = vadd.f32 %v1070, %v4735
        %v4835 = vadd.f32 %v1071, %v4815
        %v4836 = vadd.f32 %v1072, %v4817
        %4837 = vst [vmem:[#allocation3] sm:$0xff] %v4821
        %4838 = vst [vmem:[#allocation3 + $0x8] sm:$0xff] %v4822
        %4839 = vst [vmem:[#allocation3 + $0x10] sm:$0xff] %v4823
        %4840 = vst [vmem:[#allocation3 + $0x18] sm:$0xff] %v4824
        %4841 = vst [vmem:[#allocation3 + $0x20] sm:$0xff] %v4825
        %4842 = vst [vmem:[#allocation3 + $0x28] sm:$0xff] %v4826
        %4843 = vst [vmem:[#allocation3 + $0x30] sm:$0xff] %v4827
        %4844 = vst [vmem:[#allocation3 + $0x38] sm:$0xff] %v4828
        %4845 = vst [vmem:[#allocation3 + $0x40] sm:$0xff] %v4829
        %4846 = vst [vmem:[#allocation3 + $0x48] sm:$0xff] %v4830
        %4847 = vst [vmem:[#allocation3 + $0x50] sm:$0xff] %v4831
        %4848 = vst [vmem:[#allocation3 + $0x58] sm:$0xff] %v4832
        %4849 = vst [vmem:[#allocation3 + $0x60] sm:$0xff] %v4833
        %4850 = vst [vmem:[#allocation3 + $0x68] sm:$0xff] %v4834
        %4851 = vst [vmem:[#allocation3 + $0x70] sm:$0xff] %v4835
        %4852 = vst [vmem:[#allocation3 + $0x78] sm:$0xff] %v4836
        %p4853 = scmp.eq.s32.totalorder %s23, 3
        // Predicated region
        $region73: #{soft_q_forward.1} parent=47 // pred_check
          %p4854 = pneg %p4853
        $region74: #{soft_q_forward.1} parent=47 // pred_check_branch
          %4856 = sbr.rel (%p4854) target = $region76
        $region75: #{soft_q_forward.1} parent=47 // pred_region
          %v4857 = vld [vmem:[#allocation3] sm:$0xff]
          %v4858 = vld [vmem:[#allocation3 + $0x8] sm:$0xff]
          %v4859 = vld [vmem:[#allocation3 + $0x10] sm:$0xff]
          %v4860 = vld [vmem:[#allocation3 + $0x18] sm:$0xff]
          %v4861 = vld [vmem:[#allocation3 + $0x20] sm:$0xff]
          %v4862 = vld [vmem:[#allocation3 + $0x28] sm:$0xff]
          %v4863 = vld [vmem:[#allocation3 + $0x30] sm:$0xff]
          %v4864 = vld [vmem:[#allocation3 + $0x38] sm:$0xff]
          %v4865 = vld [vmem:[#allocation3 + $0x40] sm:$0xff]
          %v4866 = vld [vmem:[#allocation3 + $0x48] sm:$0xff]
          %v4867 = vld [vmem:[#allocation3 + $0x50] sm:$0xff]
          %v4868 = vld [vmem:[#allocation3 + $0x58] sm:$0xff]
          %v4869 = vld [vmem:[#allocation3 + $0x60] sm:$0xff]
          %v4870 = vld [vmem:[#allocation3 + $0x68] sm:$0xff]
          %v4871 = vld [vmem:[#allocation3 + $0x70] sm:$0xff]
          %v4872 = vld [vmem:[#allocation3 + $0x78] sm:$0xff]
          %v4873 = vld [vmem:[#allocation10] sm:$0xff]
          %v4874 = vld [vmem:[#allocation10 + $0x8] sm:$0xff]
          %v4877 = vlaneseq
          %v4878 = vshrl.u32 %v4877, 7
          %v4879 = vsub.s32 0, %v4878
          %v4880 = vrot.slane %v4873, %v4879
          %v4881 = vlaneseq
          %v4882 = vshrl.u32 %v4881, 7
          %v4883 = vsub.s32 1, %v4882
          %v4884 = vrot.slane %v4873, %v4883
          %v4885 = vlaneseq
          %v4886 = vshrl.u32 %v4885, 7
          %v4887 = vsub.s32 2, %v4886
          %v4888 = vrot.slane %v4873, %v4887
          %v4889 = vlaneseq
          %v4890 = vshrl.u32 %v4889, 7
          %v4891 = vsub.s32 3, %v4890
          %v4892 = vrot.slane %v4873, %v4891
          %v4893 = vlaneseq
          %v4894 = vshrl.u32 %v4893, 7
          %v4895 = vsub.s32 4, %v4894
          %v4896 = vrot.slane %v4873, %v4895
          %v4897 = vlaneseq
          %v4898 = vshrl.u32 %v4897, 7
          %v4899 = vsub.s32 5, %v4898
          %v4900 = vrot.slane %v4873, %v4899
          %v4901 = vlaneseq
          %v4902 = vshrl.u32 %v4901, 7
          %v4903 = vsub.s32 6, %v4902
          %v4904 = vrot.slane %v4873, %v4903
          %v4905 = vlaneseq
          %v4906 = vshrl.u32 %v4905, 7
          %v4907 = vsub.s32 7, %v4906
          %v4908 = vrot.slane %v4873, %v4907
          %v4909 = vlaneseq
          %v4910 = vshrl.u32 %v4909, 7
          %v4911 = vsub.s32 0, %v4910
          %v4912 = vrot.slane %v4874, %v4911
          %v4913 = vlaneseq
          %v4914 = vshrl.u32 %v4913, 7
          %v4915 = vsub.s32 1, %v4914
          %v4916 = vrot.slane %v4874, %v4915
          %v4917 = vlaneseq
          %v4918 = vshrl.u32 %v4917, 7
          %v4919 = vsub.s32 2, %v4918
          %v4920 = vrot.slane %v4874, %v4919
          %v4921 = vlaneseq
          %v4922 = vshrl.u32 %v4921, 7
          %v4923 = vsub.s32 3, %v4922
          %v4924 = vrot.slane %v4874, %v4923
          %v4925 = vlaneseq
          %v4926 = vshrl.u32 %v4925, 7
          %v4927 = vsub.s32 4, %v4926
          %v4928 = vrot.slane %v4874, %v4927
          %v4929 = vlaneseq
          %v4930 = vshrl.u32 %v4929, 7
          %v4931 = vsub.s32 5, %v4930
          %v4932 = vrot.slane %v4874, %v4931
          %v4933 = vlaneseq
          %v4934 = vshrl.u32 %v4933, 7
          %v4935 = vsub.s32 6, %v4934
          %v4936 = vrot.slane %v4874, %v4935
          %v4937 = vlaneseq
          %v4938 = vshrl.u32 %v4937, 7
          %v4939 = vsub.s32 7, %v4938
          %v4940 = vrot.slane %v4874, %v4939
          %v4957 = vadd.f32 %v4857, %v4880
          %v4958 = vadd.f32 %v4858, %v4884
          %v4959 = vadd.f32 %v4859, %v4888
          %v4960 = vadd.f32 %v4860, %v4892
          %v4961 = vadd.f32 %v4861, %v4896
          %v4962 = vadd.f32 %v4862, %v4900
          %v4963 = vadd.f32 %v4863, %v4904
          %v4964 = vadd.f32 %v4864, %v4908
          %v4965 = vadd.f32 %v4865, %v4912
          %v4966 = vadd.f32 %v4866, %v4916
          %v4967 = vadd.f32 %v4867, %v4920
          %v4968 = vadd.f32 %v4868, %v4924
          %v4969 = vadd.f32 %v4869, %v4928
          %v4970 = vadd.f32 %v4870, %v4932
          %v4971 = vadd.f32 %v4871, %v4936
          %v4972 = vadd.f32 %v4872, %v4940
          %v4973 = vmax.f32 %v4957, 0.0
          %v4974 = vmax.f32 %v4958, 0.0
          %v4975 = vmax.f32 %v4959, 0.0
          %v4976 = vmax.f32 %v4960, 0.0
          %v4977 = vmax.f32 %v4961, 0.0
          %v4978 = vmax.f32 %v4962, 0.0
          %v4979 = vmax.f32 %v4963, 0.0
          %v4980 = vmax.f32 %v4964, 0.0
          %v4981 = vmax.f32 %v4965, 0.0
          %v4982 = vmax.f32 %v4966, 0.0
          %v4983 = vmax.f32 %v4967, 0.0
          %v4984 = vmax.f32 %v4968, 0.0
          %v4985 = vmax.f32 %v4969, 0.0
          %v4986 = vmax.f32 %v4970, 0.0
          %v4987 = vmax.f32 %v4971, 0.0
          %v4988 = vmax.f32 %v4972, 0.0
          %v4989 = vld [vmem:[#allocation11] sm:$0xff]
          %v4990 = vld [vmem:[#allocation11 + $0x8] sm:$0xff]
          %v4993 = vlaneseq
          %v4994 = vshrl.u32 %v4993, 7
          %v4995 = vsub.s32 0, %v4994
          %v4996 = vrot.slane %v4989, %v4995
          %v4997 = vlaneseq
          %v4998 = vshrl.u32 %v4997, 7
          %v4999 = vsub.s32 1, %v4998
          %v5000 = vrot.slane %v4989, %v4999
          %v5001 = vlaneseq
          %v5002 = vshrl.u32 %v5001, 7
          %v5003 = vsub.s32 2, %v5002
          %v5004 = vrot.slane %v4989, %v5003
          %v5005 = vlaneseq
          %v5006 = vshrl.u32 %v5005, 7
          %v5007 = vsub.s32 3, %v5006
          %v5008 = vrot.slane %v4989, %v5007
          %v5009 = vlaneseq
          %v5010 = vshrl.u32 %v5009, 7
          %v5011 = vsub.s32 4, %v5010
          %v5012 = vrot.slane %v4989, %v5011
          %v5013 = vlaneseq
          %v5014 = vshrl.u32 %v5013, 7
          %v5015 = vsub.s32 5, %v5014
          %v5016 = vrot.slane %v4989, %v5015
          %v5017 = vlaneseq
          %v5018 = vshrl.u32 %v5017, 7
          %v5019 = vsub.s32 6, %v5018
          %v5020 = vrot.slane %v4989, %v5019
          %v5021 = vlaneseq
          %v5022 = vshrl.u32 %v5021, 7
          %v5023 = vsub.s32 7, %v5022
          %v5024 = vrot.slane %v4989, %v5023
          %v5025 = vlaneseq
          %v5026 = vshrl.u32 %v5025, 7
          %v5027 = vsub.s32 0, %v5026
          %v5028 = vrot.slane %v4990, %v5027
          %v5029 = vlaneseq
          %v5030 = vshrl.u32 %v5029, 7
          %v5031 = vsub.s32 1, %v5030
          %v5032 = vrot.slane %v4990, %v5031
          %v5033 = vlaneseq
          %v5034 = vshrl.u32 %v5033, 7
          %v5035 = vsub.s32 2, %v5034
          %v5036 = vrot.slane %v4990, %v5035
          %v5037 = vlaneseq
          %v5038 = vshrl.u32 %v5037, 7
          %v5039 = vsub.s32 3, %v5038
          %v5040 = vrot.slane %v4990, %v5039
          %v5041 = vlaneseq
          %v5042 = vshrl.u32 %v5041, 7
          %v5043 = vsub.s32 4, %v5042
          %v5044 = vrot.slane %v4990, %v5043
          %v5045 = vlaneseq
          %v5046 = vshrl.u32 %v5045, 7
          %v5047 = vsub.s32 5, %v5046
          %v5048 = vrot.slane %v4990, %v5047
          %v5049 = vlaneseq
          %v5050 = vshrl.u32 %v5049, 7
          %v5051 = vsub.s32 6, %v5050
          %v5052 = vrot.slane %v4990, %v5051
          %v5053 = vlaneseq
          %v5054 = vshrl.u32 %v5053, 7
          %v5055 = vsub.s32 7, %v5054
          %v5056 = vrot.slane %v4990, %v5055
          %v5073 = vmul.f32 %v4973, %v4996
          %v5074 = vmul.f32 %v4974, %v5000
          %v5075 = vmul.f32 %v4975, %v5004
          %v5076 = vmul.f32 %v4976, %v5008
          %v5077 = vmul.f32 %v4977, %v5012
          %v5078 = vmul.f32 %v4978, %v5016
          %v5079 = vmul.f32 %v4979, %v5020
          %v5080 = vmul.f32 %v4980, %v5024
          %v5081 = vmul.f32 %v4981, %v5028
          %v5082 = vmul.f32 %v4982, %v5032
          %v5083 = vmul.f32 %v4983, %v5036
          %v5084 = vmul.f32 %v4984, %v5040
          %v5085 = vmul.f32 %v4985, %v5044
          %v5086 = vmul.f32 %v4986, %v5048
          %v5087 = vmul.f32 %v4987, %v5052
          %v5088 = vmul.f32 %v4988, %v5056
          %v5089 = vadd.f32 %v5073, %v5074
          %v5090 = vadd.f32 %v5089, %v5075
          %v5091 = vadd.f32 %v5090, %v5076
          %v5092 = vadd.f32 %v5091, %v5077
          %v5093 = vadd.f32 %v5092, %v5078
          %v5094 = vadd.f32 %v5093, %v5079
          %v5095 = vadd.f32 %v5094, %v5080
          %v5096 = vadd.f32 %v5095, %v5081
          %v5097 = vadd.f32 %v5096, %v5082
          %v5098 = vadd.f32 %v5097, %v5083
          %v5099 = vadd.f32 %v5098, %v5084
          %v5100 = vadd.f32 %v5099, %v5085
          %v5101 = vadd.f32 %v5100, %v5086
          %v5102 = vadd.f32 %v5101, %v5087
          %v5103 = vadd.f32 %v5102, %v5088
          %5104 = vadd.xlane.f32.xlu0 %v5103
          %v5105 = vpop.xlane.xlu0 %5104
          %v5106 = vld [vmem:[#allocation4] sm:$0x1]
          %v5108 = vlaneseq
          %v5109 = vshrl.u32 %v5108, 7
          %v5110 = vsub.s32 0, %v5109
          %v5111 = vrot.slane %v5106, %v5110
          %v5113 = vadd.f32 %v5105, %v5111
          %vm5114 = vcmask 7168
          %5115 = vst.msk [vmem:[%s7] sm:$0xff] %vm5114, %v5113
        $region76: #{soft_q_forward.1} parent=47 // pred_fallthru
          _
        // Predicated region
        $region77: #{soft_q_forward.1} parent=47 // pred_check
          %p5116 = pneg %p188
        $region78: #{soft_q_forward.1} parent=47 // pred_check_branch
          %5118 = sbr.rel (%p5116) target = $region80
        $region79: #{soft_q_forward.1} parent=47 // pred_region
          _
        $region80: #{soft_q_forward.1} parent=47 // pred_fallthru
          _
        // Predicated region
        $region81: #{soft_q_forward.1} parent=47 // pred_check
          %p5119 = pneg %p188
        $region82: #{soft_q_forward.1} parent=47 // pred_check_branch
          %5121 = sbr.rel (%p5119) target = $region84
        $region83: #{soft_q_forward.1} parent=47 // pred_region
          _
        $region84: #{soft_q_forward.1} parent=47 // pred_fallthru
          _
      $region48: #{soft_q_forward.1} parent=5 // pred_fallthru
        _
      %p5122 = scmp.le.s32.totalorder 2, %s18
      // Predicated region
      $region85: #{soft_q_forward.1} parent=5 // pred_check
        %p5123 = pneg %p5122
      $region86: #{soft_q_forward.1} parent=5 // pred_check_branch
        %5125 = sbr.rel (%p5123) target = $region88
      $region87: #{soft_q_forward.1} parent=5 // pred_region
        %s5126 = ssub.s32 %s18, 2
      $region88: #{soft_q_forward.1} parent=5 // pred_fallthru
        _
    $region6: #{soft_q_forward.1} parent=1 // loop_footer
      %s22 = sadd.s32 1, %s18
    $region7: #{soft_q_forward.1} parent=1 // loop_footer_branch
      %17 = sbr.rel target = $region3
    $region8: #{soft_q_forward.1} parent=1 // loop_exit
      _
    %5127 = vsyncpa [#allocation6], 1
    %s5128 = scalar_lea.sflag [#allocation6], 1
    %5129 = vsyncpa %s5128, 1
    %5130 = vsyncpa [#allocation8], 1
    %5131 = vsyncpa [#allocation12], 1

</llo_original>
